<compile_context>
chip_gen: v5e
topology: v5e:2x2
jax: 0.10.0
libtpu: 0.0.40
codegen_flags: <defaults>
</compile_context>

<pallas_src>
import math

import jax
import jax.numpy as jnp
from jax import lax
from jax.experimental import pallas as pl
from jax.experimental.pallas import tpu as pltpu

_INV_SQRT2 = 0.7071067811865476


# ----------------------------- Pallas kernel ----------------------------- #

def _layer_kernel(x_ref,
                  wq_ref, bq_ref, wk_ref, bk_ref, wv_ref, bv_ref,
                  wo_ref, bo_ref,
                  w1_ref, b1_ref, w2_ref, b2_ref,
                  g1_ref, be1_ref, g2_ref, be2_ref,
                  o_ref, k_scr, v_scr):
    heads = wq_ref.shape[0]
    hd = wq_ref.shape[2]
    D = x_ref.shape[2]
    tq = o_ref.shape[1]
    scale = 1.0 / math.sqrt(hd)
    qt = pl.program_id(1)

    # ---- K / V projection for the full sequence, once per batch element ----
    @pl.when(qt == 0)
    def _():
        x_all = x_ref[0].astype(jnp.bfloat16)                     # (S, D)

        def kv_body(h, carry):
            k_h = jnp.dot(x_all, wk_ref[h],
                          preferred_element_type=jnp.float32) + bk_ref[h]
            v_h = jnp.dot(x_all, wv_ref[h],
                          preferred_element_type=jnp.float32) + bv_ref[h]
            k_scr[h] = k_h.astype(k_scr.dtype)
            v_scr[h] = v_h.astype(v_scr.dtype)
            return carry

        lax.fori_loop(0, heads, kv_body, 0, unroll=True)

    # ---- query tile, sliced from the resident slab (no second x DMA) ----
    q_start = pl.multiple_of(qt * tq, tq)
    x_q = x_ref[0, pl.ds(q_start, tq), :].astype(jnp.float32)     # (tq, D)
    x_q_bf = x_q.astype(jnp.bfloat16)

    # ---- multi-head self-attention for this query tile ----
    def head_body(h, acc):
        q_h = jnp.dot(x_q_bf, wq_ref[h],
                      preferred_element_type=jnp.float32) + bq_ref[h]
        q_h = (q_h * scale).astype(jnp.bfloat16)                  # (tq, hd)
        s = lax.dot_general(q_h, k_scr[h], (((1,), (1,)), ((), ())),
                            preferred_element_type=jnp.float32)   # (tq, S)
        s = s - jnp.max(s, axis=-1, keepdims=True)
        p = jnp.exp(s)
        p = p * pl.reciprocal(jnp.sum(p, axis=-1, keepdims=True), approx=True)
        o_h = jnp.dot(p.astype(jnp.bfloat16), v_scr[h],
                      preferred_element_type=jnp.float32)         # (tq, hd)
        # Fold the out-projection per head: sum_h o_h @ Wo[h] == concat_h(o_h) @ Wo
        return acc + jnp.dot(o_h.astype(jnp.bfloat16), wo_ref[h],
                             preferred_element_type=jnp.float32)  # (tq, D)

    attn = lax.fori_loop(0, heads, head_body,
                         jnp.zeros((tq, D), jnp.float32), unroll=True)
    attn = attn + bo_ref[...]

    # ---- residual + LayerNorm1 (f32) ----
    x1 = attn + x_q
    mu1 = jnp.mean(x1, axis=-1, keepdims=True)
    var1 = jnp.mean(jnp.square(x1 - mu1), axis=-1, keepdims=True)
    x1 = (x1 - mu1) * lax.rsqrt(var1 + 1e-5) * g1_ref[...] + be1_ref[...]

    # ---- MLP: Linear -> GELU(exact) -> (Dropout = identity) -> Linear ----
    h1 = jnp.dot(x1.astype(jnp.bfloat16), w1_ref[...],
                 preferred_element_type=jnp.float32) + b1_ref[...]
    h1 = 0.5 * h1 * (1.0 + lax.erf(h1 * _INV_SQRT2))
    h2 = jnp.dot(h1.astype(jnp.bfloat16), w2_ref[...],
                 preferred_element_type=jnp.float32) + b2_ref[...]

    # ---- residual + LayerNorm2 (f32) ----
    x2 = h2 + x1
    mu2 = jnp.mean(x2, axis=-1, keepdims=True)
    var2 = jnp.mean(jnp.square(x2 - mu2), axis=-1, keepdims=True)
    x2 = (x2 - mu2) * lax.rsqrt(var2 + 1e-5) * g2_ref[...] + be2_ref[...]

    o_ref[0] = x2.astype(o_ref.dtype)


# ------------------------------- wrapper --------------------------------- #

def transformer_layer_pallas(x, p, *, tq=None):
    B, S, D = x.shape
    heads, _, hd = p["wq"].shape
    hidden = p["w1"].shape[1]
    if tq is None:
        tq = S if S <= 128 else 128
    assert S % tq == 0, "sequence length must be divisible by the query tile"
    assert tq == S or tq % 8 == 0, "query tile must be sublane-aligned"
    n_qt = S // tq

    weight_names = ["wq", "bq", "wk", "bk", "wv", "bv", "wo", "bo",
                    "w1", "b1", "w2", "b2", "g1", "be1", "g2", "be2"]
    weights = [p[n] for n in weight_names]

    def fullspec(arr):
        n = arr.ndim
        return pl.BlockSpec(arr.shape, lambda b, q, n=n: (0,) * n)

    in_specs = [
        pl.BlockSpec((1, S, D), lambda b, q: (b, 0, 0)),    # per-batch slab (DMA once / b)
    ] + [fullspec(w) for w in weights]

    # Rough per-core VMEM footprint; raise the scoped limit only when needed
    # (stays within v7x's 64 MiB physical VMEM).
    wbytes = sum(int(w.size) * w.dtype.itemsize for w in weights)
    est = (wbytes
           + 2 * heads * S * hd * 2                      # bf16 K/V scratch
           + 2 * S * D * x.dtype.itemsize                # double-buffered input slab
           + 2 * tq * D * x.dtype.itemsize               # double-buffered output tile
           + 4 * (tq * S + tq * hidden + 2 * tq * D + S * D))  # f32 working set
    vmem_limit = None if est <= 32 * 1024 * 1024 else min(2 * est, 96 * 1024 * 1024)

    return pl.pallas_call(
        _layer_kernel,
        out_shape=jax.ShapeDtypeStruct((B, S, D), x.dtype),
        grid=(B, n_qt),
        in_specs=in_specs,
        out_specs=pl.BlockSpec((1, tq, D), lambda b, q: (b, q, 0)),
        scratch_shapes=[pltpu.VMEM((heads, S, hd), jnp.bfloat16),   # K cache
                        pltpu.VMEM((heads, S, hd), jnp.bfloat16)],  # V cache
        compiler_params=pltpu.CompilerParams(
            dimension_semantics=("parallel", "arbitrary"),
            vmem_limit_bytes=vmem_limit),
    )(x, *weights)


def transformer_encoder_pallas(x, layer_params, norm_params):
    # norm1/norm2 are shared across layers, exactly as in the PyTorch module.
    for lp in layer_params:
        p = {**lp, **norm_params}
        x = transformer_layer_pallas(x, p)
    return x


# ------------------------- pure-JAX reference ----------------------------- #

def _ln(x, g, b):
    mu = jnp.mean(x, axis=-1, keepdims=True)
    var = jnp.mean(jnp.square(x - mu), axis=-1, keepdims=True)
    return (x - mu) * lax.rsqrt(var + 1e-5) * g + b


def _ref_layer(x, p):
    hd = p["wq"].shape[2]
    scale = 1.0 / math.sqrt(hd)
    xb = x.astype(jnp.bfloat16)
    q = jnp.einsum("bsd,hdk->bhsk", xb, p["wq"],
                   preferred_element_type=jnp.float32) + p["bq"][None]
    k = jnp.einsum("bsd,hdk->bhsk", xb, p["wk"],
                   preferred_element_type=jnp.float32) + p["bk"][None]
    v = jnp.einsum("bsd,hdk->bhsk", xb, p["wv"],
                   preferred_element_type=jnp.float32) + p["bv"][None]
    s = jnp.einsum("bhqe,bhke->bhqk", (q * scale).astype(jnp.bfloat16),
                   k.astype(jnp.bfloat16), preferred_element_type=jnp.float32)
    a = jax.nn.softmax(s, axis=-1)
    o = jnp.einsum("bhqk,bhke->bhqe", a.astype(jnp.bfloat16),
                   v.astype(jnp.bfloat16), preferred_element_type=jnp.float32)
    attn = jnp.einsum("bhqe,hed->bqd", o.astype(jnp.bfloat16), p["wo"],
                      preferred_element_type=jnp.float32) + p["bo"]
    x1 = _ln(attn + x, p["g1"], p["be1"])
    h1 = jnp.einsum("bqd,dh->bqh", x1.astype(jnp.bfloat16), p["w1"],
                    preferred_element_type=jnp.float32) + p["b1"]
    h1 = 0.5 * h1 * (1.0 + lax.erf(h1 * _INV_SQRT2))
    h2 = jnp.einsum("bqh,hd->bqd", h1.astype(jnp.bfloat16), p["w2"],
                    preferred_element_type=jnp.float32) + p["b2"]
    return _ln(h2 + x1, p["g2"], p["be2"])


def transformer_encoder_ref(x, layer_params, norm_params):
    for lp in layer_params:
        x = _ref_layer(x, {**lp, **norm_params})
    return x


# ------------------------------- params ----------------------------------- #

def init_params(key, depth, d_model, heads, mlp_ratio):
    assert d_model % heads == 0
    hd = d_model // heads
    hidden = d_model * mlp_ratio
    sd = 1.0 / math.sqrt(d_model)
    sh = 1.0 / math.sqrt(hidden)

    def head_major(w):  # (D, D) in x@W layout -> (heads, D, hd)
        return jnp.transpose(w.reshape(d_model, heads, hd), (1, 0, 2))

    layers = []
    for _ in range(depth):
        key, *ks = jax.random.split(key, 12)
        wq = jax.random.normal(ks[0], (d_model, d_model), jnp.float32) * sd
        wk = jax.random.normal(ks[1], (d_model, d_model), jnp.float32) * sd
        wv = jax.random.normal(ks[2], (d_model, d_model), jnp.float32) * sd
        wo = jax.random.normal(ks[3], (d_model, d_model), jnp.float32) * sd
        in_b = jax.random.normal(ks[4], (3 * d_model,), jnp.float32) * 0.02
        bo = jax.random.normal(ks[5], (d_model,), jnp.float32) * 0.02
        w1 = jax.random.normal(ks[6], (d_model, hidden), jnp.float32) * sd
        b1 = jax.random.normal(ks[7], (hidden,), jnp.float32) * 0.02
        w2 = jax.random.normal(ks[8], (hidden, d_model), jnp.float32) * sh
        b2 = jax.random.normal(ks[9], (d_model,), jnp.float32) * 0.02
        layers.append({
            "wq": head_major(wq).astype(jnp.bfloat16),
            "wk": head_major(wk).astype(jnp.bfloat16),
            "wv": head_major(wv).astype(jnp.bfloat16),
            "bq": in_b[:d_model].reshape(heads, 1, hd),
            "bk": in_b[d_model:2 * d_model].reshape(heads, 1, hd),
            "bv": in_b[2 * d_model:].reshape(heads, 1, hd),
            "wo": wo.reshape(heads, hd, d_model).astype(jnp.bfloat16),
            "bo": bo.reshape(1, d_model),
            "w1": w1.astype(jnp.bfloat16),
            "b1": b1.reshape(1, hidden),
            "w2": w2.astype(jnp.bfloat16),
            "b2": b2.reshape(1, d_model),
        })
    k1, k2, k3, k4 = jax.random.split(key, 4)
    norms = {  # shared across layers, as in the PyTorch module (self.norm1 / self.norm2)
        "g1": 1.0 + 0.1 * jax.random.normal(k1, (1, d_model), jnp.float32),
        "be1": 0.05 * jax.random.normal(k2, (1, d_model), jnp.float32),
        "g2": 1.0 + 0.1 * jax.random.normal(k3, (1, d_model), jnp.float32),
        "be2": 0.05 * jax.random.normal(k4, (1, d_model), jnp.float32),
    }
    return layers, norms


# ------------------------------- main ------------------------------------- #

if __name__ == "__main__":
    depth, d_model, heads, mlp_ratio = 2, 32, 4, 1
    B, S = 2, 8

    key = jax.random.PRNGKey(0)
    kx, kp = jax.random.split(key)
    x = jax.random.normal(kx, (B, S, d_model), jnp.float32)
    layer_params, norm_params = init_params(kp, depth, d_model, heads, mlp_ratio)

    fwd = jax.jit(transformer_encoder_pallas)
    out = jax.block_until_ready(fwd(x, layer_params, norm_params))

    ref = transformer_encoder_ref(x, layer_params, norm_params)
    max_err = jnp.max(jnp.abs(out - ref))
    if not jnp.allclose(out, ref, atol=2e-2, rtol=2e-2):
        raise AssertionError(
            f"Pallas kernel output mismatches JAX reference (max abs err = {max_err})")

    print("KERNEL_OK")
</pallas_src>

<mosaic_0001>
module attributes {stable_mosaic.version = 11 : i64} {
  func.func @_layer_kernel(%arg0: i32, %arg1: i32, %arg2: memref<1x8x32xf32, #tpu.memory_space<vmem>>, %arg3: memref<4x32x8xbf16, #tpu.memory_space<vmem>>, %arg4: memref<4x1x8xf32, #tpu.memory_space<vmem>>, %arg5: memref<4x32x8xbf16, #tpu.memory_space<vmem>>, %arg6: memref<4x1x8xf32, #tpu.memory_space<vmem>>, %arg7: memref<4x32x8xbf16, #tpu.memory_space<vmem>>, %arg8: memref<4x1x8xf32, #tpu.memory_space<vmem>>, %arg9: memref<4x8x32xbf16, #tpu.memory_space<vmem>>, %arg10: memref<1x32xf32, #tpu.memory_space<vmem>>, %arg11: memref<32x32xbf16, #tpu.memory_space<vmem>>, %arg12: memref<1x32xf32, #tpu.memory_space<vmem>>, %arg13: memref<32x32xbf16, #tpu.memory_space<vmem>>, %arg14: memref<1x32xf32, #tpu.memory_space<vmem>>, %arg15: memref<1x32xf32, #tpu.memory_space<vmem>>, %arg16: memref<1x32xf32, #tpu.memory_space<vmem>>, %arg17: memref<1x32xf32, #tpu.memory_space<vmem>>, %arg18: memref<1x32xf32, #tpu.memory_space<vmem>>, %arg19: memref<1x8x32xf32, #tpu.memory_space<vmem>>, %arg20: memref<4x8x8xbf16, #tpu.memory_space<vmem>>, %arg21: memref<4x8x8xbf16, #tpu.memory_space<vmem>>) attributes {dimension_semantics = [#tpu.dimension_semantics<parallel>, #tpu.dimension_semantics<arbitrary>], iteration_bounds = array<i64: 2, 1>, scalar_prefetch = 0 : i64, scratch_operands = 2 : i64, tpu.core_type = #tpu.core_type<tc>, window_params = [{transform_indices = @transform_0, window_bounds = array<i64: 1, 8, 32>}, {pipeline_mode = #tpu.pipeline_mode<synchronous>, transform_indices = @transform_1, window_bounds = array<i64: 4, 32, 8>}, {pipeline_mode = #tpu.pipeline_mode<synchronous>, transform_indices = @transform_2, window_bounds = array<i64: 4, 1, 8>}, {pipeline_mode = #tpu.pipeline_mode<synchronous>, transform_indices = @transform_3, window_bounds = array<i64: 4, 32, 8>}, {pipeline_mode = #tpu.pipeline_mode<synchronous>, transform_indices = @transform_4, window_bounds = array<i64: 4, 1, 8>}, {pipeline_mode = #tpu.pipeline_mode<synchronous>, transform_indices = @transform_5, window_bounds = array<i64: 4, 32, 8>}, {pipeline_mode = #tpu.pipeline_mode<synchronous>, transform_indices = @transform_6, window_bounds = array<i64: 4, 1, 8>}, {pipeline_mode = #tpu.pipeline_mode<synchronous>, transform_indices = @transform_7, window_bounds = array<i64: 4, 8, 32>}, {pipeline_mode = #tpu.pipeline_mode<synchronous>, transform_indices = @transform_8, window_bounds = array<i64: 1, 32>}, {pipeline_mode = #tpu.pipeline_mode<synchronous>, transform_indices = @transform_9, window_bounds = array<i64: 32, 32>}, {pipeline_mode = #tpu.pipeline_mode<synchronous>, transform_indices = @transform_10, window_bounds = array<i64: 1, 32>}, {pipeline_mode = #tpu.pipeline_mode<synchronous>, transform_indices = @transform_11, window_bounds = array<i64: 32, 32>}, {pipeline_mode = #tpu.pipeline_mode<synchronous>, transform_indices = @transform_12, window_bounds = array<i64: 1, 32>}, {pipeline_mode = #tpu.pipeline_mode<synchronous>, transform_indices = @transform_13, window_bounds = array<i64: 1, 32>}, {pipeline_mode = #tpu.pipeline_mode<synchronous>, transform_indices = @transform_14, window_bounds = array<i64: 1, 32>}, {pipeline_mode = #tpu.pipeline_mode<synchronous>, transform_indices = @transform_15, window_bounds = array<i64: 1, 32>}, {pipeline_mode = #tpu.pipeline_mode<synchronous>, transform_indices = @transform_16, window_bounds = array<i64: 1, 32>}, {transform_indices = @transform_17, window_bounds = array<i64: 1, 8, 32>}]} {
    %c0_i32 = arith.constant 0 : i32
    %0 = arith.cmpi eq, %arg1, %c0_i32 : i32
    %1 = arith.extui %0 : i1 to i32
    %c0_i32_0 = arith.constant 0 : i32
    %2 = arith.cmpi ne, %1, %c0_i32_0 : i32
    scf.if %2 {
      %c0_107 = arith.constant 0 : index
      %c0_108 = arith.constant 0 : index
      %c0_109 = arith.constant 0 : index
      %234 = vector.load %arg2[%c0_107, %c0_108, %c0_109] : memref<1x8x32xf32, #tpu.memory_space<vmem>>, vector<1x8x32xf32>
      %235 = vector.shape_cast %234 : vector<1x8x32xf32> to vector<8x32xf32>
      %236 = arith.truncf %235 : vector<8x32xf32> to vector<8x32xbf16>
      %c0_i32_110 = arith.constant 0 : i32
      %237 = arith.index_cast %c0_i32_110 : i32 to index
      %c0_111 = arith.constant 0 : index
      %c0_112 = arith.constant 0 : index
      %238 = vector.load %arg5[%237, %c0_111, %c0_112] : memref<4x32x8xbf16, #tpu.memory_space<vmem>>, vector<1x32x8xbf16>
      %239 = vector.shape_cast %238 : vector<1x32x8xbf16> to vector<32x8xbf16>
      %cst_113 = arith.constant dense<0.000000e+00> : vector<8x8xf32>
      %240 = tpu.matmul %236, %239, %cst_113 {dimension_numbers = #tpu.dot_dimension_numbers<[1], [0], [0], [1], [0, 0, 1, 1], [], []>} : vector<8x32xbf16>, vector<32x8xbf16>, vector<8x8xf32> -> vector<8x8xf32>
      %241 = arith.index_cast %c0_i32_110 : i32 to index
      %c0_114 = arith.constant 0 : index
      %c0_115 = arith.constant 0 : index
      %242 = vector.load %arg6[%241, %c0_114, %c0_115] : memref<4x1x8xf32, #tpu.memory_space<vmem>>, vector<1x1x8xf32>
      %243 = vector.shape_cast %242 : vector<1x1x8xf32> to vector<1x8xf32>
      %244 = vector.broadcast %243 : vector<1x8xf32> to vector<8x8xf32>
      %245 = arith.addf %240, %244 : vector<8x8xf32>
      %246 = arith.index_cast %c0_i32_110 : i32 to index
      %c0_116 = arith.constant 0 : index
      %c0_117 = arith.constant 0 : index
      %247 = vector.load %arg7[%246, %c0_116, %c0_117] : memref<4x32x8xbf16, #tpu.memory_space<vmem>>, vector<1x32x8xbf16>
      %248 = vector.shape_cast %247 : vector<1x32x8xbf16> to vector<32x8xbf16>
      %cst_118 = arith.constant dense<0.000000e+00> : vector<8x8xf32>
      %249 = tpu.matmul %236, %248, %cst_118 {dimension_numbers = #tpu.dot_dimension_numbers<[1], [0], [0], [1], [0, 0, 1, 1], [], []>} : vector<8x32xbf16>, vector<32x8xbf16>, vector<8x8xf32> -> vector<8x8xf32>
      %250 = arith.index_cast %c0_i32_110 : i32 to index
      %c0_119 = arith.constant 0 : index
      %c0_120 = arith.constant 0 : index
      %251 = vector.load %arg8[%250, %c0_119, %c0_120] : memref<4x1x8xf32, #tpu.memory_space<vmem>>, vector<1x1x8xf32>
      %252 = vector.shape_cast %251 : vector<1x1x8xf32> to vector<1x8xf32>
      %253 = vector.broadcast %252 : vector<1x8xf32> to vector<8x8xf32>
      %254 = arith.addf %249, %253 : vector<8x8xf32>
      %255 = arith.truncf %245 : vector<8x8xf32> to vector<8x8xbf16>
      %256 = arith.index_cast %c0_i32_110 : i32 to index
      %c0_121 = arith.constant 0 : index
      %c0_122 = arith.constant 0 : index
      %257 = vector.load %arg20[%256, %c0_121, %c0_122] : memref<4x8x8xbf16, #tpu.memory_space<vmem>>, vector<1x8x8xbf16>
      %258 = vector.shape_cast %257 : vector<1x8x8xbf16> to vector<8x8xbf16>
      %259 = vector.shape_cast %255 : vector<8x8xbf16> to vector<1x8x8xbf16>
      tpu.vector_store %arg20[%256, %c0_121, %c0_122], %259 {strides = array<i32>} : memref<4x8x8xbf16, #tpu.memory_space<vmem>>, vector<1x8x8xbf16>,
      %260 = arith.truncf %254 : vector<8x8xf32> to vector<8x8xbf16>
      %261 = arith.index_cast %c0_i32_110 : i32 to index
      %c0_123 = arith.constant 0 : index
      %c0_124 = arith.constant 0 : index
      %262 = vector.load %arg21[%261, %c0_123, %c0_124] : memref<4x8x8xbf16, #tpu.memory_space<vmem>>, vector<1x8x8xbf16>
      %263 = vector.shape_cast %262 : vector<1x8x8xbf16> to vector<8x8xbf16>
      %264 = vector.shape_cast %260 : vector<8x8xbf16> to vector<1x8x8xbf16>
      tpu.vector_store %arg21[%261, %c0_123, %c0_124], %264 {strides = array<i32>} : memref<4x8x8xbf16, #tpu.memory_space<vmem>>, vector<1x8x8xbf16>,
      %c1_i32_125 = arith.constant 1 : i32
      %265 = arith.index_cast %c1_i32_125 : i32 to index
      %c0_126 = arith.constant 0 : index
      %c0_127 = arith.constant 0 : index
      %266 = vector.load %arg5[%265, %c0_126, %c0_127] : memref<4x32x8xbf16, #tpu.memory_space<vmem>>, vector<1x32x8xbf16>
      %267 = vector.shape_cast %266 : vector<1x32x8xbf16> to vector<32x8xbf16>
      %cst_128 = arith.constant dense<0.000000e+00> : vector<8x8xf32>
      %268 = tpu.matmul %236, %267, %cst_128 {dimension_numbers = #tpu.dot_dimension_numbers<[1], [0], [0], [1], [0, 0, 1, 1], [], []>} : vector<8x32xbf16>, vector<32x8xbf16>, vector<8x8xf32> -> vector<8x8xf32>
      %269 = arith.index_cast %c1_i32_125 : i32 to index
      %c0_129 = arith.constant 0 : index
      %c0_130 = arith.constant 0 : index
      %270 = vector.load %arg6[%269, %c0_129, %c0_130] : memref<4x1x8xf32, #tpu.memory_space<vmem>>, vector<1x1x8xf32>
      %271 = vector.shape_cast %270 : vector<1x1x8xf32> to vector<1x8xf32>
      %272 = vector.broadcast %271 : vector<1x8xf32> to vector<8x8xf32>
      %273 = arith.addf %268, %272 : vector<8x8xf32>
      %274 = arith.index_cast %c1_i32_125 : i32 to index
      %c0_131 = arith.constant 0 : index
      %c0_132 = arith.constant 0 : index
      %275 = vector.load %arg7[%274, %c0_131, %c0_132] : memref<4x32x8xbf16, #tpu.memory_space<vmem>>, vector<1x32x8xbf16>
      %276 = vector.shape_cast %275 : vector<1x32x8xbf16> to vector<32x8xbf16>
      %cst_133 = arith.constant dense<0.000000e+00> : vector<8x8xf32>
      %277 = tpu.matmul %236, %276, %cst_133 {dimension_numbers = #tpu.dot_dimension_numbers<[1], [0], [0], [1], [0, 0, 1, 1], [], []>} : vector<8x32xbf16>, vector<32x8xbf16>, vector<8x8xf32> -> vector<8x8xf32>
      %278 = arith.index_cast %c1_i32_125 : i32 to index
      %c0_134 = arith.constant 0 : index
      %c0_135 = arith.constant 0 : index
      %279 = vector.load %arg8[%278, %c0_134, %c0_135] : memref<4x1x8xf32, #tpu.memory_space<vmem>>, vector<1x1x8xf32>
      %280 = vector.shape_cast %279 : vector<1x1x8xf32> to vector<1x8xf32>
      %281 = vector.broadcast %280 : vector<1x8xf32> to vector<8x8xf32>
      %282 = arith.addf %277, %281 : vector<8x8xf32>
      %283 = arith.truncf %273 : vector<8x8xf32> to vector<8x8xbf16>
      %284 = arith.index_cast %c1_i32_125 : i32 to index
      %c0_136 = arith.constant 0 : index
      %c0_137 = arith.constant 0 : index
      %285 = vector.load %arg20[%284, %c0_136, %c0_137] : memref<4x8x8xbf16, #tpu.memory_space<vmem>>, vector<1x8x8xbf16>
      %286 = vector.shape_cast %285 : vector<1x8x8xbf16> to vector<8x8xbf16>
      %287 = vector.shape_cast %283 : vector<8x8xbf16> to vector<1x8x8xbf16>
      tpu.vector_store %arg20[%284, %c0_136, %c0_137], %287 {strides = array<i32>} : memref<4x8x8xbf16, #tpu.memory_space<vmem>>, vector<1x8x8xbf16>,
      %288 = arith.truncf %282 : vector<8x8xf32> to vector<8x8xbf16>
      %289 = arith.index_cast %c1_i32_125 : i32 to index
      %c0_138 = arith.constant 0 : index
      %c0_139 = arith.constant 0 : index
      %290 = vector.load %arg21[%289, %c0_138, %c0_139] : memref<4x8x8xbf16, #tpu.memory_space<vmem>>, vector<1x8x8xbf16>
      %291 = vector.shape_cast %290 : vector<1x8x8xbf16> to vector<8x8xbf16>
      %292 = vector.shape_cast %288 : vector<8x8xbf16> to vector<1x8x8xbf16>
      tpu.vector_store %arg21[%289, %c0_138, %c0_139], %292 {strides = array<i32>} : memref<4x8x8xbf16, #tpu.memory_space<vmem>>, vector<1x8x8xbf16>,
      %c2_i32_140 = arith.constant 2 : i32
      %293 = arith.index_cast %c2_i32_140 : i32 to index
      %c0_141 = arith.constant 0 : index
      %c0_142 = arith.constant 0 : index
      %294 = vector.load %arg5[%293, %c0_141, %c0_142] : memref<4x32x8xbf16, #tpu.memory_space<vmem>>, vector<1x32x8xbf16>
      %295 = vector.shape_cast %294 : vector<1x32x8xbf16> to vector<32x8xbf16>
      %cst_143 = arith.constant dense<0.000000e+00> : vector<8x8xf32>
      %296 = tpu.matmul %236, %295, %cst_143 {dimension_numbers = #tpu.dot_dimension_numbers<[1], [0], [0], [1], [0, 0, 1, 1], [], []>} : vector<8x32xbf16>, vector<32x8xbf16>, vector<8x8xf32> -> vector<8x8xf32>
      %297 = arith.index_cast %c2_i32_140 : i32 to index
      %c0_144 = arith.constant 0 : index
      %c0_145 = arith.constant 0 : index
      %298 = vector.load %arg6[%297, %c0_144, %c0_145] : memref<4x1x8xf32, #tpu.memory_space<vmem>>, vector<1x1x8xf32>
      %299 = vector.shape_cast %298 : vector<1x1x8xf32> to vector<1x8xf32>
      %300 = vector.broadcast %299 : vector<1x8xf32> to vector<8x8xf32>
      %301 = arith.addf %296, %300 : vector<8x8xf32>
      %302 = arith.index_cast %c2_i32_140 : i32 to index
      %c0_146 = arith.constant 0 : index
      %c0_147 = arith.constant 0 : index
      %303 = vector.load %arg7[%302, %c0_146, %c0_147] : memref<4x32x8xbf16, #tpu.memory_space<vmem>>, vector<1x32x8xbf16>
      %304 = vector.shape_cast %303 : vector<1x32x8xbf16> to vector<32x8xbf16>
      %cst_148 = arith.constant dense<0.000000e+00> : vector<8x8xf32>
      %305 = tpu.matmul %236, %304, %cst_148 {dimension_numbers = #tpu.dot_dimension_numbers<[1], [0], [0], [1], [0, 0, 1, 1], [], []>} : vector<8x32xbf16>, vector<32x8xbf16>, vector<8x8xf32> -> vector<8x8xf32>
      %306 = arith.index_cast %c2_i32_140 : i32 to index
      %c0_149 = arith.constant 0 : index
      %c0_150 = arith.constant 0 : index
      %307 = vector.load %arg8[%306, %c0_149, %c0_150] : memref<4x1x8xf32, #tpu.memory_space<vmem>>, vector<1x1x8xf32>
      %308 = vector.shape_cast %307 : vector<1x1x8xf32> to vector<1x8xf32>
      %309 = vector.broadcast %308 : vector<1x8xf32> to vector<8x8xf32>
      %310 = arith.addf %305, %309 : vector<8x8xf32>
      %311 = arith.truncf %301 : vector<8x8xf32> to vector<8x8xbf16>
      %312 = arith.index_cast %c2_i32_140 : i32 to index
      %c0_151 = arith.constant 0 : index
      %c0_152 = arith.constant 0 : index
      %313 = vector.load %arg20[%312, %c0_151, %c0_152] : memref<4x8x8xbf16, #tpu.memory_space<vmem>>, vector<1x8x8xbf16>
      %314 = vector.shape_cast %313 : vector<1x8x8xbf16> to vector<8x8xbf16>
      %315 = vector.shape_cast %311 : vector<8x8xbf16> to vector<1x8x8xbf16>
      tpu.vector_store %arg20[%312, %c0_151, %c0_152], %315 {strides = array<i32>} : memref<4x8x8xbf16, #tpu.memory_space<vmem>>, vector<1x8x8xbf16>,
      %316 = arith.truncf %310 : vector<8x8xf32> to vector<8x8xbf16>
      %317 = arith.index_cast %c2_i32_140 : i32 to index
      %c0_153 = arith.constant 0 : index
      %c0_154 = arith.constant 0 : index
      %318 = vector.load %arg21[%317, %c0_153, %c0_154] : memref<4x8x8xbf16, #tpu.memory_space<vmem>>, vector<1x8x8xbf16>
      %319 = vector.shape_cast %318 : vector<1x8x8xbf16> to vector<8x8xbf16>
      %320 = vector.shape_cast %316 : vector<8x8xbf16> to vector<1x8x8xbf16>
      tpu.vector_store %arg21[%317, %c0_153, %c0_154], %320 {strides = array<i32>} : memref<4x8x8xbf16, #tpu.memory_space<vmem>>, vector<1x8x8xbf16>,
      %c3_i32_155 = arith.constant 3 : i32
      %321 = arith.index_cast %c3_i32_155 : i32 to index
      %c0_156 = arith.constant 0 : index
      %c0_157 = arith.constant 0 : index
      %322 = vector.load %arg5[%321, %c0_156, %c0_157] : memref<4x32x8xbf16, #tpu.memory_space<vmem>>, vector<1x32x8xbf16>
      %323 = vector.shape_cast %322 : vector<1x32x8xbf16> to vector<32x8xbf16>
      %cst_158 = arith.constant dense<0.000000e+00> : vector<8x8xf32>
      %324 = tpu.matmul %236, %323, %cst_158 {dimension_numbers = #tpu.dot_dimension_numbers<[1], [0], [0], [1], [0, 0, 1, 1], [], []>} : vector<8x32xbf16>, vector<32x8xbf16>, vector<8x8xf32> -> vector<8x8xf32>
      %325 = arith.index_cast %c3_i32_155 : i32 to index
      %c0_159 = arith.constant 0 : index
      %c0_160 = arith.constant 0 : index
      %326 = vector.load %arg6[%325, %c0_159, %c0_160] : memref<4x1x8xf32, #tpu.memory_space<vmem>>, vector<1x1x8xf32>
      %327 = vector.shape_cast %326 : vector<1x1x8xf32> to vector<1x8xf32>
      %328 = vector.broadcast %327 : vector<1x8xf32> to vector<8x8xf32>
      %329 = arith.addf %324, %328 : vector<8x8xf32>
      %330 = arith.index_cast %c3_i32_155 : i32 to index
      %c0_161 = arith.constant 0 : index
      %c0_162 = arith.constant 0 : index
      %331 = vector.load %arg7[%330, %c0_161, %c0_162] : memref<4x32x8xbf16, #tpu.memory_space<vmem>>, vector<1x32x8xbf16>
      %332 = vector.shape_cast %331 : vector<1x32x8xbf16> to vector<32x8xbf16>
      %cst_163 = arith.constant dense<0.000000e+00> : vector<8x8xf32>
      %333 = tpu.matmul %236, %332, %cst_163 {dimension_numbers = #tpu.dot_dimension_numbers<[1], [0], [0], [1], [0, 0, 1, 1], [], []>} : vector<8x32xbf16>, vector<32x8xbf16>, vector<8x8xf32> -> vector<8x8xf32>
      %334 = arith.index_cast %c3_i32_155 : i32 to index
      %c0_164 = arith.constant 0 : index
      %c0_165 = arith.constant 0 : index
      %335 = vector.load %arg8[%334, %c0_164, %c0_165] : memref<4x1x8xf32, #tpu.memory_space<vmem>>, vector<1x1x8xf32>
      %336 = vector.shape_cast %335 : vector<1x1x8xf32> to vector<1x8xf32>
      %337 = vector.broadcast %336 : vector<1x8xf32> to vector<8x8xf32>
      %338 = arith.addf %333, %337 : vector<8x8xf32>
      %339 = arith.truncf %329 : vector<8x8xf32> to vector<8x8xbf16>
      %340 = arith.index_cast %c3_i32_155 : i32 to index
      %c0_166 = arith.constant 0 : index
      %c0_167 = arith.constant 0 : index
      %341 = vector.load %arg20[%340, %c0_166, %c0_167] : memref<4x8x8xbf16, #tpu.memory_space<vmem>>, vector<1x8x8xbf16>
      %342 = vector.shape_cast %341 : vector<1x8x8xbf16> to vector<8x8xbf16>
      %343 = vector.shape_cast %339 : vector<8x8xbf16> to vector<1x8x8xbf16>
      tpu.vector_store %arg20[%340, %c0_166, %c0_167], %343 {strides = array<i32>} : memref<4x8x8xbf16, #tpu.memory_space<vmem>>, vector<1x8x8xbf16>,
      %344 = arith.truncf %338 : vector<8x8xf32> to vector<8x8xbf16>
      %345 = arith.index_cast %c3_i32_155 : i32 to index
      %c0_168 = arith.constant 0 : index
      %c0_169 = arith.constant 0 : index
      %346 = vector.load %arg21[%345, %c0_168, %c0_169] : memref<4x8x8xbf16, #tpu.memory_space<vmem>>, vector<1x8x8xbf16>
      %347 = vector.shape_cast %346 : vector<1x8x8xbf16> to vector<8x8xbf16>
      %348 = vector.shape_cast %344 : vector<8x8xbf16> to vector<1x8x8xbf16>
      tpu.vector_store %arg21[%345, %c0_168, %c0_169], %348 {strides = array<i32>} : memref<4x8x8xbf16, #tpu.memory_space<vmem>>, vector<1x8x8xbf16>,
      %c4_i32_170 = arith.constant 4 : i32
    } else {
    }
    %c8_i32 = arith.constant 8 : i32
    %3 = arith.muli %arg1, %c8_i32 : i32
    %4 = tpu.assume_multiple %3, 8 : i32
    %c0 = arith.constant 0 : index
    %5 = arith.index_cast %4 : i32 to index
    %c0_1 = arith.constant 0 : index
    %6 = vector.load %arg2[%c0, %5, %c0_1] : memref<1x8x32xf32, #tpu.memory_space<vmem>>, vector<1x8x32xf32>
    %7 = vector.shape_cast %6 : vector<1x8x32xf32> to vector<8x32xf32>
    %8 = arith.truncf %7 : vector<8x32xf32> to vector<8x32xbf16>
    %cst = arith.constant 0.000000e+00 : f32
    %9 = vector.broadcast %cst : f32 to vector<8x32xf32>
    %c0_i32_2 = arith.constant 0 : i32
    %10 = arith.index_cast %c0_i32_2 : i32 to index
    %c0_3 = arith.constant 0 : index
    %c0_4 = arith.constant 0 : index
    %11 = vector.load %arg3[%10, %c0_3, %c0_4] : memref<4x32x8xbf16, #tpu.memory_space<vmem>>, vector<1x32x8xbf16>
    %12 = vector.shape_cast %11 : vector<1x32x8xbf16> to vector<32x8xbf16>
    %cst_5 = arith.constant dense<0.000000e+00> : vector<8x8xf32>
    %13 = tpu.matmul %8, %12, %cst_5 {dimension_numbers = #tpu.dot_dimension_numbers<[1], [0], [0], [1], [0, 0, 1, 1], [], []>} : vector<8x32xbf16>, vector<32x8xbf16>, vector<8x8xf32> -> vector<8x8xf32>
    %14 = arith.index_cast %c0_i32_2 : i32 to index
    %c0_6 = arith.constant 0 : index
    %c0_7 = arith.constant 0 : index
    %15 = vector.load %arg4[%14, %c0_6, %c0_7] : memref<4x1x8xf32, #tpu.memory_space<vmem>>, vector<1x1x8xf32>
    %16 = vector.shape_cast %15 : vector<1x1x8xf32> to vector<1x8xf32>
    %17 = vector.broadcast %16 : vector<1x8xf32> to vector<8x8xf32>
    %18 = arith.addf %13, %17 : vector<8x8xf32>
    %cst_8 = arith.constant 0.353553385 : f32
    %19 = vector.broadcast %cst_8 : f32 to vector<8x8xf32>
    %20 = arith.mulf %18, %19 : vector<8x8xf32>
    %21 = arith.truncf %20 : vector<8x8xf32> to vector<8x8xbf16>
    %22 = arith.index_cast %c0_i32_2 : i32 to index
    %c0_9 = arith.constant 0 : index
    %c0_10 = arith.constant 0 : index
    %23 = vector.load %arg20[%22, %c0_9, %c0_10] : memref<4x8x8xbf16, #tpu.memory_space<vmem>>, vector<1x8x8xbf16>
    %24 = vector.shape_cast %23 : vector<1x8x8xbf16> to vector<8x8xbf16>
    %cst_11 = arith.constant dense<0.000000e+00> : vector<8x8xf32>
    %25 = tpu.matmul %21, %24, %cst_11 {dimension_numbers = #tpu.dot_dimension_numbers<[1], [1], [0], [0], [0, 0, 1, 0], [], []>} : vector<8x8xbf16>, vector<8x8xbf16>, vector<8x8xf32> -> vector<8x8xf32>
    %cst_12 = arith.constant dense<0xFF800000> : vector<8xf32>
    %26 = vector.multi_reduction <maximumf>, %25, %cst_12 [1] : vector<8x8xf32> to vector<8xf32>
    %27 = vector.shape_cast %26 : vector<8xf32> to vector<8x1xf32>
    %28 = vector.broadcast %27 : vector<8x1xf32> to vector<8x8xf32>
    %29 = arith.subf %25, %28 : vector<8x8xf32>
    %30 = math.exp %29 : vector<8x8xf32>
    %cst_13 = arith.constant dense<0.000000e+00> : vector<8xf32>
    %31 = vector.multi_reduction <add>, %30, %cst_13 [1] : vector<8x8xf32> to vector<8xf32>
    %32 = vector.shape_cast %31 : vector<8xf32> to vector<8x1xf32>
    %33 = tpu.reciprocal %32 {approx = true} : vector<8x1xf32> -> vector<8x1xf32>
    %34 = vector.broadcast %33 : vector<8x1xf32> to vector<8x8xf32>
    %35 = arith.mulf %30, %34 : vector<8x8xf32>
    %36 = arith.truncf %35 : vector<8x8xf32> to vector<8x8xbf16>
    %37 = arith.index_cast %c0_i32_2 : i32 to index
    %c0_14 = arith.constant 0 : index
    %c0_15 = arith.constant 0 : index
    %38 = vector.load %arg21[%37, %c0_14, %c0_15] : memref<4x8x8xbf16, #tpu.memory_space<vmem>>, vector<1x8x8xbf16>
    %39 = vector.shape_cast %38 : vector<1x8x8xbf16> to vector<8x8xbf16>
    %cst_16 = arith.constant dense<0.000000e+00> : vector<8x8xf32>
    %40 = tpu.matmul %36, %39, %cst_16 {dimension_numbers = #tpu.dot_dimension_numbers<[1], [0], [0], [1], [0, 0, 1, 1], [], []>} : vector<8x8xbf16>, vector<8x8xbf16>, vector<8x8xf32> -> vector<8x8xf32>
    %41 = arith.truncf %40 : vector<8x8xf32> to vector<8x8xbf16>
    %42 = arith.index_cast %c0_i32_2 : i32 to index
    %c0_17 = arith.constant 0 : index
    %c0_18 = arith.constant 0 : index
    %43 = vector.load %arg9[%42, %c0_17, %c0_18] : memref<4x8x32xbf16, #tpu.memory_space<vmem>>, vector<1x8x32xbf16>
    %44 = vector.shape_cast %43 : vector<1x8x32xbf16> to vector<8x32xbf16>
    %cst_19 = arith.constant dense<0.000000e+00> : vector<8x32xf32>
    %45 = tpu.matmul %41, %44, %cst_19 {dimension_numbers = #tpu.dot_dimension_numbers<[1], [0], [0], [1], [0, 0, 1, 1], [], []>} : vector<8x8xbf16>, vector<8x32xbf16>, vector<8x32xf32> -> vector<8x32xf32>
    %46 = arith.addf %9, %45 : vector<8x32xf32>
    %c1_i32 = arith.constant 1 : i32
    %47 = arith.index_cast %c1_i32 : i32 to index
    %c0_20 = arith.constant 0 : index
    %c0_21 = arith.constant 0 : index
    %48 = vector.load %arg3[%47, %c0_20, %c0_21] : memref<4x32x8xbf16, #tpu.memory_space<vmem>>, vector<1x32x8xbf16>
    %49 = vector.shape_cast %48 : vector<1x32x8xbf16> to vector<32x8xbf16>
    %cst_22 = arith.constant dense<0.000000e+00> : vector<8x8xf32>
    %50 = tpu.matmul %8, %49, %cst_22 {dimension_numbers = #tpu.dot_dimension_numbers<[1], [0], [0], [1], [0, 0, 1, 1], [], []>} : vector<8x32xbf16>, vector<32x8xbf16>, vector<8x8xf32> -> vector<8x8xf32>
    %51 = arith.index_cast %c1_i32 : i32 to index
    %c0_23 = arith.constant 0 : index
    %c0_24 = arith.constant 0 : index
    %52 = vector.load %arg4[%51, %c0_23, %c0_24] : memref<4x1x8xf32, #tpu.memory_space<vmem>>, vector<1x1x8xf32>
    %53 = vector.shape_cast %52 : vector<1x1x8xf32> to vector<1x8xf32>
    %54 = vector.broadcast %53 : vector<1x8xf32> to vector<8x8xf32>
    %55 = arith.addf %50, %54 : vector<8x8xf32>
    %cst_25 = arith.constant 0.353553385 : f32
    %56 = vector.broadcast %cst_25 : f32 to vector<8x8xf32>
    %57 = arith.mulf %55, %56 : vector<8x8xf32>
    %58 = arith.truncf %57 : vector<8x8xf32> to vector<8x8xbf16>
    %59 = arith.index_cast %c1_i32 : i32 to index
    %c0_26 = arith.constant 0 : index
    %c0_27 = arith.constant 0 : index
    %60 = vector.load %arg20[%59, %c0_26, %c0_27] : memref<4x8x8xbf16, #tpu.memory_space<vmem>>, vector<1x8x8xbf16>
    %61 = vector.shape_cast %60 : vector<1x8x8xbf16> to vector<8x8xbf16>
    %cst_28 = arith.constant dense<0.000000e+00> : vector<8x8xf32>
    %62 = tpu.matmul %58, %61, %cst_28 {dimension_numbers = #tpu.dot_dimension_numbers<[1], [1], [0], [0], [0, 0, 1, 0], [], []>} : vector<8x8xbf16>, vector<8x8xbf16>, vector<8x8xf32> -> vector<8x8xf32>
    %cst_29 = arith.constant dense<0xFF800000> : vector<8xf32>
    %63 = vector.multi_reduction <maximumf>, %62, %cst_29 [1] : vector<8x8xf32> to vector<8xf32>
    %64 = vector.shape_cast %63 : vector<8xf32> to vector<8x1xf32>
    %65 = vector.broadcast %64 : vector<8x1xf32> to vector<8x8xf32>
    %66 = arith.subf %62, %65 : vector<8x8xf32>
    %67 = math.exp %66 : vector<8x8xf32>
    %cst_30 = arith.constant dense<0.000000e+00> : vector<8xf32>
    %68 = vector.multi_reduction <add>, %67, %cst_30 [1] : vector<8x8xf32> to vector<8xf32>
    %69 = vector.shape_cast %68 : vector<8xf32> to vector<8x1xf32>
    %70 = tpu.reciprocal %69 {approx = true} : vector<8x1xf32> -> vector<8x1xf32>
    %71 = vector.broadcast %70 : vector<8x1xf32> to vector<8x8xf32>
    %72 = arith.mulf %67, %71 : vector<8x8xf32>
    %73 = arith.truncf %72 : vector<8x8xf32> to vector<8x8xbf16>
    %74 = arith.index_cast %c1_i32 : i32 to index
    %c0_31 = arith.constant 0 : index
    %c0_32 = arith.constant 0 : index
    %75 = vector.load %arg21[%74, %c0_31, %c0_32] : memref<4x8x8xbf16, #tpu.memory_space<vmem>>, vector<1x8x8xbf16>
    %76 = vector.shape_cast %75 : vector<1x8x8xbf16> to vector<8x8xbf16>
    %cst_33 = arith.constant dense<0.000000e+00> : vector<8x8xf32>
    %77 = tpu.matmul %73, %76, %cst_33 {dimension_numbers = #tpu.dot_dimension_numbers<[1], [0], [0], [1], [0, 0, 1, 1], [], []>} : vector<8x8xbf16>, vector<8x8xbf16>, vector<8x8xf32> -> vector<8x8xf32>
    %78 = arith.truncf %77 : vector<8x8xf32> to vector<8x8xbf16>
    %79 = arith.index_cast %c1_i32 : i32 to index
    %c0_34 = arith.constant 0 : index
    %c0_35 = arith.constant 0 : index
    %80 = vector.load %arg9[%79, %c0_34, %c0_35] : memref<4x8x32xbf16, #tpu.memory_space<vmem>>, vector<1x8x32xbf16>
    %81 = vector.shape_cast %80 : vector<1x8x32xbf16> to vector<8x32xbf16>
    %cst_36 = arith.constant dense<0.000000e+00> : vector<8x32xf32>
    %82 = tpu.matmul %78, %81, %cst_36 {dimension_numbers = #tpu.dot_dimension_numbers<[1], [0], [0], [1], [0, 0, 1, 1], [], []>} : vector<8x8xbf16>, vector<8x32xbf16>, vector<8x32xf32> -> vector<8x32xf32>
    %83 = arith.addf %46, %82 : vector<8x32xf32>
    %c2_i32 = arith.constant 2 : i32
    %84 = arith.index_cast %c2_i32 : i32 to index
    %c0_37 = arith.constant 0 : index
    %c0_38 = arith.constant 0 : index
    %85 = vector.load %arg3[%84, %c0_37, %c0_38] : memref<4x32x8xbf16, #tpu.memory_space<vmem>>, vector<1x32x8xbf16>
    %86 = vector.shape_cast %85 : vector<1x32x8xbf16> to vector<32x8xbf16>
    %cst_39 = arith.constant dense<0.000000e+00> : vector<8x8xf32>
    %87 = tpu.matmul %8, %86, %cst_39 {dimension_numbers = #tpu.dot_dimension_numbers<[1], [0], [0], [1], [0, 0, 1, 1], [], []>} : vector<8x32xbf16>, vector<32x8xbf16>, vector<8x8xf32> -> vector<8x8xf32>
    %88 = arith.index_cast %c2_i32 : i32 to index
    %c0_40 = arith.constant 0 : index
    %c0_41 = arith.constant 0 : index
    %89 = vector.load %arg4[%88, %c0_40, %c0_41] : memref<4x1x8xf32, #tpu.memory_space<vmem>>, vector<1x1x8xf32>
    %90 = vector.shape_cast %89 : vector<1x1x8xf32> to vector<1x8xf32>
    %91 = vector.broadcast %90 : vector<1x8xf32> to vector<8x8xf32>
    %92 = arith.addf %87, %91 : vector<8x8xf32>
    %cst_42 = arith.constant 0.353553385 : f32
    %93 = vector.broadcast %cst_42 : f32 to vector<8x8xf32>
    %94 = arith.mulf %92, %93 : vector<8x8xf32>
    %95 = arith.truncf %94 : vector<8x8xf32> to vector<8x8xbf16>
    %96 = arith.index_cast %c2_i32 : i32 to index
    %c0_43 = arith.constant 0 : index
    %c0_44 = arith.constant 0 : index
    %97 = vector.load %arg20[%96, %c0_43, %c0_44] : memref<4x8x8xbf16, #tpu.memory_space<vmem>>, vector<1x8x8xbf16>
    %98 = vector.shape_cast %97 : vector<1x8x8xbf16> to vector<8x8xbf16>
    %cst_45 = arith.constant dense<0.000000e+00> : vector<8x8xf32>
    %99 = tpu.matmul %95, %98, %cst_45 {dimension_numbers = #tpu.dot_dimension_numbers<[1], [1], [0], [0], [0, 0, 1, 0], [], []>} : vector<8x8xbf16>, vector<8x8xbf16>, vector<8x8xf32> -> vector<8x8xf32>
    %cst_46 = arith.constant dense<0xFF800000> : vector<8xf32>
    %100 = vector.multi_reduction <maximumf>, %99, %cst_46 [1] : vector<8x8xf32> to vector<8xf32>
    %101 = vector.shape_cast %100 : vector<8xf32> to vector<8x1xf32>
    %102 = vector.broadcast %101 : vector<8x1xf32> to vector<8x8xf32>
    %103 = arith.subf %99, %102 : vector<8x8xf32>
    %104 = math.exp %103 : vector<8x8xf32>
    %cst_47 = arith.constant dense<0.000000e+00> : vector<8xf32>
    %105 = vector.multi_reduction <add>, %104, %cst_47 [1] : vector<8x8xf32> to vector<8xf32>
    %106 = vector.shape_cast %105 : vector<8xf32> to vector<8x1xf32>
    %107 = tpu.reciprocal %106 {approx = true} : vector<8x1xf32> -> vector<8x1xf32>
    %108 = vector.broadcast %107 : vector<8x1xf32> to vector<8x8xf32>
    %109 = arith.mulf %104, %108 : vector<8x8xf32>
    %110 = arith.truncf %109 : vector<8x8xf32> to vector<8x8xbf16>
    %111 = arith.index_cast %c2_i32 : i32 to index
    %c0_48 = arith.constant 0 : index
    %c0_49 = arith.constant 0 : index
    %112 = vector.load %arg21[%111, %c0_48, %c0_49] : memref<4x8x8xbf16, #tpu.memory_space<vmem>>, vector<1x8x8xbf16>
    %113 = vector.shape_cast %112 : vector<1x8x8xbf16> to vector<8x8xbf16>
    %cst_50 = arith.constant dense<0.000000e+00> : vector<8x8xf32>
    %114 = tpu.matmul %110, %113, %cst_50 {dimension_numbers = #tpu.dot_dimension_numbers<[1], [0], [0], [1], [0, 0, 1, 1], [], []>} : vector<8x8xbf16>, vector<8x8xbf16>, vector<8x8xf32> -> vector<8x8xf32>
    %115 = arith.truncf %114 : vector<8x8xf32> to vector<8x8xbf16>
    %116 = arith.index_cast %c2_i32 : i32 to index
    %c0_51 = arith.constant 0 : index
    %c0_52 = arith.constant 0 : index
    %117 = vector.load %arg9[%116, %c0_51, %c0_52] : memref<4x8x32xbf16, #tpu.memory_space<vmem>>, vector<1x8x32xbf16>
    %118 = vector.shape_cast %117 : vector<1x8x32xbf16> to vector<8x32xbf16>
    %cst_53 = arith.constant dense<0.000000e+00> : vector<8x32xf32>
    %119 = tpu.matmul %115, %118, %cst_53 {dimension_numbers = #tpu.dot_dimension_numbers<[1], [0], [0], [1], [0, 0, 1, 1], [], []>} : vector<8x8xbf16>, vector<8x32xbf16>, vector<8x32xf32> -> vector<8x32xf32>
    %120 = arith.addf %83, %119 : vector<8x32xf32>
    %c3_i32 = arith.constant 3 : i32
    %121 = arith.index_cast %c3_i32 : i32 to index
    %c0_54 = arith.constant 0 : index
    %c0_55 = arith.constant 0 : index
    %122 = vector.load %arg3[%121, %c0_54, %c0_55] : memref<4x32x8xbf16, #tpu.memory_space<vmem>>, vector<1x32x8xbf16>
    %123 = vector.shape_cast %122 : vector<1x32x8xbf16> to vector<32x8xbf16>
    %cst_56 = arith.constant dense<0.000000e+00> : vector<8x8xf32>
    %124 = tpu.matmul %8, %123, %cst_56 {dimension_numbers = #tpu.dot_dimension_numbers<[1], [0], [0], [1], [0, 0, 1, 1], [], []>} : vector<8x32xbf16>, vector<32x8xbf16>, vector<8x8xf32> -> vector<8x8xf32>
    %125 = arith.index_cast %c3_i32 : i32 to index
    %c0_57 = arith.constant 0 : index
    %c0_58 = arith.constant 0 : index
    %126 = vector.load %arg4[%125, %c0_57, %c0_58] : memref<4x1x8xf32, #tpu.memory_space<vmem>>, vector<1x1x8xf32>
    %127 = vector.shape_cast %126 : vector<1x1x8xf32> to vector<1x8xf32>
    %128 = vector.broadcast %127 : vector<1x8xf32> to vector<8x8xf32>
    %129 = arith.addf %124, %128 : vector<8x8xf32>
    %cst_59 = arith.constant 0.353553385 : f32
    %130 = vector.broadcast %cst_59 : f32 to vector<8x8xf32>
    %131 = arith.mulf %129, %130 : vector<8x8xf32>
    %132 = arith.truncf %131 : vector<8x8xf32> to vector<8x8xbf16>
    %133 = arith.index_cast %c3_i32 : i32 to index
    %c0_60 = arith.constant 0 : index
    %c0_61 = arith.constant 0 : index
    %134 = vector.load %arg20[%133, %c0_60, %c0_61] : memref<4x8x8xbf16, #tpu.memory_space<vmem>>, vector<1x8x8xbf16>
    %135 = vector.shape_cast %134 : vector<1x8x8xbf16> to vector<8x8xbf16>
    %cst_62 = arith.constant dense<0.000000e+00> : vector<8x8xf32>
    %136 = tpu.matmul %132, %135, %cst_62 {dimension_numbers = #tpu.dot_dimension_numbers<[1], [1], [0], [0], [0, 0, 1, 0], [], []>} : vector<8x8xbf16>, vector<8x8xbf16>, vector<8x8xf32> -> vector<8x8xf32>
    %cst_63 = arith.constant dense<0xFF800000> : vector<8xf32>
    %137 = vector.multi_reduction <maximumf>, %136, %cst_63 [1] : vector<8x8xf32> to vector<8xf32>
    %138 = vector.shape_cast %137 : vector<8xf32> to vector<8x1xf32>
    %139 = vector.broadcast %138 : vector<8x1xf32> to vector<8x8xf32>
    %140 = arith.subf %136, %139 : vector<8x8xf32>
    %141 = math.exp %140 : vector<8x8xf32>
    %cst_64 = arith.constant dense<0.000000e+00> : vector<8xf32>
    %142 = vector.multi_reduction <add>, %141, %cst_64 [1] : vector<8x8xf32> to vector<8xf32>
    %143 = vector.shape_cast %142 : vector<8xf32> to vector<8x1xf32>
    %144 = tpu.reciprocal %143 {approx = true} : vector<8x1xf32> -> vector<8x1xf32>
    %145 = vector.broadcast %144 : vector<8x1xf32> to vector<8x8xf32>
    %146 = arith.mulf %141, %145 : vector<8x8xf32>
    %147 = arith.truncf %146 : vector<8x8xf32> to vector<8x8xbf16>
    %148 = arith.index_cast %c3_i32 : i32 to index
    %c0_65 = arith.constant 0 : index
    %c0_66 = arith.constant 0 : index
    %149 = vector.load %arg21[%148, %c0_65, %c0_66] : memref<4x8x8xbf16, #tpu.memory_space<vmem>>, vector<1x8x8xbf16>
    %150 = vector.shape_cast %149 : vector<1x8x8xbf16> to vector<8x8xbf16>
    %cst_67 = arith.constant dense<0.000000e+00> : vector<8x8xf32>
    %151 = tpu.matmul %147, %150, %cst_67 {dimension_numbers = #tpu.dot_dimension_numbers<[1], [0], [0], [1], [0, 0, 1, 1], [], []>} : vector<8x8xbf16>, vector<8x8xbf16>, vector<8x8xf32> -> vector<8x8xf32>
    %152 = arith.truncf %151 : vector<8x8xf32> to vector<8x8xbf16>
    %153 = arith.index_cast %c3_i32 : i32 to index
    %c0_68 = arith.constant 0 : index
    %c0_69 = arith.constant 0 : index
    %154 = vector.load %arg9[%153, %c0_68, %c0_69] : memref<4x8x32xbf16, #tpu.memory_space<vmem>>, vector<1x8x32xbf16>
    %155 = vector.shape_cast %154 : vector<1x8x32xbf16> to vector<8x32xbf16>
    %cst_70 = arith.constant dense<0.000000e+00> : vector<8x32xf32>
    %156 = tpu.matmul %152, %155, %cst_70 {dimension_numbers = #tpu.dot_dimension_numbers<[1], [0], [0], [1], [0, 0, 1, 1], [], []>} : vector<8x8xbf16>, vector<8x32xbf16>, vector<8x32xf32> -> vector<8x32xf32>
    %157 = arith.addf %120, %156 : vector<8x32xf32>
    %c4_i32 = arith.constant 4 : i32
    %c0_71 = arith.constant 0 : index
    %c0_72 = arith.constant 0 : index
    %158 = vector.load %arg10[%c0_71, %c0_72] : memref<1x32xf32, #tpu.memory_space<vmem>>, vector<1x32xf32>
    %159 = vector.broadcast %158 : vector<1x32xf32> to vector<8x32xf32>
    %160 = arith.addf %157, %159 : vector<8x32xf32>
    %161 = arith.addf %160, %7 : vector<8x32xf32>
    %cst_73 = arith.constant dense<0.000000e+00> : vector<8xf32>
    %162 = vector.multi_reduction <add>, %161, %cst_73 [1] : vector<8x32xf32> to vector<8xf32>
    %163 = vector.shape_cast %162 : vector<8xf32> to vector<8x1xf32>
    %cst_74 = arith.constant 3.200000e+01 : f32
    %164 = vector.broadcast %cst_74 : f32 to vector<8x1xf32>
    %165 = arith.divf %163, %164 : vector<8x1xf32>
    %166 = vector.broadcast %165 : vector<8x1xf32> to vector<8x32xf32>
    %167 = arith.subf %161, %166 : vector<8x32xf32>
    %168 = arith.mulf %167, %167 : vector<8x32xf32>
    %cst_75 = arith.constant dense<0.000000e+00> : vector<8xf32>
    %169 = vector.multi_reduction <add>, %168, %cst_75 [1] : vector<8x32xf32> to vector<8xf32>
    %170 = vector.shape_cast %169 : vector<8xf32> to vector<8x1xf32>
    %cst_76 = arith.constant 3.200000e+01 : f32
    %171 = vector.broadcast %cst_76 : f32 to vector<8x1xf32>
    %172 = arith.divf %170, %171 : vector<8x1xf32>
    %173 = vector.broadcast %165 : vector<8x1xf32> to vector<8x32xf32>
    %174 = arith.subf %161, %173 : vector<8x32xf32>
    %cst_77 = arith.constant 9.99999974E-6 : f32
    %175 = vector.broadcast %cst_77 : f32 to vector<8x1xf32>
    %176 = arith.addf %172, %175 : vector<8x1xf32>
    %177 = math.rsqrt %176 : vector<8x1xf32>
    %178 = vector.broadcast %177 : vector<8x1xf32> to vector<8x32xf32>
    %179 = arith.mulf %174, %178 : vector<8x32xf32>
    %c0_78 = arith.constant 0 : index
    %c0_79 = arith.constant 0 : index
    %180 = vector.load %arg15[%c0_78, %c0_79] : memref<1x32xf32, #tpu.memory_space<vmem>>, vector<1x32xf32>
    %181 = vector.broadcast %180 : vector<1x32xf32> to vector<8x32xf32>
    %182 = arith.mulf %179, %181 : vector<8x32xf32>
    %c0_80 = arith.constant 0 : index
    %c0_81 = arith.constant 0 : index
    %183 = vector.load %arg16[%c0_80, %c0_81] : memref<1x32xf32, #tpu.memory_space<vmem>>, vector<1x32xf32>
    %184 = vector.broadcast %183 : vector<1x32xf32> to vector<8x32xf32>
    %185 = arith.addf %182, %184 : vector<8x32xf32>
    %186 = arith.truncf %185 : vector<8x32xf32> to vector<8x32xbf16>
    %c0_82 = arith.constant 0 : index
    %c0_83 = arith.constant 0 : index
    %187 = vector.load %arg11[%c0_82, %c0_83] : memref<32x32xbf16, #tpu.memory_space<vmem>>, vector<32x32xbf16>
    %cst_84 = arith.constant dense<0.000000e+00> : vector<8x32xf32>
    %188 = tpu.matmul %186, %187, %cst_84 {dimension_numbers = #tpu.dot_dimension_numbers<[1], [0], [0], [1], [0, 0, 1, 1], [], []>} : vector<8x32xbf16>, vector<32x32xbf16>, vector<8x32xf32> -> vector<8x32xf32>
    %c0_85 = arith.constant 0 : index
    %c0_86 = arith.constant 0 : index
    %189 = vector.load %arg12[%c0_85, %c0_86] : memref<1x32xf32, #tpu.memory_space<vmem>>, vector<1x32xf32>
    %190 = vector.broadcast %189 : vector<1x32xf32> to vector<8x32xf32>
    %191 = arith.addf %188, %190 : vector<8x32xf32>
    %cst_87 = arith.constant 5.000000e-01 : f32
    %192 = vector.broadcast %cst_87 : f32 to vector<8x32xf32>
    %193 = arith.mulf %192, %191 : vector<8x32xf32>
    %cst_88 = arith.constant 0.707106769 : f32
    %194 = vector.broadcast %cst_88 : f32 to vector<8x32xf32>
    %195 = arith.mulf %191, %194 : vector<8x32xf32>
    %196 = math.erf %195 : vector<8x32xf32>
    %cst_89 = arith.constant 1.000000e+00 : f32
    %197 = vector.broadcast %cst_89 : f32 to vector<8x32xf32>
    %198 = arith.addf %197, %196 : vector<8x32xf32>
    %199 = arith.mulf %193, %198 : vector<8x32xf32>
    %200 = arith.truncf %199 : vector<8x32xf32> to vector<8x32xbf16>
    %c0_90 = arith.constant 0 : index
    %c0_91 = arith.constant 0 : index
    %201 = vector.load %arg13[%c0_90, %c0_91] : memref<32x32xbf16, #tpu.memory_space<vmem>>, vector<32x32xbf16>
    %cst_92 = arith.constant dense<0.000000e+00> : vector<8x32xf32>
    %202 = tpu.matmul %200, %201, %cst_92 {dimension_numbers = #tpu.dot_dimension_numbers<[1], [0], [0], [1], [0, 0, 1, 1], [], []>} : vector<8x32xbf16>, vector<32x32xbf16>, vector<8x32xf32> -> vector<8x32xf32>
    %c0_93 = arith.constant 0 : index
    %c0_94 = arith.constant 0 : index
    %203 = vector.load %arg14[%c0_93, %c0_94] : memref<1x32xf32, #tpu.memory_space<vmem>>, vector<1x32xf32>
    %204 = vector.broadcast %203 : vector<1x32xf32> to vector<8x32xf32>
    %205 = arith.addf %202, %204 : vector<8x32xf32>
    %206 = arith.addf %205, %185 : vector<8x32xf32>
    %cst_95 = arith.constant dense<0.000000e+00> : vector<8xf32>
    %207 = vector.multi_reduction <add>, %206, %cst_95 [1] : vector<8x32xf32> to vector<8xf32>
    %208 = vector.shape_cast %207 : vector<8xf32> to vector<8x1xf32>
    %cst_96 = arith.constant 3.200000e+01 : f32
    %209 = vector.broadcast %cst_96 : f32 to vector<8x1xf32>
    %210 = arith.divf %208, %209 : vector<8x1xf32>
    %211 = vector.broadcast %210 : vector<8x1xf32> to vector<8x32xf32>
    %212 = arith.subf %206, %211 : vector<8x32xf32>
    %213 = arith.mulf %212, %212 : vector<8x32xf32>
    %cst_97 = arith.constant dense<0.000000e+00> : vector<8xf32>
    %214 = vector.multi_reduction <add>, %213, %cst_97 [1] : vector<8x32xf32> to vector<8xf32>
    %215 = vector.shape_cast %214 : vector<8xf32> to vector<8x1xf32>
    %cst_98 = arith.constant 3.200000e+01 : f32
    %216 = vector.broadcast %cst_98 : f32 to vector<8x1xf32>
    %217 = arith.divf %215, %216 : vector<8x1xf32>
    %218 = vector.broadcast %210 : vector<8x1xf32> to vector<8x32xf32>
    %219 = arith.subf %206, %218 : vector<8x32xf32>
    %cst_99 = arith.constant 9.99999974E-6 : f32
    %220 = vector.broadcast %cst_99 : f32 to vector<8x1xf32>
    %221 = arith.addf %217, %220 : vector<8x1xf32>
    %222 = math.rsqrt %221 : vector<8x1xf32>
    %223 = vector.broadcast %222 : vector<8x1xf32> to vector<8x32xf32>
    %224 = arith.mulf %219, %223 : vector<8x32xf32>
    %c0_100 = arith.constant 0 : index
    %c0_101 = arith.constant 0 : index
    %225 = vector.load %arg17[%c0_100, %c0_101] : memref<1x32xf32, #tpu.memory_space<vmem>>, vector<1x32xf32>
    %226 = vector.broadcast %225 : vector<1x32xf32> to vector<8x32xf32>
    %227 = arith.mulf %224, %226 : vector<8x32xf32>
    %c0_102 = arith.constant 0 : index
    %c0_103 = arith.constant 0 : index
    %228 = vector.load %arg18[%c0_102, %c0_103] : memref<1x32xf32, #tpu.memory_space<vmem>>, vector<1x32xf32>
    %229 = vector.broadcast %228 : vector<1x32xf32> to vector<8x32xf32>
    %230 = arith.addf %227, %229 : vector<8x32xf32>
    %c0_104 = arith.constant 0 : index
    %c0_105 = arith.constant 0 : index
    %c0_106 = arith.constant 0 : index
    %231 = vector.load %arg19[%c0_104, %c0_105, %c0_106] : memref<1x8x32xf32, #tpu.memory_space<vmem>>, vector<1x8x32xf32>
    %232 = vector.shape_cast %231 : vector<1x8x32xf32> to vector<8x32xf32>
    %233 = vector.shape_cast %230 : vector<8x32xf32> to vector<1x8x32xf32>
    tpu.vector_store %arg19[%c0_104, %c0_105, %c0_106], %233 {strides = array<i32>} : memref<1x8x32xf32, #tpu.memory_space<vmem>>, vector<1x8x32xf32>,
    return
  }
  func.func @transform_0(%arg0: i32, %arg1: i32) -> (i32, i32, i32) {
    %c0_i32 = arith.constant 0 : i32
    %c0_i32_0 = arith.constant 0 : i32
    %c0_i32_1 = arith.constant 0 : i32
    return %arg0, %c0_i32, %c0_i32_0 : i32, i32, i32
  }
  func.func @transform_1(%arg0: i32, %arg1: i32) -> (i32, i32, i32) {
    %c0_i32 = arith.constant 0 : i32
    %c0_i32_0 = arith.constant 0 : i32
    %c0_i32_1 = arith.constant 0 : i32
    %c0_i32_2 = arith.constant 0 : i32
    return %c0_i32, %c0_i32_0, %c0_i32_1 : i32, i32, i32
  }
  func.func @transform_2(%arg0: i32, %arg1: i32) -> (i32, i32, i32) {
    %c0_i32 = arith.constant 0 : i32
    %c0_i32_0 = arith.constant 0 : i32
    %c0_i32_1 = arith.constant 0 : i32
    %c0_i32_2 = arith.constant 0 : i32
    return %c0_i32, %c0_i32_0, %c0_i32_1 : i32, i32, i32
  }
  func.func @transform_3(%arg0: i32, %arg1: i32) -> (i32, i32, i32) {
    %c0_i32 = arith.constant 0 : i32
    %c0_i32_0 = arith.constant 0 : i32
    %c0_i32_1 = arith.constant 0 : i32
    %c0_i32_2 = arith.constant 0 : i32
    return %c0_i32, %c0_i32_0, %c0_i32_1 : i32, i32, i32
  }
  func.func @transform_4(%arg0: i32, %arg1: i32) -> (i32, i32, i32) {
    %c0_i32 = arith.constant 0 : i32
    %c0_i32_0 = arith.constant 0 : i32
    %c0_i32_1 = arith.constant 0 : i32
    %c0_i32_2 = arith.constant 0 : i32
    return %c0_i32, %c0_i32_0, %c0_i32_1 : i32, i32, i32
  }
  func.func @transform_5(%arg0: i32, %arg1: i32) -> (i32, i32, i32) {
    %c0_i32 = arith.constant 0 : i32
    %c0_i32_0 = arith.constant 0 : i32
    %c0_i32_1 = arith.constant 0 : i32
    %c0_i32_2 = arith.constant 0 : i32
    return %c0_i32, %c0_i32_0, %c0_i32_1 : i32, i32, i32
  }
  func.func @transform_6(%arg0: i32, %arg1: i32) -> (i32, i32, i32) {
    %c0_i32 = arith.constant 0 : i32
    %c0_i32_0 = arith.constant 0 : i32
    %c0_i32_1 = arith.constant 0 : i32
    %c0_i32_2 = arith.constant 0 : i32
    return %c0_i32, %c0_i32_0, %c0_i32_1 : i32, i32, i32
  }
  func.func @transform_7(%arg0: i32, %arg1: i32) -> (i32, i32, i32) {
    %c0_i32 = arith.constant 0 : i32
    %c0_i32_0 = arith.constant 0 : i32
    %c0_i32_1 = arith.constant 0 : i32
    %c0_i32_2 = arith.constant 0 : i32
    return %c0_i32, %c0_i32_0, %c0_i32_1 : i32, i32, i32
  }
  func.func @transform_8(%arg0: i32, %arg1: i32) -> (i32, i32) {
    %c0_i32 = arith.constant 0 : i32
    %c0_i32_0 = arith.constant 0 : i32
    %c0_i32_1 = arith.constant 0 : i32
    return %c0_i32, %c0_i32_0 : i32, i32
  }
  func.func @transform_9(%arg0: i32, %arg1: i32) -> (i32, i32) {
    %c0_i32 = arith.constant 0 : i32
    %c0_i32_0 = arith.constant 0 : i32
    %c0_i32_1 = arith.constant 0 : i32
    return %c0_i32, %c0_i32_0 : i32, i32
  }
  func.func @transform_10(%arg0: i32, %arg1: i32) -> (i32, i32) {
    %c0_i32 = arith.constant 0 : i32
    %c0_i32_0 = arith.constant 0 : i32
    %c0_i32_1 = arith.constant 0 : i32
    return %c0_i32, %c0_i32_0 : i32, i32
  }
  func.func @transform_11(%arg0: i32, %arg1: i32) -> (i32, i32) {
    %c0_i32 = arith.constant 0 : i32
    %c0_i32_0 = arith.constant 0 : i32
    %c0_i32_1 = arith.constant 0 : i32
    return %c0_i32, %c0_i32_0 : i32, i32
  }
  func.func @transform_12(%arg0: i32, %arg1: i32) -> (i32, i32) {
    %c0_i32 = arith.constant 0 : i32
    %c0_i32_0 = arith.constant 0 : i32
    %c0_i32_1 = arith.constant 0 : i32
    return %c0_i32, %c0_i32_0 : i32, i32
  }
  func.func @transform_13(%arg0: i32, %arg1: i32) -> (i32, i32) {
    %c0_i32 = arith.constant 0 : i32
    %c0_i32_0 = arith.constant 0 : i32
    %c0_i32_1 = arith.constant 0 : i32
    return %c0_i32, %c0_i32_0 : i32, i32
  }
  func.func @transform_14(%arg0: i32, %arg1: i32) -> (i32, i32) {
    %c0_i32 = arith.constant 0 : i32
    %c0_i32_0 = arith.constant 0 : i32
    %c0_i32_1 = arith.constant 0 : i32
    return %c0_i32, %c0_i32_0 : i32, i32
  }
  func.func @transform_15(%arg0: i32, %arg1: i32) -> (i32, i32) {
    %c0_i32 = arith.constant 0 : i32
    %c0_i32_0 = arith.constant 0 : i32
    %c0_i32_1 = arith.constant 0 : i32
    return %c0_i32, %c0_i32_0 : i32, i32
  }
  func.func @transform_16(%arg0: i32, %arg1: i32) -> (i32, i32) {
    %c0_i32 = arith.constant 0 : i32
    %c0_i32_0 = arith.constant 0 : i32
    %c0_i32_1 = arith.constant 0 : i32
    return %c0_i32, %c0_i32_0 : i32, i32
  }
  func.func @transform_17(%arg0: i32, %arg1: i32) -> (i32, i32, i32) {
    %c0_i32 = arith.constant 0 : i32
    %c0_i32_0 = arith.constant 0 : i32
    return %arg0, %arg1, %c0_i32 : i32, i32, i32
  }
}

module attributes {stable_mosaic.version = 11 : i64} {
  func.func @_layer_kernel(%arg0: i32, %arg1: i32, %arg2: memref<1x8x32xf32, #tpu.memory_space<vmem>>, %arg3: memref<4x32x8xbf16, #tpu.memory_space<vmem>>, %arg4: memref<4x1x8xf32, #tpu.memory_space<vmem>>, %arg5: memref<4x32x8xbf16, #tpu.memory_space<vmem>>, %arg6: memref<4x1x8xf32, #tpu.memory_space<vmem>>, %arg7: memref<4x32x8xbf16, #tpu.memory_space<vmem>>, %arg8: memref<4x1x8xf32, #tpu.memory_space<vmem>>, %arg9: memref<4x8x32xbf16, #tpu.memory_space<vmem>>, %arg10: memref<1x32xf32, #tpu.memory_space<vmem>>, %arg11: memref<32x32xbf16, #tpu.memory_space<vmem>>, %arg12: memref<1x32xf32, #tpu.memory_space<vmem>>, %arg13: memref<32x32xbf16, #tpu.memory_space<vmem>>, %arg14: memref<1x32xf32, #tpu.memory_space<vmem>>, %arg15: memref<1x32xf32, #tpu.memory_space<vmem>>, %arg16: memref<1x32xf32, #tpu.memory_space<vmem>>, %arg17: memref<1x32xf32, #tpu.memory_space<vmem>>, %arg18: memref<1x32xf32, #tpu.memory_space<vmem>>, %arg19: memref<1x8x32xf32, #tpu.memory_space<vmem>>, %arg20: memref<4x8x8xbf16, #tpu.memory_space<vmem>>, %arg21: memref<4x8x8xbf16, #tpu.memory_space<vmem>>) attributes {dimension_semantics = [#tpu.dimension_semantics<parallel>, #tpu.dimension_semantics<arbitrary>], iteration_bounds = array<i64: 2, 1>, scalar_prefetch = 0 : i64, scratch_operands = 2 : i64, tpu.core_type = #tpu.core_type<tc>, window_params = [{transform_indices = @transform_0, window_bounds = array<i64: 1, 8, 32>}, {pipeline_mode = #tpu.pipeline_mode<synchronous>, transform_indices = @transform_1, window_bounds = array<i64: 4, 32, 8>}, {pipeline_mode = #tpu.pipeline_mode<synchronous>, transform_indices = @transform_2, window_bounds = array<i64: 4, 1, 8>}, {pipeline_mode = #tpu.pipeline_mode<synchronous>, transform_indices = @transform_3, window_bounds = array<i64: 4, 32, 8>}, {pipeline_mode = #tpu.pipeline_mode<synchronous>, transform_indices = @transform_4, window_bounds = array<i64: 4, 1, 8>}, {pipeline_mode = #tpu.pipeline_mode<synchronous>, transform_indices = @transform_5, window_bounds = array<i64: 4, 32, 8>}, {pipeline_mode = #tpu.pipeline_mode<synchronous>, transform_indices = @transform_6, window_bounds = array<i64: 4, 1, 8>}, {pipeline_mode = #tpu.pipeline_mode<synchronous>, transform_indices = @transform_7, window_bounds = array<i64: 4, 8, 32>}, {pipeline_mode = #tpu.pipeline_mode<synchronous>, transform_indices = @transform_8, window_bounds = array<i64: 1, 32>}, {pipeline_mode = #tpu.pipeline_mode<synchronous>, transform_indices = @transform_9, window_bounds = array<i64: 32, 32>}, {pipeline_mode = #tpu.pipeline_mode<synchronous>, transform_indices = @transform_10, window_bounds = array<i64: 1, 32>}, {pipeline_mode = #tpu.pipeline_mode<synchronous>, transform_indices = @transform_11, window_bounds = array<i64: 32, 32>}, {pipeline_mode = #tpu.pipeline_mode<synchronous>, transform_indices = @transform_12, window_bounds = array<i64: 1, 32>}, {pipeline_mode = #tpu.pipeline_mode<synchronous>, transform_indices = @transform_13, window_bounds = array<i64: 1, 32>}, {pipeline_mode = #tpu.pipeline_mode<synchronous>, transform_indices = @transform_14, window_bounds = array<i64: 1, 32>}, {pipeline_mode = #tpu.pipeline_mode<synchronous>, transform_indices = @transform_15, window_bounds = array<i64: 1, 32>}, {pipeline_mode = #tpu.pipeline_mode<synchronous>, transform_indices = @transform_16, window_bounds = array<i64: 1, 32>}, {transform_indices = @transform_17, window_bounds = array<i64: 1, 8, 32>}]} {
    %c0_i32 = arith.constant 0 : i32
    %0 = arith.cmpi eq, %arg1, %c0_i32 : i32
    %1 = arith.extui %0 : i1 to i32
    %c0_i32_0 = arith.constant 0 : i32
    %2 = arith.cmpi ne, %1, %c0_i32_0 : i32
    scf.if %2 {
      %c0_107 = arith.constant 0 : index
      %c0_108 = arith.constant 0 : index
      %c0_109 = arith.constant 0 : index
      %234 = vector.load %arg2[%c0_107, %c0_108, %c0_109] : memref<1x8x32xf32, #tpu.memory_space<vmem>>, vector<1x8x32xf32>
      %235 = vector.shape_cast %234 : vector<1x8x32xf32> to vector<8x32xf32>
      %236 = arith.truncf %235 : vector<8x32xf32> to vector<8x32xbf16>
      %c0_i32_110 = arith.constant 0 : i32
      %237 = arith.index_cast %c0_i32_110 : i32 to index
      %c0_111 = arith.constant 0 : index
      %c0_112 = arith.constant 0 : index
      %238 = vector.load %arg5[%237, %c0_111, %c0_112] : memref<4x32x8xbf16, #tpu.memory_space<vmem>>, vector<1x32x8xbf16>
      %239 = vector.shape_cast %238 : vector<1x32x8xbf16> to vector<32x8xbf16>
      %cst_113 = arith.constant dense<0.000000e+00> : vector<8x8xf32>
      %240 = tpu.matmul %236, %239, %cst_113 {dimension_numbers = #tpu.dot_dimension_numbers<[1], [0], [0], [1], [0, 0, 1, 1], [], []>} : vector<8x32xbf16>, vector<32x8xbf16>, vector<8x8xf32> -> vector<8x8xf32>
      %241 = arith.index_cast %c0_i32_110 : i32 to index
      %c0_114 = arith.constant 0 : index
      %c0_115 = arith.constant 0 : index
      %242 = vector.load %arg6[%241, %c0_114, %c0_115] : memref<4x1x8xf32, #tpu.memory_space<vmem>>, vector<1x1x8xf32>
      %243 = vector.shape_cast %242 : vector<1x1x8xf32> to vector<1x8xf32>
      %244 = vector.broadcast %243 : vector<1x8xf32> to vector<8x8xf32>
      %245 = arith.addf %240, %244 : vector<8x8xf32>
      %246 = arith.index_cast %c0_i32_110 : i32 to index
      %c0_116 = arith.constant 0 : index
      %c0_117 = arith.constant 0 : index
      %247 = vector.load %arg7[%246, %c0_116, %c0_117] : memref<4x32x8xbf16, #tpu.memory_space<vmem>>, vector<1x32x8xbf16>
      %248 = vector.shape_cast %247 : vector<1x32x8xbf16> to vector<32x8xbf16>
      %cst_118 = arith.constant dense<0.000000e+00> : vector<8x8xf32>
      %249 = tpu.matmul %236, %248, %cst_118 {dimension_numbers = #tpu.dot_dimension_numbers<[1], [0], [0], [1], [0, 0, 1, 1], [], []>} : vector<8x32xbf16>, vector<32x8xbf16>, vector<8x8xf32> -> vector<8x8xf32>
      %250 = arith.index_cast %c0_i32_110 : i32 to index
      %c0_119 = arith.constant 0 : index
      %c0_120 = arith.constant 0 : index
      %251 = vector.load %arg8[%250, %c0_119, %c0_120] : memref<4x1x8xf32, #tpu.memory_space<vmem>>, vector<1x1x8xf32>
      %252 = vector.shape_cast %251 : vector<1x1x8xf32> to vector<1x8xf32>
      %253 = vector.broadcast %252 : vector<1x8xf32> to vector<8x8xf32>
      %254 = arith.addf %249, %253 : vector<8x8xf32>
      %255 = arith.truncf %245 : vector<8x8xf32> to vector<8x8xbf16>
      %256 = arith.index_cast %c0_i32_110 : i32 to index
      %c0_121 = arith.constant 0 : index
      %c0_122 = arith.constant 0 : index
      %257 = vector.load %arg20[%256, %c0_121, %c0_122] : memref<4x8x8xbf16, #tpu.memory_space<vmem>>, vector<1x8x8xbf16>
      %258 = vector.shape_cast %257 : vector<1x8x8xbf16> to vector<8x8xbf16>
      %259 = vector.shape_cast %255 : vector<8x8xbf16> to vector<1x8x8xbf16>
      tpu.vector_store %arg20[%256, %c0_121, %c0_122], %259 {strides = array<i32>} : memref<4x8x8xbf16, #tpu.memory_space<vmem>>, vector<1x8x8xbf16>,
      %260 = arith.truncf %254 : vector<8x8xf32> to vector<8x8xbf16>
      %261 = arith.index_cast %c0_i32_110 : i32 to index
      %c0_123 = arith.constant 0 : index
      %c0_124 = arith.constant 0 : index
      %262 = vector.load %arg21[%261, %c0_123, %c0_124] : memref<4x8x8xbf16, #tpu.memory_space<vmem>>, vector<1x8x8xbf16>
      %263 = vector.shape_cast %262 : vector<1x8x8xbf16> to vector<8x8xbf16>
      %264 = vector.shape_cast %260 : vector<8x8xbf16> to vector<1x8x8xbf16>
      tpu.vector_store %arg21[%261, %c0_123, %c0_124], %264 {strides = array<i32>} : memref<4x8x8xbf16, #tpu.memory_space<vmem>>, vector<1x8x8xbf16>,
      %c1_i32_125 = arith.constant 1 : i32
      %265 = arith.index_cast %c1_i32_125 : i32 to index
      %c0_126 = arith.constant 0 : index
      %c0_127 = arith.constant 0 : index
      %266 = vector.load %arg5[%265, %c0_126, %c0_127] : memref<4x32x8xbf16, #tpu.memory_space<vmem>>, vector<1x32x8xbf16>
      %267 = vector.shape_cast %266 : vector<1x32x8xbf16> to vector<32x8xbf16>
      %cst_128 = arith.constant dense<0.000000e+00> : vector<8x8xf32>
      %268 = tpu.matmul %236, %267, %cst_128 {dimension_numbers = #tpu.dot_dimension_numbers<[1], [0], [0], [1], [0, 0, 1, 1], [], []>} : vector<8x32xbf16>, vector<32x8xbf16>, vector<8x8xf32> -> vector<8x8xf32>
      %269 = arith.index_cast %c1_i32_125 : i32 to index
      %c0_129 = arith.constant 0 : index
      %c0_130 = arith.constant 0 : index
      %270 = vector.load %arg6[%269, %c0_129, %c0_130] : memref<4x1x8xf32, #tpu.memory_space<vmem>>, vector<1x1x8xf32>
      %271 = vector.shape_cast %270 : vector<1x1x8xf32> to vector<1x8xf32>
      %272 = vector.broadcast %271 : vector<1x8xf32> to vector<8x8xf32>
      %273 = arith.addf %268, %272 : vector<8x8xf32>
      %274 = arith.index_cast %c1_i32_125 : i32 to index
      %c0_131 = arith.constant 0 : index
      %c0_132 = arith.constant 0 : index
      %275 = vector.load %arg7[%274, %c0_131, %c0_132] : memref<4x32x8xbf16, #tpu.memory_space<vmem>>, vector<1x32x8xbf16>
      %276 = vector.shape_cast %275 : vector<1x32x8xbf16> to vector<32x8xbf16>
      %cst_133 = arith.constant dense<0.000000e+00> : vector<8x8xf32>
      %277 = tpu.matmul %236, %276, %cst_133 {dimension_numbers = #tpu.dot_dimension_numbers<[1], [0], [0], [1], [0, 0, 1, 1], [], []>} : vector<8x32xbf16>, vector<32x8xbf16>, vector<8x8xf32> -> vector<8x8xf32>
      %278 = arith.index_cast %c1_i32_125 : i32 to index
      %c0_134 = arith.constant 0 : index
      %c0_135 = arith.constant 0 : index
      %279 = vector.load %arg8[%278, %c0_134, %c0_135] : memref<4x1x8xf32, #tpu.memory_space<vmem>>, vector<1x1x8xf32>
      %280 = vector.shape_cast %279 : vector<1x1x8xf32> to vector<1x8xf32>
      %281 = vector.broadcast %280 : vector<1x8xf32> to vector<8x8xf32>
      %282 = arith.addf %277, %281 : vector<8x8xf32>
      %283 = arith.truncf %273 : vector<8x8xf32> to vector<8x8xbf16>
      %284 = arith.index_cast %c1_i32_125 : i32 to index
      %c0_136 = arith.constant 0 : index
      %c0_137 = arith.constant 0 : index
      %285 = vector.load %arg20[%284, %c0_136, %c0_137] : memref<4x8x8xbf16, #tpu.memory_space<vmem>>, vector<1x8x8xbf16>
      %286 = vector.shape_cast %285 : vector<1x8x8xbf16> to vector<8x8xbf16>
      %287 = vector.shape_cast %283 : vector<8x8xbf16> to vector<1x8x8xbf16>
      tpu.vector_store %arg20[%284, %c0_136, %c0_137], %287 {strides = array<i32>} : memref<4x8x8xbf16, #tpu.memory_space<vmem>>, vector<1x8x8xbf16>,
      %288 = arith.truncf %282 : vector<8x8xf32> to vector<8x8xbf16>
      %289 = arith.index_cast %c1_i32_125 : i32 to index
      %c0_138 = arith.constant 0 : index
      %c0_139 = arith.constant 0 : index
      %290 = vector.load %arg21[%289, %c0_138, %c0_139] : memref<4x8x8xbf16, #tpu.memory_space<vmem>>, vector<1x8x8xbf16>
      %291 = vector.shape_cast %290 : vector<1x8x8xbf16> to vector<8x8xbf16>
      %292 = vector.shape_cast %288 : vector<8x8xbf16> to vector<1x8x8xbf16>
      tpu.vector_store %arg21[%289, %c0_138, %c0_139], %292 {strides = array<i32>} : memref<4x8x8xbf16, #tpu.memory_space<vmem>>, vector<1x8x8xbf16>,
      %c2_i32_140 = arith.constant 2 : i32
      %293 = arith.index_cast %c2_i32_140 : i32 to index
      %c0_141 = arith.constant 0 : index
      %c0_142 = arith.constant 0 : index
      %294 = vector.load %arg5[%293, %c0_141, %c0_142] : memref<4x32x8xbf16, #tpu.memory_space<vmem>>, vector<1x32x8xbf16>
      %295 = vector.shape_cast %294 : vector<1x32x8xbf16> to vector<32x8xbf16>
      %cst_143 = arith.constant dense<0.000000e+00> : vector<8x8xf32>
      %296 = tpu.matmul %236, %295, %cst_143 {dimension_numbers = #tpu.dot_dimension_numbers<[1], [0], [0], [1], [0, 0, 1, 1], [], []>} : vector<8x32xbf16>, vector<32x8xbf16>, vector<8x8xf32> -> vector<8x8xf32>
      %297 = arith.index_cast %c2_i32_140 : i32 to index
      %c0_144 = arith.constant 0 : index
      %c0_145 = arith.constant 0 : index
      %298 = vector.load %arg6[%297, %c0_144, %c0_145] : memref<4x1x8xf32, #tpu.memory_space<vmem>>, vector<1x1x8xf32>
      %299 = vector.shape_cast %298 : vector<1x1x8xf32> to vector<1x8xf32>
      %300 = vector.broadcast %299 : vector<1x8xf32> to vector<8x8xf32>
      %301 = arith.addf %296, %300 : vector<8x8xf32>
      %302 = arith.index_cast %c2_i32_140 : i32 to index
      %c0_146 = arith.constant 0 : index
      %c0_147 = arith.constant 0 : index
      %303 = vector.load %arg7[%302, %c0_146, %c0_147] : memref<4x32x8xbf16, #tpu.memory_space<vmem>>, vector<1x32x8xbf16>
      %304 = vector.shape_cast %303 : vector<1x32x8xbf16> to vector<32x8xbf16>
      %cst_148 = arith.constant dense<0.000000e+00> : vector<8x8xf32>
      %305 = tpu.matmul %236, %304, %cst_148 {dimension_numbers = #tpu.dot_dimension_numbers<[1], [0], [0], [1], [0, 0, 1, 1], [], []>} : vector<8x32xbf16>, vector<32x8xbf16>, vector<8x8xf32> -> vector<8x8xf32>
      %306 = arith.index_cast %c2_i32_140 : i32 to index
      %c0_149 = arith.constant 0 : index
      %c0_150 = arith.constant 0 : index
      %307 = vector.load %arg8[%306, %c0_149, %c0_150] : memref<4x1x8xf32, #tpu.memory_space<vmem>>, vector<1x1x8xf32>
      %308 = vector.shape_cast %307 : vector<1x1x8xf32> to vector<1x8xf32>
      %309 = vector.broadcast %308 : vector<1x8xf32> to vector<8x8xf32>
      %310 = arith.addf %305, %309 : vector<8x8xf32>
      %311 = arith.truncf %301 : vector<8x8xf32> to vector<8x8xbf16>
      %312 = arith.index_cast %c2_i32_140 : i32 to index
      %c0_151 = arith.constant 0 : index
      %c0_152 = arith.constant 0 : index
      %313 = vector.load %arg20[%312, %c0_151, %c0_152] : memref<4x8x8xbf16, #tpu.memory_space<vmem>>, vector<1x8x8xbf16>
      %314 = vector.shape_cast %313 : vector<1x8x8xbf16> to vector<8x8xbf16>
      %315 = vector.shape_cast %311 : vector<8x8xbf16> to vector<1x8x8xbf16>
      tpu.vector_store %arg20[%312, %c0_151, %c0_152], %315 {strides = array<i32>} : memref<4x8x8xbf16, #tpu.memory_space<vmem>>, vector<1x8x8xbf16>,
      %316 = arith.truncf %310 : vector<8x8xf32> to vector<8x8xbf16>
      %317 = arith.index_cast %c2_i32_140 : i32 to index
      %c0_153 = arith.constant 0 : index
      %c0_154 = arith.constant 0 : index
      %318 = vector.load %arg21[%317, %c0_153, %c0_154] : memref<4x8x8xbf16, #tpu.memory_space<vmem>>, vector<1x8x8xbf16>
      %319 = vector.shape_cast %318 : vector<1x8x8xbf16> to vector<8x8xbf16>
      %320 = vector.shape_cast %316 : vector<8x8xbf16> to vector<1x8x8xbf16>
      tpu.vector_store %arg21[%317, %c0_153, %c0_154], %320 {strides = array<i32>} : memref<4x8x8xbf16, #tpu.memory_space<vmem>>, vector<1x8x8xbf16>,
      %c3_i32_155 = arith.constant 3 : i32
      %321 = arith.index_cast %c3_i32_155 : i32 to index
      %c0_156 = arith.constant 0 : index
      %c0_157 = arith.constant 0 : index
      %322 = vector.load %arg5[%321, %c0_156, %c0_157] : memref<4x32x8xbf16, #tpu.memory_space<vmem>>, vector<1x32x8xbf16>
      %323 = vector.shape_cast %322 : vector<1x32x8xbf16> to vector<32x8xbf16>
      %cst_158 = arith.constant dense<0.000000e+00> : vector<8x8xf32>
      %324 = tpu.matmul %236, %323, %cst_158 {dimension_numbers = #tpu.dot_dimension_numbers<[1], [0], [0], [1], [0, 0, 1, 1], [], []>} : vector<8x32xbf16>, vector<32x8xbf16>, vector<8x8xf32> -> vector<8x8xf32>
      %325 = arith.index_cast %c3_i32_155 : i32 to index
      %c0_159 = arith.constant 0 : index
      %c0_160 = arith.constant 0 : index
      %326 = vector.load %arg6[%325, %c0_159, %c0_160] : memref<4x1x8xf32, #tpu.memory_space<vmem>>, vector<1x1x8xf32>
      %327 = vector.shape_cast %326 : vector<1x1x8xf32> to vector<1x8xf32>
      %328 = vector.broadcast %327 : vector<1x8xf32> to vector<8x8xf32>
      %329 = arith.addf %324, %328 : vector<8x8xf32>
      %330 = arith.index_cast %c3_i32_155 : i32 to index
      %c0_161 = arith.constant 0 : index
      %c0_162 = arith.constant 0 : index
      %331 = vector.load %arg7[%330, %c0_161, %c0_162] : memref<4x32x8xbf16, #tpu.memory_space<vmem>>, vector<1x32x8xbf16>
      %332 = vector.shape_cast %331 : vector<1x32x8xbf16> to vector<32x8xbf16>
      %cst_163 = arith.constant dense<0.000000e+00> : vector<8x8xf32>
      %333 = tpu.matmul %236, %332, %cst_163 {dimension_numbers = #tpu.dot_dimension_numbers<[1], [0], [0], [1], [0, 0, 1, 1], [], []>} : vector<8x32xbf16>, vector<32x8xbf16>, vector<8x8xf32> -> vector<8x8xf32>
      %334 = arith.index_cast %c3_i32_155 : i32 to index
      %c0_164 = arith.constant 0 : index
      %c0_165 = arith.constant 0 : index
      %335 = vector.load %arg8[%334, %c0_164, %c0_165] : memref<4x1x8xf32, #tpu.memory_space<vmem>>, vector<1x1x8xf32>
      %336 = vector.shape_cast %335 : vector<1x1x8xf32> to vector<1x8xf32>
      %337 = vector.broadcast %336 : vector<1x8xf32> to vector<8x8xf32>
      %338 = arith.addf %333, %337 : vector<8x8xf32>
      %339 = arith.truncf %329 : vector<8x8xf32> to vector<8x8xbf16>
      %340 = arith.index_cast %c3_i32_155 : i32 to index
      %c0_166 = arith.constant 0 : index
      %c0_167 = arith.constant 0 : index
      %341 = vector.load %arg20[%340, %c0_166, %c0_167] : memref<4x8x8xbf16, #tpu.memory_space<vmem>>, vector<1x8x8xbf16>
      %342 = vector.shape_cast %341 : vector<1x8x8xbf16> to vector<8x8xbf16>
      %343 = vector.shape_cast %339 : vector<8x8xbf16> to vector<1x8x8xbf16>
      tpu.vector_store %arg20[%340, %c0_166, %c0_167], %343 {strides = array<i32>} : memref<4x8x8xbf16, #tpu.memory_space<vmem>>, vector<1x8x8xbf16>,
      %344 = arith.truncf %338 : vector<8x8xf32> to vector<8x8xbf16>
      %345 = arith.index_cast %c3_i32_155 : i32 to index
      %c0_168 = arith.constant 0 : index
      %c0_169 = arith.constant 0 : index
      %346 = vector.load %arg21[%345, %c0_168, %c0_169] : memref<4x8x8xbf16, #tpu.memory_space<vmem>>, vector<1x8x8xbf16>
      %347 = vector.shape_cast %346 : vector<1x8x8xbf16> to vector<8x8xbf16>
      %348 = vector.shape_cast %344 : vector<8x8xbf16> to vector<1x8x8xbf16>
      tpu.vector_store %arg21[%345, %c0_168, %c0_169], %348 {strides = array<i32>} : memref<4x8x8xbf16, #tpu.memory_space<vmem>>, vector<1x8x8xbf16>,
      %c4_i32_170 = arith.constant 4 : i32
    } else {
    }
    %c8_i32 = arith.constant 8 : i32
    %3 = arith.muli %arg1, %c8_i32 : i32
    %4 = tpu.assume_multiple %3, 8 : i32
    %c0 = arith.constant 0 : index
    %5 = arith.index_cast %4 : i32 to index
    %c0_1 = arith.constant 0 : index
    %6 = vector.load %arg2[%c0, %5, %c0_1] : memref<1x8x32xf32, #tpu.memory_space<vmem>>, vector<1x8x32xf32>
    %7 = vector.shape_cast %6 : vector<1x8x32xf32> to vector<8x32xf32>
    %8 = arith.truncf %7 : vector<8x32xf32> to vector<8x32xbf16>
    %cst = arith.constant 0.000000e+00 : f32
    %9 = vector.broadcast %cst : f32 to vector<8x32xf32>
    %c0_i32_2 = arith.constant 0 : i32
    %10 = arith.index_cast %c0_i32_2 : i32 to index
    %c0_3 = arith.constant 0 : index
    %c0_4 = arith.constant 0 : index
    %11 = vector.load %arg3[%10, %c0_3, %c0_4] : memref<4x32x8xbf16, #tpu.memory_space<vmem>>, vector<1x32x8xbf16>
    %12 = vector.shape_cast %11 : vector<1x32x8xbf16> to vector<32x8xbf16>
    %cst_5 = arith.constant dense<0.000000e+00> : vector<8x8xf32>
    %13 = tpu.matmul %8, %12, %cst_5 {dimension_numbers = #tpu.dot_dimension_numbers<[1], [0], [0], [1], [0, 0, 1, 1], [], []>} : vector<8x32xbf16>, vector<32x8xbf16>, vector<8x8xf32> -> vector<8x8xf32>
    %14 = arith.index_cast %c0_i32_2 : i32 to index
    %c0_6 = arith.constant 0 : index
    %c0_7 = arith.constant 0 : index
    %15 = vector.load %arg4[%14, %c0_6, %c0_7] : memref<4x1x8xf32, #tpu.memory_space<vmem>>, vector<1x1x8xf32>
    %16 = vector.shape_cast %15 : vector<1x1x8xf32> to vector<1x8xf32>
    %17 = vector.broadcast %16 : vector<1x8xf32> to vector<8x8xf32>
    %18 = arith.addf %13, %17 : vector<8x8xf32>
    %cst_8 = arith.constant 0.353553385 : f32
    %19 = vector.broadcast %cst_8 : f32 to vector<8x8xf32>
    %20 = arith.mulf %18, %19 : vector<8x8xf32>
    %21 = arith.truncf %20 : vector<8x8xf32> to vector<8x8xbf16>
    %22 = arith.index_cast %c0_i32_2 : i32 to index
    %c0_9 = arith.constant 0 : index
    %c0_10 = arith.constant 0 : index
    %23 = vector.load %arg20[%22, %c0_9, %c0_10] : memref<4x8x8xbf16, #tpu.memory_space<vmem>>, vector<1x8x8xbf16>
    %24 = vector.shape_cast %23 : vector<1x8x8xbf16> to vector<8x8xbf16>
    %cst_11 = arith.constant dense<0.000000e+00> : vector<8x8xf32>
    %25 = tpu.matmul %21, %24, %cst_11 {dimension_numbers = #tpu.dot_dimension_numbers<[1], [1], [0], [0], [0, 0, 1, 0], [], []>} : vector<8x8xbf16>, vector<8x8xbf16>, vector<8x8xf32> -> vector<8x8xf32>
    %cst_12 = arith.constant dense<0xFF800000> : vector<8xf32>
    %26 = vector.multi_reduction <maximumf>, %25, %cst_12 [1] : vector<8x8xf32> to vector<8xf32>
    %27 = vector.shape_cast %26 : vector<8xf32> to vector<8x1xf32>
    %28 = vector.broadcast %27 : vector<8x1xf32> to vector<8x8xf32>
    %29 = arith.subf %25, %28 : vector<8x8xf32>
    %30 = math.exp %29 : vector<8x8xf32>
    %cst_13 = arith.constant dense<0.000000e+00> : vector<8xf32>
    %31 = vector.multi_reduction <add>, %30, %cst_13 [1] : vector<8x8xf32> to vector<8xf32>
    %32 = vector.shape_cast %31 : vector<8xf32> to vector<8x1xf32>
    %33 = tpu.reciprocal %32 {approx = true} : vector<8x1xf32> -> vector<8x1xf32>
    %34 = vector.broadcast %33 : vector<8x1xf32> to vector<8x8xf32>
    %35 = arith.mulf %30, %34 : vector<8x8xf32>
    %36 = arith.truncf %35 : vector<8x8xf32> to vector<8x8xbf16>
    %37 = arith.index_cast %c0_i32_2 : i32 to index
    %c0_14 = arith.constant 0 : index
    %c0_15 = arith.constant 0 : index
    %38 = vector.load %arg21[%37, %c0_14, %c0_15] : memref<4x8x8xbf16, #tpu.memory_space<vmem>>, vector<1x8x8xbf16>
    %39 = vector.shape_cast %38 : vector<1x8x8xbf16> to vector<8x8xbf16>
    %cst_16 = arith.constant dense<0.000000e+00> : vector<8x8xf32>
    %40 = tpu.matmul %36, %39, %cst_16 {dimension_numbers = #tpu.dot_dimension_numbers<[1], [0], [0], [1], [0, 0, 1, 1], [], []>} : vector<8x8xbf16>, vector<8x8xbf16>, vector<8x8xf32> -> vector<8x8xf32>
    %41 = arith.truncf %40 : vector<8x8xf32> to vector<8x8xbf16>
    %42 = arith.index_cast %c0_i32_2 : i32 to index
    %c0_17 = arith.constant 0 : index
    %c0_18 = arith.constant 0 : index
    %43 = vector.load %arg9[%42, %c0_17, %c0_18] : memref<4x8x32xbf16, #tpu.memory_space<vmem>>, vector<1x8x32xbf16>
    %44 = vector.shape_cast %43 : vector<1x8x32xbf16> to vector<8x32xbf16>
    %cst_19 = arith.constant dense<0.000000e+00> : vector<8x32xf32>
    %45 = tpu.matmul %41, %44, %cst_19 {dimension_numbers = #tpu.dot_dimension_numbers<[1], [0], [0], [1], [0, 0, 1, 1], [], []>} : vector<8x8xbf16>, vector<8x32xbf16>, vector<8x32xf32> -> vector<8x32xf32>
    %46 = arith.addf %9, %45 : vector<8x32xf32>
    %c1_i32 = arith.constant 1 : i32
    %47 = arith.index_cast %c1_i32 : i32 to index
    %c0_20 = arith.constant 0 : index
    %c0_21 = arith.constant 0 : index
    %48 = vector.load %arg3[%47, %c0_20, %c0_21] : memref<4x32x8xbf16, #tpu.memory_space<vmem>>, vector<1x32x8xbf16>
    %49 = vector.shape_cast %48 : vector<1x32x8xbf16> to vector<32x8xbf16>
    %cst_22 = arith.constant dense<0.000000e+00> : vector<8x8xf32>
    %50 = tpu.matmul %8, %49, %cst_22 {dimension_numbers = #tpu.dot_dimension_numbers<[1], [0], [0], [1], [0, 0, 1, 1], [], []>} : vector<8x32xbf16>, vector<32x8xbf16>, vector<8x8xf32> -> vector<8x8xf32>
    %51 = arith.index_cast %c1_i32 : i32 to index
    %c0_23 = arith.constant 0 : index
    %c0_24 = arith.constant 0 : index
    %52 = vector.load %arg4[%51, %c0_23, %c0_24] : memref<4x1x8xf32, #tpu.memory_space<vmem>>, vector<1x1x8xf32>
    %53 = vector.shape_cast %52 : vector<1x1x8xf32> to vector<1x8xf32>
    %54 = vector.broadcast %53 : vector<1x8xf32> to vector<8x8xf32>
    %55 = arith.addf %50, %54 : vector<8x8xf32>
    %cst_25 = arith.constant 0.353553385 : f32
    %56 = vector.broadcast %cst_25 : f32 to vector<8x8xf32>
    %57 = arith.mulf %55, %56 : vector<8x8xf32>
    %58 = arith.truncf %57 : vector<8x8xf32> to vector<8x8xbf16>
    %59 = arith.index_cast %c1_i32 : i32 to index
    %c0_26 = arith.constant 0 : index
    %c0_27 = arith.constant 0 : index
    %60 = vector.load %arg20[%59, %c0_26, %c0_27] : memref<4x8x8xbf16, #tpu.memory_space<vmem>>, vector<1x8x8xbf16>
    %61 = vector.shape_cast %60 : vector<1x8x8xbf16> to vector<8x8xbf16>
    %cst_28 = arith.constant dense<0.000000e+00> : vector<8x8xf32>
    %62 = tpu.matmul %58, %61, %cst_28 {dimension_numbers = #tpu.dot_dimension_numbers<[1], [1], [0], [0], [0, 0, 1, 0], [], []>} : vector<8x8xbf16>, vector<8x8xbf16>, vector<8x8xf32> -> vector<8x8xf32>
    %cst_29 = arith.constant dense<0xFF800000> : vector<8xf32>
    %63 = vector.multi_reduction <maximumf>, %62, %cst_29 [1] : vector<8x8xf32> to vector<8xf32>
    %64 = vector.shape_cast %63 : vector<8xf32> to vector<8x1xf32>
    %65 = vector.broadcast %64 : vector<8x1xf32> to vector<8x8xf32>
    %66 = arith.subf %62, %65 : vector<8x8xf32>
    %67 = math.exp %66 : vector<8x8xf32>
    %cst_30 = arith.constant dense<0.000000e+00> : vector<8xf32>
    %68 = vector.multi_reduction <add>, %67, %cst_30 [1] : vector<8x8xf32> to vector<8xf32>
    %69 = vector.shape_cast %68 : vector<8xf32> to vector<8x1xf32>
    %70 = tpu.reciprocal %69 {approx = true} : vector<8x1xf32> -> vector<8x1xf32>
    %71 = vector.broadcast %70 : vector<8x1xf32> to vector<8x8xf32>
    %72 = arith.mulf %67, %71 : vector<8x8xf32>
    %73 = arith.truncf %72 : vector<8x8xf32> to vector<8x8xbf16>
    %74 = arith.index_cast %c1_i32 : i32 to index
    %c0_31 = arith.constant 0 : index
    %c0_32 = arith.constant 0 : index
    %75 = vector.load %arg21[%74, %c0_31, %c0_32] : memref<4x8x8xbf16, #tpu.memory_space<vmem>>, vector<1x8x8xbf16>
    %76 = vector.shape_cast %75 : vector<1x8x8xbf16> to vector<8x8xbf16>
    %cst_33 = arith.constant dense<0.000000e+00> : vector<8x8xf32>
    %77 = tpu.matmul %73, %76, %cst_33 {dimension_numbers = #tpu.dot_dimension_numbers<[1], [0], [0], [1], [0, 0, 1, 1], [], []>} : vector<8x8xbf16>, vector<8x8xbf16>, vector<8x8xf32> -> vector<8x8xf32>
    %78 = arith.truncf %77 : vector<8x8xf32> to vector<8x8xbf16>
    %79 = arith.index_cast %c1_i32 : i32 to index
    %c0_34 = arith.constant 0 : index
    %c0_35 = arith.constant 0 : index
    %80 = vector.load %arg9[%79, %c0_34, %c0_35] : memref<4x8x32xbf16, #tpu.memory_space<vmem>>, vector<1x8x32xbf16>
    %81 = vector.shape_cast %80 : vector<1x8x32xbf16> to vector<8x32xbf16>
    %cst_36 = arith.constant dense<0.000000e+00> : vector<8x32xf32>
    %82 = tpu.matmul %78, %81, %cst_36 {dimension_numbers = #tpu.dot_dimension_numbers<[1], [0], [0], [1], [0, 0, 1, 1], [], []>} : vector<8x8xbf16>, vector<8x32xbf16>, vector<8x32xf32> -> vector<8x32xf32>
    %83 = arith.addf %46, %82 : vector<8x32xf32>
    %c2_i32 = arith.constant 2 : i32
    %84 = arith.index_cast %c2_i32 : i32 to index
    %c0_37 = arith.constant 0 : index
    %c0_38 = arith.constant 0 : index
    %85 = vector.load %arg3[%84, %c0_37, %c0_38] : memref<4x32x8xbf16, #tpu.memory_space<vmem>>, vector<1x32x8xbf16>
    %86 = vector.shape_cast %85 : vector<1x32x8xbf16> to vector<32x8xbf16>
    %cst_39 = arith.constant dense<0.000000e+00> : vector<8x8xf32>
    %87 = tpu.matmul %8, %86, %cst_39 {dimension_numbers = #tpu.dot_dimension_numbers<[1], [0], [0], [1], [0, 0, 1, 1], [], []>} : vector<8x32xbf16>, vector<32x8xbf16>, vector<8x8xf32> -> vector<8x8xf32>
    %88 = arith.index_cast %c2_i32 : i32 to index
    %c0_40 = arith.constant 0 : index
    %c0_41 = arith.constant 0 : index
    %89 = vector.load %arg4[%88, %c0_40, %c0_41] : memref<4x1x8xf32, #tpu.memory_space<vmem>>, vector<1x1x8xf32>
    %90 = vector.shape_cast %89 : vector<1x1x8xf32> to vector<1x8xf32>
    %91 = vector.broadcast %90 : vector<1x8xf32> to vector<8x8xf32>
    %92 = arith.addf %87, %91 : vector<8x8xf32>
    %cst_42 = arith.constant 0.353553385 : f32
    %93 = vector.broadcast %cst_42 : f32 to vector<8x8xf32>
    %94 = arith.mulf %92, %93 : vector<8x8xf32>
    %95 = arith.truncf %94 : vector<8x8xf32> to vector<8x8xbf16>
    %96 = arith.index_cast %c2_i32 : i32 to index
    %c0_43 = arith.constant 0 : index
    %c0_44 = arith.constant 0 : index
    %97 = vector.load %arg20[%96, %c0_43, %c0_44] : memref<4x8x8xbf16, #tpu.memory_space<vmem>>, vector<1x8x8xbf16>
    %98 = vector.shape_cast %97 : vector<1x8x8xbf16> to vector<8x8xbf16>
    %cst_45 = arith.constant dense<0.000000e+00> : vector<8x8xf32>
    %99 = tpu.matmul %95, %98, %cst_45 {dimension_numbers = #tpu.dot_dimension_numbers<[1], [1], [0], [0], [0, 0, 1, 0], [], []>} : vector<8x8xbf16>, vector<8x8xbf16>, vector<8x8xf32> -> vector<8x8xf32>
    %cst_46 = arith.constant dense<0xFF800000> : vector<8xf32>
    %100 = vector.multi_reduction <maximumf>, %99, %cst_46 [1] : vector<8x8xf32> to vector<8xf32>
    %101 = vector.shape_cast %100 : vector<8xf32> to vector<8x1xf32>
    %102 = vector.broadcast %101 : vector<8x1xf32> to vector<8x8xf32>
    %103 = arith.subf %99, %102 : vector<8x8xf32>
    %104 = math.exp %103 : vector<8x8xf32>
    %cst_47 = arith.constant dense<0.000000e+00> : vector<8xf32>
    %105 = vector.multi_reduction <add>, %104, %cst_47 [1] : vector<8x8xf32> to vector<8xf32>
    %106 = vector.shape_cast %105 : vector<8xf32> to vector<8x1xf32>
    %107 = tpu.reciprocal %106 {approx = true} : vector<8x1xf32> -> vector<8x1xf32>
    %108 = vector.broadcast %107 : vector<8x1xf32> to vector<8x8xf32>
    %109 = arith.mulf %104, %108 : vector<8x8xf32>
    %110 = arith.truncf %109 : vector<8x8xf32> to vector<8x8xbf16>
    %111 = arith.index_cast %c2_i32 : i32 to index
    %c0_48 = arith.constant 0 : index
    %c0_49 = arith.constant 0 : index
    %112 = vector.load %arg21[%111, %c0_48, %c0_49] : memref<4x8x8xbf16, #tpu.memory_space<vmem>>, vector<1x8x8xbf16>
    %113 = vector.shape_cast %112 : vector<1x8x8xbf16> to vector<8x8xbf16>
    %cst_50 = arith.constant dense<0.000000e+00> : vector<8x8xf32>
    %114 = tpu.matmul %110, %113, %cst_50 {dimension_numbers = #tpu.dot_dimension_numbers<[1], [0], [0], [1], [0, 0, 1, 1], [], []>} : vector<8x8xbf16>, vector<8x8xbf16>, vector<8x8xf32> -> vector<8x8xf32>
    %115 = arith.truncf %114 : vector<8x8xf32> to vector<8x8xbf16>
    %116 = arith.index_cast %c2_i32 : i32 to index
    %c0_51 = arith.constant 0 : index
    %c0_52 = arith.constant 0 : index
    %117 = vector.load %arg9[%116, %c0_51, %c0_52] : memref<4x8x32xbf16, #tpu.memory_space<vmem>>, vector<1x8x32xbf16>
    %118 = vector.shape_cast %117 : vector<1x8x32xbf16> to vector<8x32xbf16>
    %cst_53 = arith.constant dense<0.000000e+00> : vector<8x32xf32>
    %119 = tpu.matmul %115, %118, %cst_53 {dimension_numbers = #tpu.dot_dimension_numbers<[1], [0], [0], [1], [0, 0, 1, 1], [], []>} : vector<8x8xbf16>, vector<8x32xbf16>, vector<8x32xf32> -> vector<8x32xf32>
    %120 = arith.addf %83, %119 : vector<8x32xf32>
    %c3_i32 = arith.constant 3 : i32
    %121 = arith.index_cast %c3_i32 : i32 to index
    %c0_54 = arith.constant 0 : index
    %c0_55 = arith.constant 0 : index
    %122 = vector.load %arg3[%121, %c0_54, %c0_55] : memref<4x32x8xbf16, #tpu.memory_space<vmem>>, vector<1x32x8xbf16>
    %123 = vector.shape_cast %122 : vector<1x32x8xbf16> to vector<32x8xbf16>
    %cst_56 = arith.constant dense<0.000000e+00> : vector<8x8xf32>
    %124 = tpu.matmul %8, %123, %cst_56 {dimension_numbers = #tpu.dot_dimension_numbers<[1], [0], [0], [1], [0, 0, 1, 1], [], []>} : vector<8x32xbf16>, vector<32x8xbf16>, vector<8x8xf32> -> vector<8x8xf32>
    %125 = arith.index_cast %c3_i32 : i32 to index
    %c0_57 = arith.constant 0 : index
    %c0_58 = arith.constant 0 : index
    %126 = vector.load %arg4[%125, %c0_57, %c0_58] : memref<4x1x8xf32, #tpu.memory_space<vmem>>, vector<1x1x8xf32>
    %127 = vector.shape_cast %126 : vector<1x1x8xf32> to vector<1x8xf32>
    %128 = vector.broadcast %127 : vector<1x8xf32> to vector<8x8xf32>
    %129 = arith.addf %124, %128 : vector<8x8xf32>
    %cst_59 = arith.constant 0.353553385 : f32
    %130 = vector.broadcast %cst_59 : f32 to vector<8x8xf32>
    %131 = arith.mulf %129, %130 : vector<8x8xf32>
    %132 = arith.truncf %131 : vector<8x8xf32> to vector<8x8xbf16>
    %133 = arith.index_cast %c3_i32 : i32 to index
    %c0_60 = arith.constant 0 : index
    %c0_61 = arith.constant 0 : index
    %134 = vector.load %arg20[%133, %c0_60, %c0_61] : memref<4x8x8xbf16, #tpu.memory_space<vmem>>, vector<1x8x8xbf16>
    %135 = vector.shape_cast %134 : vector<1x8x8xbf16> to vector<8x8xbf16>
    %cst_62 = arith.constant dense<0.000000e+00> : vector<8x8xf32>
    %136 = tpu.matmul %132, %135, %cst_62 {dimension_numbers = #tpu.dot_dimension_numbers<[1], [1], [0], [0], [0, 0, 1, 0], [], []>} : vector<8x8xbf16>, vector<8x8xbf16>, vector<8x8xf32> -> vector<8x8xf32>
    %cst_63 = arith.constant dense<0xFF800000> : vector<8xf32>
    %137 = vector.multi_reduction <maximumf>, %136, %cst_63 [1] : vector<8x8xf32> to vector<8xf32>
    %138 = vector.shape_cast %137 : vector<8xf32> to vector<8x1xf32>
    %139 = vector.broadcast %138 : vector<8x1xf32> to vector<8x8xf32>
    %140 = arith.subf %136, %139 : vector<8x8xf32>
    %141 = math.exp %140 : vector<8x8xf32>
    %cst_64 = arith.constant dense<0.000000e+00> : vector<8xf32>
    %142 = vector.multi_reduction <add>, %141, %cst_64 [1] : vector<8x8xf32> to vector<8xf32>
    %143 = vector.shape_cast %142 : vector<8xf32> to vector<8x1xf32>
    %144 = tpu.reciprocal %143 {approx = true} : vector<8x1xf32> -> vector<8x1xf32>
    %145 = vector.broadcast %144 : vector<8x1xf32> to vector<8x8xf32>
    %146 = arith.mulf %141, %145 : vector<8x8xf32>
    %147 = arith.truncf %146 : vector<8x8xf32> to vector<8x8xbf16>
    %148 = arith.index_cast %c3_i32 : i32 to index
    %c0_65 = arith.constant 0 : index
    %c0_66 = arith.constant 0 : index
    %149 = vector.load %arg21[%148, %c0_65, %c0_66] : memref<4x8x8xbf16, #tpu.memory_space<vmem>>, vector<1x8x8xbf16>
    %150 = vector.shape_cast %149 : vector<1x8x8xbf16> to vector<8x8xbf16>
    %cst_67 = arith.constant dense<0.000000e+00> : vector<8x8xf32>
    %151 = tpu.matmul %147, %150, %cst_67 {dimension_numbers = #tpu.dot_dimension_numbers<[1], [0], [0], [1], [0, 0, 1, 1], [], []>} : vector<8x8xbf16>, vector<8x8xbf16>, vector<8x8xf32> -> vector<8x8xf32>
    %152 = arith.truncf %151 : vector<8x8xf32> to vector<8x8xbf16>
    %153 = arith.index_cast %c3_i32 : i32 to index
    %c0_68 = arith.constant 0 : index
    %c0_69 = arith.constant 0 : index
    %154 = vector.load %arg9[%153, %c0_68, %c0_69] : memref<4x8x32xbf16, #tpu.memory_space<vmem>>, vector<1x8x32xbf16>
    %155 = vector.shape_cast %154 : vector<1x8x32xbf16> to vector<8x32xbf16>
    %cst_70 = arith.constant dense<0.000000e+00> : vector<8x32xf32>
    %156 = tpu.matmul %152, %155, %cst_70 {dimension_numbers = #tpu.dot_dimension_numbers<[1], [0], [0], [1], [0, 0, 1, 1], [], []>} : vector<8x8xbf16>, vector<8x32xbf16>, vector<8x32xf32> -> vector<8x32xf32>
    %157 = arith.addf %120, %156 : vector<8x32xf32>
    %c4_i32 = arith.constant 4 : i32
    %c0_71 = arith.constant 0 : index
    %c0_72 = arith.constant 0 : index
    %158 = vector.load %arg10[%c0_71, %c0_72] : memref<1x32xf32, #tpu.memory_space<vmem>>, vector<1x32xf32>
    %159 = vector.broadcast %158 : vector<1x32xf32> to vector<8x32xf32>
    %160 = arith.addf %157, %159 : vector<8x32xf32>
    %161 = arith.addf %160, %7 : vector<8x32xf32>
    %cst_73 = arith.constant dense<0.000000e+00> : vector<8xf32>
    %162 = vector.multi_reduction <add>, %161, %cst_73 [1] : vector<8x32xf32> to vector<8xf32>
    %163 = vector.shape_cast %162 : vector<8xf32> to vector<8x1xf32>
    %cst_74 = arith.constant 3.200000e+01 : f32
    %164 = vector.broadcast %cst_74 : f32 to vector<8x1xf32>
    %165 = arith.divf %163, %164 : vector<8x1xf32>
    %166 = vector.broadcast %165 : vector<8x1xf32> to vector<8x32xf32>
    %167 = arith.subf %161, %166 : vector<8x32xf32>
    %168 = arith.mulf %167, %167 : vector<8x32xf32>
    %cst_75 = arith.constant dense<0.000000e+00> : vector<8xf32>
    %169 = vector.multi_reduction <add>, %168, %cst_75 [1] : vector<8x32xf32> to vector<8xf32>
    %170 = vector.shape_cast %169 : vector<8xf32> to vector<8x1xf32>
    %cst_76 = arith.constant 3.200000e+01 : f32
    %171 = vector.broadcast %cst_76 : f32 to vector<8x1xf32>
    %172 = arith.divf %170, %171 : vector<8x1xf32>
    %173 = vector.broadcast %165 : vector<8x1xf32> to vector<8x32xf32>
    %174 = arith.subf %161, %173 : vector<8x32xf32>
    %cst_77 = arith.constant 9.99999974E-6 : f32
    %175 = vector.broadcast %cst_77 : f32 to vector<8x1xf32>
    %176 = arith.addf %172, %175 : vector<8x1xf32>
    %177 = math.rsqrt %176 : vector<8x1xf32>
    %178 = vector.broadcast %177 : vector<8x1xf32> to vector<8x32xf32>
    %179 = arith.mulf %174, %178 : vector<8x32xf32>
    %c0_78 = arith.constant 0 : index
    %c0_79 = arith.constant 0 : index
    %180 = vector.load %arg15[%c0_78, %c0_79] : memref<1x32xf32, #tpu.memory_space<vmem>>, vector<1x32xf32>
    %181 = vector.broadcast %180 : vector<1x32xf32> to vector<8x32xf32>
    %182 = arith.mulf %179, %181 : vector<8x32xf32>
    %c0_80 = arith.constant 0 : index
    %c0_81 = arith.constant 0 : index
    %183 = vector.load %arg16[%c0_80, %c0_81] : memref<1x32xf32, #tpu.memory_space<vmem>>, vector<1x32xf32>
    %184 = vector.broadcast %183 : vector<1x32xf32> to vector<8x32xf32>
    %185 = arith.addf %182, %184 : vector<8x32xf32>
    %186 = arith.truncf %185 : vector<8x32xf32> to vector<8x32xbf16>
    %c0_82 = arith.constant 0 : index
    %c0_83 = arith.constant 0 : index
    %187 = vector.load %arg11[%c0_82, %c0_83] : memref<32x32xbf16, #tpu.memory_space<vmem>>, vector<32x32xbf16>
    %cst_84 = arith.constant dense<0.000000e+00> : vector<8x32xf32>
    %188 = tpu.matmul %186, %187, %cst_84 {dimension_numbers = #tpu.dot_dimension_numbers<[1], [0], [0], [1], [0, 0, 1, 1], [], []>} : vector<8x32xbf16>, vector<32x32xbf16>, vector<8x32xf32> -> vector<8x32xf32>
    %c0_85 = arith.constant 0 : index
    %c0_86 = arith.constant 0 : index
    %189 = vector.load %arg12[%c0_85, %c0_86] : memref<1x32xf32, #tpu.memory_space<vmem>>, vector<1x32xf32>
    %190 = vector.broadcast %189 : vector<1x32xf32> to vector<8x32xf32>
    %191 = arith.addf %188, %190 : vector<8x32xf32>
    %cst_87 = arith.constant 5.000000e-01 : f32
    %192 = vector.broadcast %cst_87 : f32 to vector<8x32xf32>
    %193 = arith.mulf %192, %191 : vector<8x32xf32>
    %cst_88 = arith.constant 0.707106769 : f32
    %194 = vector.broadcast %cst_88 : f32 to vector<8x32xf32>
    %195 = arith.mulf %191, %194 : vector<8x32xf32>
    %196 = math.erf %195 : vector<8x32xf32>
    %cst_89 = arith.constant 1.000000e+00 : f32
    %197 = vector.broadcast %cst_89 : f32 to vector<8x32xf32>
    %198 = arith.addf %197, %196 : vector<8x32xf32>
    %199 = arith.mulf %193, %198 : vector<8x32xf32>
    %200 = arith.truncf %199 : vector<8x32xf32> to vector<8x32xbf16>
    %c0_90 = arith.constant 0 : index
    %c0_91 = arith.constant 0 : index
    %201 = vector.load %arg13[%c0_90, %c0_91] : memref<32x32xbf16, #tpu.memory_space<vmem>>, vector<32x32xbf16>
    %cst_92 = arith.constant dense<0.000000e+00> : vector<8x32xf32>
    %202 = tpu.matmul %200, %201, %cst_92 {dimension_numbers = #tpu.dot_dimension_numbers<[1], [0], [0], [1], [0, 0, 1, 1], [], []>} : vector<8x32xbf16>, vector<32x32xbf16>, vector<8x32xf32> -> vector<8x32xf32>
    %c0_93 = arith.constant 0 : index
    %c0_94 = arith.constant 0 : index
    %203 = vector.load %arg14[%c0_93, %c0_94] : memref<1x32xf32, #tpu.memory_space<vmem>>, vector<1x32xf32>
    %204 = vector.broadcast %203 : vector<1x32xf32> to vector<8x32xf32>
    %205 = arith.addf %202, %204 : vector<8x32xf32>
    %206 = arith.addf %205, %185 : vector<8x32xf32>
    %cst_95 = arith.constant dense<0.000000e+00> : vector<8xf32>
    %207 = vector.multi_reduction <add>, %206, %cst_95 [1] : vector<8x32xf32> to vector<8xf32>
    %208 = vector.shape_cast %207 : vector<8xf32> to vector<8x1xf32>
    %cst_96 = arith.constant 3.200000e+01 : f32
    %209 = vector.broadcast %cst_96 : f32 to vector<8x1xf32>
    %210 = arith.divf %208, %209 : vector<8x1xf32>
    %211 = vector.broadcast %210 : vector<8x1xf32> to vector<8x32xf32>
    %212 = arith.subf %206, %211 : vector<8x32xf32>
    %213 = arith.mulf %212, %212 : vector<8x32xf32>
    %cst_97 = arith.constant dense<0.000000e+00> : vector<8xf32>
    %214 = vector.multi_reduction <add>, %213, %cst_97 [1] : vector<8x32xf32> to vector<8xf32>
    %215 = vector.shape_cast %214 : vector<8xf32> to vector<8x1xf32>
    %cst_98 = arith.constant 3.200000e+01 : f32
    %216 = vector.broadcast %cst_98 : f32 to vector<8x1xf32>
    %217 = arith.divf %215, %216 : vector<8x1xf32>
    %218 = vector.broadcast %210 : vector<8x1xf32> to vector<8x32xf32>
    %219 = arith.subf %206, %218 : vector<8x32xf32>
    %cst_99 = arith.constant 9.99999974E-6 : f32
    %220 = vector.broadcast %cst_99 : f32 to vector<8x1xf32>
    %221 = arith.addf %217, %220 : vector<8x1xf32>
    %222 = math.rsqrt %221 : vector<8x1xf32>
    %223 = vector.broadcast %222 : vector<8x1xf32> to vector<8x32xf32>
    %224 = arith.mulf %219, %223 : vector<8x32xf32>
    %c0_100 = arith.constant 0 : index
    %c0_101 = arith.constant 0 : index
    %225 = vector.load %arg17[%c0_100, %c0_101] : memref<1x32xf32, #tpu.memory_space<vmem>>, vector<1x32xf32>
    %226 = vector.broadcast %225 : vector<1x32xf32> to vector<8x32xf32>
    %227 = arith.mulf %224, %226 : vector<8x32xf32>
    %c0_102 = arith.constant 0 : index
    %c0_103 = arith.constant 0 : index
    %228 = vector.load %arg18[%c0_102, %c0_103] : memref<1x32xf32, #tpu.memory_space<vmem>>, vector<1x32xf32>
    %229 = vector.broadcast %228 : vector<1x32xf32> to vector<8x32xf32>
    %230 = arith.addf %227, %229 : vector<8x32xf32>
    %c0_104 = arith.constant 0 : index
    %c0_105 = arith.constant 0 : index
    %c0_106 = arith.constant 0 : index
    %231 = vector.load %arg19[%c0_104, %c0_105, %c0_106] : memref<1x8x32xf32, #tpu.memory_space<vmem>>, vector<1x8x32xf32>
    %232 = vector.shape_cast %231 : vector<1x8x32xf32> to vector<8x32xf32>
    %233 = vector.shape_cast %230 : vector<8x32xf32> to vector<1x8x32xf32>
    tpu.vector_store %arg19[%c0_104, %c0_105, %c0_106], %233 {strides = array<i32>} : memref<1x8x32xf32, #tpu.memory_space<vmem>>, vector<1x8x32xf32>,
    return
  }
  func.func @transform_0(%arg0: i32, %arg1: i32) -> (i32, i32, i32) {
    %c0_i32 = arith.constant 0 : i32
    %c0_i32_0 = arith.constant 0 : i32
    %c0_i32_1 = arith.constant 0 : i32
    return %arg0, %c0_i32, %c0_i32_0 : i32, i32, i32
  }
  func.func @transform_1(%arg0: i32, %arg1: i32) -> (i32, i32, i32) {
    %c0_i32 = arith.constant 0 : i32
    %c0_i32_0 = arith.constant 0 : i32
    %c0_i32_1 = arith.constant 0 : i32
    %c0_i32_2 = arith.constant 0 : i32
    return %c0_i32, %c0_i32_0, %c0_i32_1 : i32, i32, i32
  }
  func.func @transform_2(%arg0: i32, %arg1: i32) -> (i32, i32, i32) {
    %c0_i32 = arith.constant 0 : i32
    %c0_i32_0 = arith.constant 0 : i32
    %c0_i32_1 = arith.constant 0 : i32
    %c0_i32_2 = arith.constant 0 : i32
    return %c0_i32, %c0_i32_0, %c0_i32_1 : i32, i32, i32
  }
  func.func @transform_3(%arg0: i32, %arg1: i32) -> (i32, i32, i32) {
    %c0_i32 = arith.constant 0 : i32
    %c0_i32_0 = arith.constant 0 : i32
    %c0_i32_1 = arith.constant 0 : i32
    %c0_i32_2 = arith.constant 0 : i32
    return %c0_i32, %c0_i32_0, %c0_i32_1 : i32, i32, i32
  }
  func.func @transform_4(%arg0: i32, %arg1: i32) -> (i32, i32, i32) {
    %c0_i32 = arith.constant 0 : i32
    %c0_i32_0 = arith.constant 0 : i32
    %c0_i32_1 = arith.constant 0 : i32
    %c0_i32_2 = arith.constant 0 : i32
    return %c0_i32, %c0_i32_0, %c0_i32_1 : i32, i32, i32
  }
  func.func @transform_5(%arg0: i32, %arg1: i32) -> (i32, i32, i32) {
    %c0_i32 = arith.constant 0 : i32
    %c0_i32_0 = arith.constant 0 : i32
    %c0_i32_1 = arith.constant 0 : i32
    %c0_i32_2 = arith.constant 0 : i32
    return %c0_i32, %c0_i32_0, %c0_i32_1 : i32, i32, i32
  }
  func.func @transform_6(%arg0: i32, %arg1: i32) -> (i32, i32, i32) {
    %c0_i32 = arith.constant 0 : i32
    %c0_i32_0 = arith.constant 0 : i32
    %c0_i32_1 = arith.constant 0 : i32
    %c0_i32_2 = arith.constant 0 : i32
    return %c0_i32, %c0_i32_0, %c0_i32_1 : i32, i32, i32
  }
  func.func @transform_7(%arg0: i32, %arg1: i32) -> (i32, i32, i32) {
    %c0_i32 = arith.constant 0 : i32
    %c0_i32_0 = arith.constant 0 : i32
    %c0_i32_1 = arith.constant 0 : i32
    %c0_i32_2 = arith.constant 0 : i32
    return %c0_i32, %c0_i32_0, %c0_i32_1 : i32, i32, i32
  }
  func.func @transform_8(%arg0: i32, %arg1: i32) -> (i32, i32) {
    %c0_i32 = arith.constant 0 : i32
    %c0_i32_0 = arith.constant 0 : i32
    %c0_i32_1 = arith.constant 0 : i32
    return %c0_i32, %c0_i32_0 : i32, i32
  }
  func.func @transform_9(%arg0: i32, %arg1: i32) -> (i32, i32) {
    %c0_i32 = arith.constant 0 : i32
    %c0_i32_0 = arith.constant 0 : i32
    %c0_i32_1 = arith.constant 0 : i32
    return %c0_i32, %c0_i32_0 : i32, i32
  }
  func.func @transform_10(%arg0: i32, %arg1: i32) -> (i32, i32) {
    %c0_i32 = arith.constant 0 : i32
    %c0_i32_0 = arith.constant 0 : i32
    %c0_i32_1 = arith.constant 0 : i32
    return %c0_i32, %c0_i32_0 : i32, i32
  }
  func.func @transform_11(%arg0: i32, %arg1: i32) -> (i32, i32) {
    %c0_i32 = arith.constant 0 : i32
    %c0_i32_0 = arith.constant 0 : i32
    %c0_i32_1 = arith.constant 0 : i32
    return %c0_i32, %c0_i32_0 : i32, i32
  }
  func.func @transform_12(%arg0: i32, %arg1: i32) -> (i32, i32) {
    %c0_i32 = arith.constant 0 : i32
    %c0_i32_0 = arith.constant 0 : i32
    %c0_i32_1 = arith.constant 0 : i32
    return %c0_i32, %c0_i32_0 : i32, i32
  }
  func.func @transform_13(%arg0: i32, %arg1: i32) -> (i32, i32) {
    %c0_i32 = arith.constant 0 : i32
    %c0_i32_0 = arith.constant 0 : i32
    %c0_i32_1 = arith.constant 0 : i32
    return %c0_i32, %c0_i32_0 : i32, i32
  }
  func.func @transform_14(%arg0: i32, %arg1: i32) -> (i32, i32) {
    %c0_i32 = arith.constant 0 : i32
    %c0_i32_0 = arith.constant 0 : i32
    %c0_i32_1 = arith.constant 0 : i32
    return %c0_i32, %c0_i32_0 : i32, i32
  }
  func.func @transform_15(%arg0: i32, %arg1: i32) -> (i32, i32) {
    %c0_i32 = arith.constant 0 : i32
    %c0_i32_0 = arith.constant 0 : i32
    %c0_i32_1 = arith.constant 0 : i32
    return %c0_i32, %c0_i32_0 : i32, i32
  }
  func.func @transform_16(%arg0: i32, %arg1: i32) -> (i32, i32) {
    %c0_i32 = arith.constant 0 : i32
    %c0_i32_0 = arith.constant 0 : i32
    %c0_i32_1 = arith.constant 0 : i32
    return %c0_i32, %c0_i32_0 : i32, i32
  }
  func.func @transform_17(%arg0: i32, %arg1: i32) -> (i32, i32, i32) {
    %c0_i32 = arith.constant 0 : i32
    %c0_i32_0 = arith.constant 0 : i32
    return %arg0, %arg1, %c0_i32 : i32, i32, i32
  }
}

</mosaic_0001>

<llo_original>
// kernel: transformer_encoder_pallas.2
$region0: #{transformer_encoder_pallas.2}
  #allocation0 [shape = 'u32[]', space=smem, size = 0x4, offset = 0x4, fixed_abs, tag = 'smem constant byte address 0x4 - core index']
  #allocation1 [shape = 'u32[72,128]{1,0:T(1,128)}', space=vmem, size = 0x9000, scoped, tag = 'internal scratch']
  #allocation2 [shape = 'bf16[4,8,8]{2,1,0:T(8,128)(2,1)}', space=vmem, size = 0x2000, scoped, tag = 'scratch operand']
  #allocation3 [shape = 'bf16[4,8,8]{2,1,0:T(8,128)(2,1)}', space=vmem, size = 0x2000, scoped, tag = 'scratch operand']
  %s0 = inlined_call_operand.vmem [shape: f32[2,8,32], index: 0, kind: input, shape index: {}]
  %s1 = inlined_call_operand.vmem [shape: bf16[4,32,8], index: 1, kind: input, shape index: {}]
  %s2 = inlined_call_operand.vmem [shape: f32[4,1,8], index: 2, kind: input, shape index: {}]
  %s3 = inlined_call_operand.vmem [shape: bf16[4,32,8], index: 3, kind: input, shape index: {}]
  %s4 = inlined_call_operand.vmem [shape: f32[4,1,8], index: 4, kind: input, shape index: {}]
  %s5 = inlined_call_operand.vmem [shape: bf16[4,32,8], index: 5, kind: input, shape index: {}]
  %s6 = inlined_call_operand.vmem [shape: f32[4,1,8], index: 6, kind: input, shape index: {}]
  %s7 = inlined_call_operand.vmem [shape: bf16[4,8,32], index: 7, kind: input, shape index: {}]
  %s8 = inlined_call_operand.vmem [shape: f32[1,32], index: 8, kind: input, shape index: {}]
  %s9 = inlined_call_operand.vmem [shape: bf16[32,32], index: 9, kind: input, shape index: {}]
  %s10 = inlined_call_operand.vmem [shape: f32[1,32], index: 10, kind: input, shape index: {}]
  %s11 = inlined_call_operand.vmem [shape: bf16[32,32], index: 11, kind: input, shape index: {}]
  %s12 = inlined_call_operand.vmem [shape: f32[1,32], index: 12, kind: input, shape index: {}]
  %s13 = inlined_call_operand.vmem [shape: f32[1,32], index: 13, kind: input, shape index: {}]
  %s14 = inlined_call_operand.vmem [shape: f32[1,32], index: 14, kind: input, shape index: {}]
  %s15 = inlined_call_operand.vmem [shape: f32[1,32], index: 15, kind: input, shape index: {}]
  %s16 = inlined_call_operand.vmem [shape: f32[1,32], index: 16, kind: input, shape index: {}]
  %s17 = inlined_call_operand.vmem [shape: f32[2,8,32], index: 17, kind: output, shape index: {}]
  %s18 = sld [smem:[#allocation0]]
  $region105: #{transformer_encoder_pallas.2} parent=0
    _
  %s20 = ssub.s32 1, %s18
  %s21 = scalar_select 0, %s20, %s18
  loop: start=0, step=1, limit=4
  $region2: #{transformer_encoder_pallas.2} parent=0 // loop_pre_header
    _
  $region3: #{transformer_encoder_pallas.2} parent=0 // loop_header
    %s23 = sphi 0, %s27
    %p24 = scmp.ge.s32.totalorder %s23, 4
    %s30 = sphi 0, %s42
    %s31 = sphi 0, %s38
    %s32 = sphi 0, %s30
    %s33 = sphi 0, %s31
    %s34 = sphi 0, %s32
    %s35 = sphi 0, %s33
    %s45 = sphi 0, %s47
    %s48 = sphi 0, %s45
    %s49 = sphi 0, %s48
    %s65 = sphi 0, %s49
    %s69 = sphi 0, %s69
    %s71 = sphi 0, %s69
    %s72 = sphi 0, %s71
    %s86 = sphi 0, %s72
    %s90 = sphi 0, %s90
    %s92 = sphi 0, %s90
    %s93 = sphi 0, %s92
    %s107 = sphi 0, %s93
    %s111 = sphi 0, %s111
    %s113 = sphi 0, %s111
    %s114 = sphi 0, %s113
    %s128 = sphi 0, %s114
    %s132 = sphi 0, %s132
    %s134 = sphi 0, %s132
    %s135 = sphi 0, %s134
    %s149 = sphi 0, %s135
    %s153 = sphi 0, %s153
    %s155 = sphi 0, %s153
    %s156 = sphi 0, %s155
    %s170 = sphi 0, %s156
    %s174 = sphi 0, %s174
    %s176 = sphi 0, %s174
    %s177 = sphi 0, %s176
    %s191 = sphi 0, %s177
    %s195 = sphi 0, %s195
    %s197 = sphi 0, %s195
    %s198 = sphi 0, %s197
    %s212 = sphi 0, %s198
    %s216 = sphi 0, %s216
    %s218 = sphi 0, %s216
    %s219 = sphi 0, %s218
    %s233 = sphi 0, %s219
    %s237 = sphi 0, %s237
    %s239 = sphi 0, %s237
    %s240 = sphi 0, %s239
    %s254 = sphi 0, %s240
    %s258 = sphi 0, %s258
    %s260 = sphi 0, %s258
    %s261 = sphi 0, %s260
    %s275 = sphi 0, %s261
    %s279 = sphi 0, %s279
    %s281 = sphi 0, %s279
    %s282 = sphi 0, %s281
    %s296 = sphi 0, %s282
    %s300 = sphi 0, %s300
    %s302 = sphi 0, %s300
    %s303 = sphi 0, %s302
    %s317 = sphi 0, %s303
    %s321 = sphi 0, %s321
    %s323 = sphi 0, %s321
    %s324 = sphi 0, %s323
    %s338 = sphi 0, %s324
    %s342 = sphi 0, %s342
    %s344 = sphi 0, %s342
    %s345 = sphi 0, %s344
    %s359 = sphi 0, %s345
    %s363 = sphi 0, %s363
    %s365 = sphi 0, %s363
    %s366 = sphi 0, %s365
    %s380 = sphi 0, %s366
    %s384 = sphi 0, %s384
    %s386 = sphi 0, %s384
    %s387 = sphi 0, %s386
    %s401 = sphi 0, %s387
    %s409 = sphi 0, %s411
    %s412 = sphi 0, %s409
    %s413 = sphi 0, %s412
    %s429 = sphi 0, %s413
  $region4: #{transformer_encoder_pallas.2} parent=0 // loop_header_branch
    %26 = sbr.rel (%p24) target = $region8
  $region5: #{transformer_encoder_pallas.2} parent=0 // loop_body
    %s28 = ssub.s32 %s23, 1
    %s29 = ssub.s32 %s23, 2
    %s36 = sadd.s32 1, %s31
    %p37 = scmp.ge.s32.totalorder %s36, 1
    %s38 = scalar_select %p37, 0, %s36
    %s39 = sadd.s32 1, %s30
    %s40 = scalar_select %p37, %s39, %s30
    %p41 = scmp.ge.s32.totalorder %s40, 2
    %s42 = scalar_select %p41, 0, %s40
    %s43 = ssub.s32 %s30, %s42
    %p44 = scmp.eq.s32.totalorder %s43, 0
    %s46 = sadd.s32 %s45, 1
    %s47 = scalar_select %p44, %s45, %s46
    %p50 = pneg %p44
    %p51 = scmp.eq.s32.totalorder %s23, 1
    %p52 = por %p50, %p51
    %p53 = scmp.ne.s32.totalorder %s45, %s48
    %p54 = scmp.eq.s32.totalorder %s23, 0
    %p55 = por %p53, %p54
    %p56 = scmp.ne.s32.totalorder %s45, %s48
    %p57 = scmp.eq.s32.totalorder %s28, 1
    %p58 = por %p56, %p57
    %p59 = scmp.ne.s32.totalorder %s48, %s49
    %p60 = scmp.eq.s32.totalorder %s28, 0
    %p61 = por %p59, %p60
    %p62 = scmp.ne.s32.totalorder %s48, %s49
    %p63 = scmp.eq.s32.totalorder %s29, 1
    %p64 = por %p62, %p63
    %p66 = scmp.ne.s32.totalorder %s49, %s65
    %p67 = scmp.eq.s32.totalorder %s29, 0
    %p68 = por %p66, %p67
    %s70 = sadd.s32 %s69, 1
    %p73 = scmp.eq.s32.totalorder %s23, 1
    %p74 = scmp.ne.s32.totalorder %s69, %s71
    %p75 = scmp.eq.s32.totalorder %s23, 0
    %p76 = por %p74, %p75
    %p77 = scmp.ne.s32.totalorder %s69, %s71
    %p78 = scmp.eq.s32.totalorder %s28, 1
    %p79 = por %p77, %p78
    %p80 = scmp.ne.s32.totalorder %s71, %s72
    %p81 = scmp.eq.s32.totalorder %s28, 0
    %p82 = por %p80, %p81
    %p83 = scmp.ne.s32.totalorder %s71, %s72
    %p84 = scmp.eq.s32.totalorder %s29, 1
    %p85 = por %p83, %p84
    %p87 = scmp.ne.s32.totalorder %s72, %s86
    %p88 = scmp.eq.s32.totalorder %s29, 0
    %p89 = por %p87, %p88
    %s91 = sadd.s32 %s90, 1
    %p94 = scmp.eq.s32.totalorder %s23, 1
    %p95 = scmp.ne.s32.totalorder %s90, %s92
    %p96 = scmp.eq.s32.totalorder %s23, 0
    %p97 = por %p95, %p96
    %p98 = scmp.ne.s32.totalorder %s90, %s92
    %p99 = scmp.eq.s32.totalorder %s28, 1
    %p100 = por %p98, %p99
    %p101 = scmp.ne.s32.totalorder %s92, %s93
    %p102 = scmp.eq.s32.totalorder %s28, 0
    %p103 = por %p101, %p102
    %p104 = scmp.ne.s32.totalorder %s92, %s93
    %p105 = scmp.eq.s32.totalorder %s29, 1
    %p106 = por %p104, %p105
    %p108 = scmp.ne.s32.totalorder %s93, %s107
    %p109 = scmp.eq.s32.totalorder %s29, 0
    %p110 = por %p108, %p109
    %s112 = sadd.s32 %s111, 1
    %p115 = scmp.eq.s32.totalorder %s23, 1
    %p116 = scmp.ne.s32.totalorder %s111, %s113
    %p117 = scmp.eq.s32.totalorder %s23, 0
    %p118 = por %p116, %p117
    %p119 = scmp.ne.s32.totalorder %s111, %s113
    %p120 = scmp.eq.s32.totalorder %s28, 1
    %p121 = por %p119, %p120
    %p122 = scmp.ne.s32.totalorder %s113, %s114
    %p123 = scmp.eq.s32.totalorder %s28, 0
    %p124 = por %p122, %p123
    %p125 = scmp.ne.s32.totalorder %s113, %s114
    %p126 = scmp.eq.s32.totalorder %s29, 1
    %p127 = por %p125, %p126
    %p129 = scmp.ne.s32.totalorder %s114, %s128
    %p130 = scmp.eq.s32.totalorder %s29, 0
    %p131 = por %p129, %p130
    %s133 = sadd.s32 %s132, 1
    %p136 = scmp.eq.s32.totalorder %s23, 1
    %p137 = scmp.ne.s32.totalorder %s132, %s134
    %p138 = scmp.eq.s32.totalorder %s23, 0
    %p139 = por %p137, %p138
    %p140 = scmp.ne.s32.totalorder %s132, %s134
    %p141 = scmp.eq.s32.totalorder %s28, 1
    %p142 = por %p140, %p141
    %p143 = scmp.ne.s32.totalorder %s134, %s135
    %p144 = scmp.eq.s32.totalorder %s28, 0
    %p145 = por %p143, %p144
    %p146 = scmp.ne.s32.totalorder %s134, %s135
    %p147 = scmp.eq.s32.totalorder %s29, 1
    %p148 = por %p146, %p147
    %p150 = scmp.ne.s32.totalorder %s135, %s149
    %p151 = scmp.eq.s32.totalorder %s29, 0
    %p152 = por %p150, %p151
    %s154 = sadd.s32 %s153, 1
    %p157 = scmp.eq.s32.totalorder %s23, 1
    %p158 = scmp.ne.s32.totalorder %s153, %s155
    %p159 = scmp.eq.s32.totalorder %s23, 0
    %p160 = por %p158, %p159
    %p161 = scmp.ne.s32.totalorder %s153, %s155
    %p162 = scmp.eq.s32.totalorder %s28, 1
    %p163 = por %p161, %p162
    %p164 = scmp.ne.s32.totalorder %s155, %s156
    %p165 = scmp.eq.s32.totalorder %s28, 0
    %p166 = por %p164, %p165
    %p167 = scmp.ne.s32.totalorder %s155, %s156
    %p168 = scmp.eq.s32.totalorder %s29, 1
    %p169 = por %p167, %p168
    %p171 = scmp.ne.s32.totalorder %s156, %s170
    %p172 = scmp.eq.s32.totalorder %s29, 0
    %p173 = por %p171, %p172
    %s175 = sadd.s32 %s174, 1
    %p178 = scmp.eq.s32.totalorder %s23, 1
    %p179 = scmp.ne.s32.totalorder %s174, %s176
    %p180 = scmp.eq.s32.totalorder %s23, 0
    %p181 = por %p179, %p180
    %p182 = scmp.ne.s32.totalorder %s174, %s176
    %p183 = scmp.eq.s32.totalorder %s28, 1
    %p184 = por %p182, %p183
    %p185 = scmp.ne.s32.totalorder %s176, %s177
    %p186 = scmp.eq.s32.totalorder %s28, 0
    %p187 = por %p185, %p186
    %p188 = scmp.ne.s32.totalorder %s176, %s177
    %p189 = scmp.eq.s32.totalorder %s29, 1
    %p190 = por %p188, %p189
    %p192 = scmp.ne.s32.totalorder %s177, %s191
    %p193 = scmp.eq.s32.totalorder %s29, 0
    %p194 = por %p192, %p193
    %s196 = sadd.s32 %s195, 1
    %p199 = scmp.eq.s32.totalorder %s23, 1
    %p200 = scmp.ne.s32.totalorder %s195, %s197
    %p201 = scmp.eq.s32.totalorder %s23, 0
    %p202 = por %p200, %p201
    %p203 = scmp.ne.s32.totalorder %s195, %s197
    %p204 = scmp.eq.s32.totalorder %s28, 1
    %p205 = por %p203, %p204
    %p206 = scmp.ne.s32.totalorder %s197, %s198
    %p207 = scmp.eq.s32.totalorder %s28, 0
    %p208 = por %p206, %p207
    %p209 = scmp.ne.s32.totalorder %s197, %s198
    %p210 = scmp.eq.s32.totalorder %s29, 1
    %p211 = por %p209, %p210
    %p213 = scmp.ne.s32.totalorder %s198, %s212
    %p214 = scmp.eq.s32.totalorder %s29, 0
    %p215 = por %p213, %p214
    %s217 = sadd.s32 %s216, 1
    %p220 = scmp.eq.s32.totalorder %s23, 1
    %p221 = scmp.ne.s32.totalorder %s216, %s218
    %p222 = scmp.eq.s32.totalorder %s23, 0
    %p223 = por %p221, %p222
    %p224 = scmp.ne.s32.totalorder %s216, %s218
    %p225 = scmp.eq.s32.totalorder %s28, 1
    %p226 = por %p224, %p225
    %p227 = scmp.ne.s32.totalorder %s218, %s219
    %p228 = scmp.eq.s32.totalorder %s28, 0
    %p229 = por %p227, %p228
    %p230 = scmp.ne.s32.totalorder %s218, %s219
    %p231 = scmp.eq.s32.totalorder %s29, 1
    %p232 = por %p230, %p231
    %p234 = scmp.ne.s32.totalorder %s219, %s233
    %p235 = scmp.eq.s32.totalorder %s29, 0
    %p236 = por %p234, %p235
    %s238 = sadd.s32 %s237, 1
    %p241 = scmp.eq.s32.totalorder %s23, 1
    %p242 = scmp.ne.s32.totalorder %s237, %s239
    %p243 = scmp.eq.s32.totalorder %s23, 0
    %p244 = por %p242, %p243
    %p245 = scmp.ne.s32.totalorder %s237, %s239
    %p246 = scmp.eq.s32.totalorder %s28, 1
    %p247 = por %p245, %p246
    %p248 = scmp.ne.s32.totalorder %s239, %s240
    %p249 = scmp.eq.s32.totalorder %s28, 0
    %p250 = por %p248, %p249
    %p251 = scmp.ne.s32.totalorder %s239, %s240
    %p252 = scmp.eq.s32.totalorder %s29, 1
    %p253 = por %p251, %p252
    %p255 = scmp.ne.s32.totalorder %s240, %s254
    %p256 = scmp.eq.s32.totalorder %s29, 0
    %p257 = por %p255, %p256
    %s259 = sadd.s32 %s258, 1
    %p262 = scmp.eq.s32.totalorder %s23, 1
    %p263 = scmp.ne.s32.totalorder %s258, %s260
    %p264 = scmp.eq.s32.totalorder %s23, 0
    %p265 = por %p263, %p264
    %p266 = scmp.ne.s32.totalorder %s258, %s260
    %p267 = scmp.eq.s32.totalorder %s28, 1
    %p268 = por %p266, %p267
    %p269 = scmp.ne.s32.totalorder %s260, %s261
    %p270 = scmp.eq.s32.totalorder %s28, 0
    %p271 = por %p269, %p270
    %p272 = scmp.ne.s32.totalorder %s260, %s261
    %p273 = scmp.eq.s32.totalorder %s29, 1
    %p274 = por %p272, %p273
    %p276 = scmp.ne.s32.totalorder %s261, %s275
    %p277 = scmp.eq.s32.totalorder %s29, 0
    %p278 = por %p276, %p277
    %s280 = sadd.s32 %s279, 1
    %p283 = scmp.eq.s32.totalorder %s23, 1
    %p284 = scmp.ne.s32.totalorder %s279, %s281
    %p285 = scmp.eq.s32.totalorder %s23, 0
    %p286 = por %p284, %p285
    %p287 = scmp.ne.s32.totalorder %s279, %s281
    %p288 = scmp.eq.s32.totalorder %s28, 1
    %p289 = por %p287, %p288
    %p290 = scmp.ne.s32.totalorder %s281, %s282
    %p291 = scmp.eq.s32.totalorder %s28, 0
    %p292 = por %p290, %p291
    %p293 = scmp.ne.s32.totalorder %s281, %s282
    %p294 = scmp.eq.s32.totalorder %s29, 1
    %p295 = por %p293, %p294
    %p297 = scmp.ne.s32.totalorder %s282, %s296
    %p298 = scmp.eq.s32.totalorder %s29, 0
    %p299 = por %p297, %p298
    %s301 = sadd.s32 %s300, 1
    %p304 = scmp.eq.s32.totalorder %s23, 1
    %p305 = scmp.ne.s32.totalorder %s300, %s302
    %p306 = scmp.eq.s32.totalorder %s23, 0
    %p307 = por %p305, %p306
    %p308 = scmp.ne.s32.totalorder %s300, %s302
    %p309 = scmp.eq.s32.totalorder %s28, 1
    %p310 = por %p308, %p309
    %p311 = scmp.ne.s32.totalorder %s302, %s303
    %p312 = scmp.eq.s32.totalorder %s28, 0
    %p313 = por %p311, %p312
    %p314 = scmp.ne.s32.totalorder %s302, %s303
    %p315 = scmp.eq.s32.totalorder %s29, 1
    %p316 = por %p314, %p315
    %p318 = scmp.ne.s32.totalorder %s303, %s317
    %p319 = scmp.eq.s32.totalorder %s29, 0
    %p320 = por %p318, %p319
    %s322 = sadd.s32 %s321, 1
    %p325 = scmp.eq.s32.totalorder %s23, 1
    %p326 = scmp.ne.s32.totalorder %s321, %s323
    %p327 = scmp.eq.s32.totalorder %s23, 0
    %p328 = por %p326, %p327
    %p329 = scmp.ne.s32.totalorder %s321, %s323
    %p330 = scmp.eq.s32.totalorder %s28, 1
    %p331 = por %p329, %p330
    %p332 = scmp.ne.s32.totalorder %s323, %s324
    %p333 = scmp.eq.s32.totalorder %s28, 0
    %p334 = por %p332, %p333
    %p335 = scmp.ne.s32.totalorder %s323, %s324
    %p336 = scmp.eq.s32.totalorder %s29, 1
    %p337 = por %p335, %p336
    %p339 = scmp.ne.s32.totalorder %s324, %s338
    %p340 = scmp.eq.s32.totalorder %s29, 0
    %p341 = por %p339, %p340
    %s343 = sadd.s32 %s342, 1
    %p346 = scmp.eq.s32.totalorder %s23, 1
    %p347 = scmp.ne.s32.totalorder %s342, %s344
    %p348 = scmp.eq.s32.totalorder %s23, 0
    %p349 = por %p347, %p348
    %p350 = scmp.ne.s32.totalorder %s342, %s344
    %p351 = scmp.eq.s32.totalorder %s28, 1
    %p352 = por %p350, %p351
    %p353 = scmp.ne.s32.totalorder %s344, %s345
    %p354 = scmp.eq.s32.totalorder %s28, 0
    %p355 = por %p353, %p354
    %p356 = scmp.ne.s32.totalorder %s344, %s345
    %p357 = scmp.eq.s32.totalorder %s29, 1
    %p358 = por %p356, %p357
    %p360 = scmp.ne.s32.totalorder %s345, %s359
    %p361 = scmp.eq.s32.totalorder %s29, 0
    %p362 = por %p360, %p361
    %s364 = sadd.s32 %s363, 1
    %p367 = scmp.eq.s32.totalorder %s23, 1
    %p368 = scmp.ne.s32.totalorder %s363, %s365
    %p369 = scmp.eq.s32.totalorder %s23, 0
    %p370 = por %p368, %p369
    %p371 = scmp.ne.s32.totalorder %s363, %s365
    %p372 = scmp.eq.s32.totalorder %s28, 1
    %p373 = por %p371, %p372
    %p374 = scmp.ne.s32.totalorder %s365, %s366
    %p375 = scmp.eq.s32.totalorder %s28, 0
    %p376 = por %p374, %p375
    %p377 = scmp.ne.s32.totalorder %s365, %s366
    %p378 = scmp.eq.s32.totalorder %s29, 1
    %p379 = por %p377, %p378
    %p381 = scmp.ne.s32.totalorder %s366, %s380
    %p382 = scmp.eq.s32.totalorder %s29, 0
    %p383 = por %p381, %p382
    %s385 = sadd.s32 %s384, 1
    %p388 = scmp.eq.s32.totalorder %s23, 1
    %p389 = scmp.ne.s32.totalorder %s384, %s386
    %p390 = scmp.eq.s32.totalorder %s23, 0
    %p391 = por %p389, %p390
    %p392 = scmp.ne.s32.totalorder %s384, %s386
    %p393 = scmp.eq.s32.totalorder %s28, 1
    %p394 = por %p392, %p393
    %p395 = scmp.ne.s32.totalorder %s386, %s387
    %p396 = scmp.eq.s32.totalorder %s28, 0
    %p397 = por %p395, %p396
    %p398 = scmp.ne.s32.totalorder %s386, %s387
    %p399 = scmp.eq.s32.totalorder %s29, 1
    %p400 = por %p398, %p399
    %p402 = scmp.ne.s32.totalorder %s387, %s401
    %p403 = scmp.eq.s32.totalorder %s29, 0
    %p404 = por %p402, %p403
    %s405 = ssub.s32 %s30, %s42
    %s406 = ssub.s32 %s31, %s38
    %s407 = sor.u32 %s405, %s406
    %p408 = scmp.eq.s32.totalorder %s407, 0
    %s410 = sadd.s32 %s409, 1
    %s411 = scalar_select %p408, %s409, %s410
    %p414 = pneg %p408
    %p415 = scmp.eq.s32.totalorder %s23, 1
    %p416 = por %p414, %p415
    %p417 = scmp.ne.s32.totalorder %s409, %s412
    %p418 = scmp.eq.s32.totalorder %s23, 0
    %p419 = por %p417, %p418
    %p420 = scmp.ne.s32.totalorder %s409, %s412
    %p421 = scmp.eq.s32.totalorder %s28, 1
    %p422 = por %p420, %p421
    %p423 = scmp.ne.s32.totalorder %s412, %s413
    %p424 = scmp.eq.s32.totalorder %s28, 0
    %p425 = por %p423, %p424
    %p426 = scmp.ne.s32.totalorder %s412, %s413
    %p427 = scmp.eq.s32.totalorder %s29, 1
    %p428 = por %p426, %p427
    %p430 = scmp.ne.s32.totalorder %s413, %s429
    %p431 = scmp.eq.s32.totalorder %s29, 0
    %p432 = por %p430, %p431
    %p433 = scmp.le.s32.totalorder 1, %s23
    %p434 = scmp.lt.s32.totalorder %s23, 3
    %p435 = pnand %p433, %p434
    %p436 = pneg %p435
    // Predicated region
    $region9: #{transformer_encoder_pallas.2} parent=5 // pred_check
      _
    $region10: #{transformer_encoder_pallas.2} parent=5 // pred_check_branch
      %438 = sbr.rel (%p435) target = $region12
    $region11: #{transformer_encoder_pallas.2} parent=5 // pred_region
      %s439 = ssub.s32 %s23, 1
      // Predicated region
      $region13: #{transformer_encoder_pallas.2} parent=11 // pred_check
        %p440 = pneg %p82
      $region14: #{transformer_encoder_pallas.2} parent=11 // pred_check_branch
        %442 = sbr.rel (%p440) target = $region16
      $region15: #{transformer_encoder_pallas.2} parent=11 // pred_region
        _
      $region16: #{transformer_encoder_pallas.2} parent=11 // pred_fallthru
        _
      // Predicated region
      $region17: #{transformer_encoder_pallas.2} parent=11 // pred_check
        %p443 = pneg %p103
      $region18: #{transformer_encoder_pallas.2} parent=11 // pred_check_branch
        %445 = sbr.rel (%p443) target = $region20
      $region19: #{transformer_encoder_pallas.2} parent=11 // pred_region
        _
      $region20: #{transformer_encoder_pallas.2} parent=11 // pred_fallthru
        _
      // Predicated region
      $region21: #{transformer_encoder_pallas.2} parent=11 // pred_check
        %p446 = pneg %p124
      $region22: #{transformer_encoder_pallas.2} parent=11 // pred_check_branch
        %448 = sbr.rel (%p446) target = $region24
      $region23: #{transformer_encoder_pallas.2} parent=11 // pred_region
        _
      $region24: #{transformer_encoder_pallas.2} parent=11 // pred_fallthru
        _
      // Predicated region
      $region25: #{transformer_encoder_pallas.2} parent=11 // pred_check
        %p449 = pneg %p145
      $region26: #{transformer_encoder_pallas.2} parent=11 // pred_check_branch
        %451 = sbr.rel (%p449) target = $region28
      $region27: #{transformer_encoder_pallas.2} parent=11 // pred_region
        _
      $region28: #{transformer_encoder_pallas.2} parent=11 // pred_fallthru
        _
      // Predicated region
      $region29: #{transformer_encoder_pallas.2} parent=11 // pred_check
        %p452 = pneg %p166
      $region30: #{transformer_encoder_pallas.2} parent=11 // pred_check_branch
        %454 = sbr.rel (%p452) target = $region32
      $region31: #{transformer_encoder_pallas.2} parent=11 // pred_region
        _
      $region32: #{transformer_encoder_pallas.2} parent=11 // pred_fallthru
        _
      // Predicated region
      $region33: #{transformer_encoder_pallas.2} parent=11 // pred_check
        %p455 = pneg %p187
      $region34: #{transformer_encoder_pallas.2} parent=11 // pred_check_branch
        %457 = sbr.rel (%p455) target = $region36
      $region35: #{transformer_encoder_pallas.2} parent=11 // pred_region
        _
      $region36: #{transformer_encoder_pallas.2} parent=11 // pred_fallthru
        _
      // Predicated region
      $region37: #{transformer_encoder_pallas.2} parent=11 // pred_check
        %p458 = pneg %p208
      $region38: #{transformer_encoder_pallas.2} parent=11 // pred_check_branch
        %460 = sbr.rel (%p458) target = $region40
      $region39: #{transformer_encoder_pallas.2} parent=11 // pred_region
        _
      $region40: #{transformer_encoder_pallas.2} parent=11 // pred_fallthru
        _
      // Predicated region
      $region41: #{transformer_encoder_pallas.2} parent=11 // pred_check
        %p461 = pneg %p229
      $region42: #{transformer_encoder_pallas.2} parent=11 // pred_check_branch
        %463 = sbr.rel (%p461) target = $region44
      $region43: #{transformer_encoder_pallas.2} parent=11 // pred_region
        _
      $region44: #{transformer_encoder_pallas.2} parent=11 // pred_fallthru
        _
      // Predicated region
      $region45: #{transformer_encoder_pallas.2} parent=11 // pred_check
        %p464 = pneg %p250
      $region46: #{transformer_encoder_pallas.2} parent=11 // pred_check_branch
        %466 = sbr.rel (%p464) target = $region48
      $region47: #{transformer_encoder_pallas.2} parent=11 // pred_region
        _
      $region48: #{transformer_encoder_pallas.2} parent=11 // pred_fallthru
        _
      // Predicated region
      $region49: #{transformer_encoder_pallas.2} parent=11 // pred_check
        %p467 = pneg %p271
      $region50: #{transformer_encoder_pallas.2} parent=11 // pred_check_branch
        %469 = sbr.rel (%p467) target = $region52
      $region51: #{transformer_encoder_pallas.2} parent=11 // pred_region
        _
      $region52: #{transformer_encoder_pallas.2} parent=11 // pred_fallthru
        _
      // Predicated region
      $region53: #{transformer_encoder_pallas.2} parent=11 // pred_check
        %p470 = pneg %p292
      $region54: #{transformer_encoder_pallas.2} parent=11 // pred_check_branch
        %472 = sbr.rel (%p470) target = $region56
      $region55: #{transformer_encoder_pallas.2} parent=11 // pred_region
        _
      $region56: #{transformer_encoder_pallas.2} parent=11 // pred_fallthru
        _
      // Predicated region
      $region57: #{transformer_encoder_pallas.2} parent=11 // pred_check
        %p473 = pneg %p313
      $region58: #{transformer_encoder_pallas.2} parent=11 // pred_check_branch
        %475 = sbr.rel (%p473) target = $region60
      $region59: #{transformer_encoder_pallas.2} parent=11 // pred_region
        _
      $region60: #{transformer_encoder_pallas.2} parent=11 // pred_fallthru
        _
      // Predicated region
      $region61: #{transformer_encoder_pallas.2} parent=11 // pred_check
        %p476 = pneg %p334
      $region62: #{transformer_encoder_pallas.2} parent=11 // pred_check_branch
        %478 = sbr.rel (%p476) target = $region64
      $region63: #{transformer_encoder_pallas.2} parent=11 // pred_region
        _
      $region64: #{transformer_encoder_pallas.2} parent=11 // pred_fallthru
        _
      // Predicated region
      $region65: #{transformer_encoder_pallas.2} parent=11 // pred_check
        %p479 = pneg %p355
      $region66: #{transformer_encoder_pallas.2} parent=11 // pred_check_branch
        %481 = sbr.rel (%p479) target = $region68
      $region67: #{transformer_encoder_pallas.2} parent=11 // pred_region
        _
      $region68: #{transformer_encoder_pallas.2} parent=11 // pred_fallthru
        _
      // Predicated region
      $region69: #{transformer_encoder_pallas.2} parent=11 // pred_check
        %p482 = pneg %p376
      $region70: #{transformer_encoder_pallas.2} parent=11 // pred_check_branch
        %484 = sbr.rel (%p482) target = $region72
      $region71: #{transformer_encoder_pallas.2} parent=11 // pred_region
        _
      $region72: #{transformer_encoder_pallas.2} parent=11 // pred_fallthru
        _
      // Predicated region
      $region73: #{transformer_encoder_pallas.2} parent=11 // pred_check
        %p485 = pneg %p397
      $region74: #{transformer_encoder_pallas.2} parent=11 // pred_check_branch
        %487 = sbr.rel (%p485) target = $region76
      $region75: #{transformer_encoder_pallas.2} parent=11 // pred_region
        _
      $region76: #{transformer_encoder_pallas.2} parent=11 // pred_fallthru
        _
    $region12: #{transformer_encoder_pallas.2} parent=5 // pred_fallthru
      _
    %p488 = scmp.lt.s32.totalorder %s23, 2
    // Predicated region
    $region77: #{transformer_encoder_pallas.2} parent=5 // pred_check
      %p489 = pneg %p488
    $region78: #{transformer_encoder_pallas.2} parent=5 // pred_check_branch
      %491 = sbr.rel (%p489) target = $region80
    $region79: #{transformer_encoder_pallas.2} parent=5 // pred_region
      // Predicated region
      $region81: #{transformer_encoder_pallas.2} parent=79 // pred_check
        %p492 = pneg %p55
      $region82: #{transformer_encoder_pallas.2} parent=79 // pred_check_branch
        %494 = sbr.rel (%p492) target = $region84
      $region83: #{transformer_encoder_pallas.2} parent=79 // pred_region
        %p495 = scmp.lt.s32.totalorder %s30, 1
        %s496 = scalar_select %p495, %s30, 1
        %s497 = smul.addr %s496, 8
        %s498 = scalar_lea.vmem %s0, %s497
      $region84: #{transformer_encoder_pallas.2} parent=79 // pred_fallthru
        _
    $region80: #{transformer_encoder_pallas.2} parent=5 // pred_fallthru
      _
    %p499 = scmp.le.s32.totalorder 1, %s23
    %p500 = scmp.lt.s32.totalorder %s23, 3
    %p501 = pnand %p499, %p500
    %p502 = pneg %p501
    // Predicated region
    $region85: #{transformer_encoder_pallas.2} parent=5 // pred_check
      _
    $region86: #{transformer_encoder_pallas.2} parent=5 // pred_check_branch
      %504 = sbr.rel (%p501) target = $region88
    $region87: #{transformer_encoder_pallas.2} parent=5 // pred_region
      %s505 = ssub.s32 %s23, 1
      %p506 = scmp.lt.s32.totalorder %s32, 1
      %s507 = scalar_select %p506, %s32, 1
      %s508 = smul.addr %s507, 8
      %s509 = scalar_lea.vmem %s0, %s508
      %p510 = pneg %p61
      %p511 = pneg %p58
      %p512 = pneg %p82
      %p513 = pneg %p79
      %p514 = pneg %p103
      %p515 = pneg %p100
      %p516 = pneg %p124
      %p517 = pneg %p121
      %p518 = pneg %p145
      %p519 = pneg %p142
      %p520 = pneg %p166
      %p521 = pneg %p163
      %p522 = pneg %p187
      %p523 = pneg %p184
      %p524 = pneg %p208
      %p525 = pneg %p205
      %p526 = pneg %p229
      %p527 = pneg %p226
      %p528 = pneg %p250
      %p529 = pneg %p247
      %p530 = pneg %p271
      %p531 = pneg %p268
      %p532 = pneg %p292
      %p533 = pneg %p289
      %p534 = pneg %p313
      %p535 = pneg %p310
      %p536 = pneg %p334
      %p537 = pneg %p331
      %p538 = pneg %p355
      %p539 = pneg %p352
      %p540 = pneg %p376
      %p541 = pneg %p373
      %p542 = pneg %p397
      %p543 = pneg %p394
      %p544 = pneg %p425
      %p545 = pneg %p422
      %p546 = scmp.lt.s32.totalorder %s32, 1
      %s547 = scalar_select %p546, %s32, 1
      %p548 = scmp.lt.s32.totalorder %s33, 0
      %s549 = scalar_select %p548, %s33, 0
      %s550 = sadd.s32 %s549, %s547
      %s551 = smul.addr %s550, 8
      %s552 = scalar_lea.vmem %s17, %s551
      %p553 = scmp.lt.s32.totalorder %s32, 1
      %s554 = scalar_select %p553, %s32, 1
      %s555 = smul.addr %s554, 8
      %s556 = scalar_lea.vmem %s0, %s555
      %p557 = scmp.lt.s32.totalorder %s32, 1
      %s558 = scalar_select %p557, %s32, 1
      %p559 = scmp.lt.s32.totalorder %s33, 0
      %s560 = scalar_select %p559, %s33, 0
      %s561 = sadd.s32 %s560, %s558
      %s562 = smul.addr %s561, 8
      %s563 = scalar_lea.vmem %s17, %s562
      %p565 = scmp.eq.s32.totalorder %s33, 0
      // Predicated region
      $region89: #{transformer_encoder_pallas.2} parent=87 // pred_check
        %p566 = pneg %p565
      $region90: #{transformer_encoder_pallas.2} parent=87 // pred_check_branch
        %568 = sbr.rel (%p566) target = $region92
      $region91: #{transformer_encoder_pallas.2} parent=87 // pred_region
        %v569 = vld [vmem:[%s556] sm:$0xff]
        %v570 = vpack.c.bf16 %v569, %v569
        %v571 = vld [vmem:[%s3] sm:$0xf]
        %v572 = vld [vmem:[%s3 + $0x4] sm:$0xf]
        %v573 = vld [vmem:[%s3 + $0x8] sm:$0xf]
        %v574 = vld [vmem:[%s3 + $0xc] sm:$0xf]
        %v575 = vld [vmem:[%s4] sm:$0x1]
        %v577 = vperm.slane %v575, 0
        %v583 = vunpack.c.l.b16 %v571
        %v584 = vunpack.c.l.b16 %v572
        %v585 = vunpack.c.l.b16 %v573
        %v586 = vunpack.c.l.b16 %v574
        %v587 = vpack.c.b16 %v584, %v583
        %v588 = vpack.c.b16 %v586, %v585
        %vm591 = vcmask 261120
        %v593 = vsel %vm591, %v570, 0
        %595 = vmatpush.bf16.msra.mxu0 0
        %596 = vmatpush.bf16.msra.mxu0 0
        %597 = vmatpush.bf16.msra.mxu0 0
        %598 = vmatpush.bf16.msra.mxu0 0
        %599 = vmatpush.bf16.msra.mxu0 0
        %600 = vmatpush.bf16.msra.mxu0 0
        %601 = vmatpush.bf16.msra.mxu0 %v588
        %602 = vmatpush.bf16.msra.mxu0 %v587
        %603 = vmatmul.bf16.gmra.mxu0 %v593
        %v604 = vpop.f32.mrf.mxu0
        %v605 = vadd.f32 %v577, %v604
        %v606 = vpop.f32.mrf.mxu0
        %607 = vdwg.mxu0
        %v608 = vld [vmem:[%s5] sm:$0xf]
        %v609 = vld [vmem:[%s5 + $0x4] sm:$0xf]
        %v610 = vld [vmem:[%s5 + $0x8] sm:$0xf]
        %v611 = vld [vmem:[%s5 + $0xc] sm:$0xf]
        %v612 = vld [vmem:[%s6] sm:$0x1]
        %v614 = vperm.slane %v612, 0
        %v620 = vunpack.c.l.b16 %v608
        %v621 = vunpack.c.l.b16 %v609
        %v622 = vunpack.c.l.b16 %v610
        %v623 = vunpack.c.l.b16 %v611
        %v624 = vpack.c.b16 %v621, %v620
        %v625 = vpack.c.b16 %v623, %v622
        %628 = vmatpush.bf16.msra.mxu0 0
        %629 = vmatpush.bf16.msra.mxu0 0
        %630 = vmatpush.bf16.msra.mxu0 0
        %631 = vmatpush.bf16.msra.mxu0 0
        %632 = vmatpush.bf16.msra.mxu0 0
        %633 = vmatpush.bf16.msra.mxu0 0
        %634 = vmatpush.bf16.msra.mxu0 %v625
        %635 = vmatpush.bf16.msra.mxu0 %v624
        %636 = vmatmul.bf16.gmra.mxu0 %v593
        %v637 = vpop.f32.mrf.mxu0
        %v638 = vadd.f32 %v614, %v637
        %v639 = vpop.f32.mrf.mxu0
        %640 = vdwg.mxu0
        %v641 = vpack.c.bf16 %v605, %v605
        %vm642 = vcmask 60416
        %643 = vst.msk [vmem:[#allocation2] sm:$0xf] %vm642, %v641
        %v644 = vpack.c.bf16 %v638, %v638
        %645 = vst.msk [vmem:[#allocation3] sm:$0xf] %vm642, %v644
        %s646 = scalar_lea.vmem %s3, 16
        %v647 = vld [vmem:[%s646] sm:$0xf]
        %v648 = vld [vmem:[%s646 + $0x4] sm:$0xf]
        %v649 = vld [vmem:[%s646 + $0x8] sm:$0xf]
        %v650 = vld [vmem:[%s646 + $0xc] sm:$0xf]
        %s651 = scalar_lea.vmem %s4, 1
        %v652 = vld [vmem:[%s651] sm:$0x1]
        %v654 = vperm.slane %v652, 0
        %v660 = vunpack.c.l.b16 %v647
        %v661 = vunpack.c.l.b16 %v648
        %v662 = vunpack.c.l.b16 %v649
        %v663 = vunpack.c.l.b16 %v650
        %v664 = vpack.c.b16 %v661, %v660
        %v665 = vpack.c.b16 %v663, %v662
        %668 = vmatpush.bf16.msra.mxu0 0
        %669 = vmatpush.bf16.msra.mxu0 0
        %670 = vmatpush.bf16.msra.mxu0 0
        %671 = vmatpush.bf16.msra.mxu0 0
        %672 = vmatpush.bf16.msra.mxu0 0
        %673 = vmatpush.bf16.msra.mxu0 0
        %674 = vmatpush.bf16.msra.mxu0 %v665
        %675 = vmatpush.bf16.msra.mxu0 %v664
        %676 = vmatmul.bf16.gmra.mxu0 %v593
        %v677 = vpop.f32.mrf.mxu0
        %v678 = vadd.f32 %v654, %v677
        %v679 = vpop.f32.mrf.mxu0
        %680 = vdwg.mxu0
        %s681 = scalar_lea.vmem %s5, 16
        %v682 = vld [vmem:[%s681] sm:$0xf]
        %v683 = vld [vmem:[%s681 + $0x4] sm:$0xf]
        %v684 = vld [vmem:[%s681 + $0x8] sm:$0xf]
        %v685 = vld [vmem:[%s681 + $0xc] sm:$0xf]
        %s686 = scalar_lea.vmem %s6, 1
        %v687 = vld [vmem:[%s686] sm:$0x1]
        %v689 = vperm.slane %v687, 0
        %v695 = vunpack.c.l.b16 %v682
        %v696 = vunpack.c.l.b16 %v683
        %v697 = vunpack.c.l.b16 %v684
        %v698 = vunpack.c.l.b16 %v685
        %v699 = vpack.c.b16 %v696, %v695
        %v700 = vpack.c.b16 %v698, %v697
        %703 = vmatpush.bf16.msra.mxu0 0
        %704 = vmatpush.bf16.msra.mxu0 0
        %705 = vmatpush.bf16.msra.mxu0 0
        %706 = vmatpush.bf16.msra.mxu0 0
        %707 = vmatpush.bf16.msra.mxu0 0
        %708 = vmatpush.bf16.msra.mxu0 0
        %709 = vmatpush.bf16.msra.mxu0 %v700
        %710 = vmatpush.bf16.msra.mxu0 %v699
        %711 = vmatmul.bf16.gmra.mxu0 %v593
        %v712 = vpop.f32.mrf.mxu0
        %v713 = vadd.f32 %v689, %v712
        %v714 = vpop.f32.mrf.mxu0
        %715 = vdwg.mxu0
        %v716 = vpack.c.bf16 %v678, %v678
        %s717 = scalar_lea.vmem [#allocation2], 4
        %718 = vst.msk [vmem:[%s717] sm:$0xf] %vm642, %v716
        %v719 = vpack.c.bf16 %v713, %v713
        %s720 = scalar_lea.vmem [#allocation3], 4
        %721 = vst.msk [vmem:[%s720] sm:$0xf] %vm642, %v719
        %s722 = scalar_lea.vmem %s3, 32
        %v723 = vld [vmem:[%s722] sm:$0xf]
        %v724 = vld [vmem:[%s722 + $0x4] sm:$0xf]
        %v725 = vld [vmem:[%s722 + $0x8] sm:$0xf]
        %v726 = vld [vmem:[%s722 + $0xc] sm:$0xf]
        %s727 = scalar_lea.vmem %s4, 2
        %v728 = vld [vmem:[%s727] sm:$0x1]
        %v730 = vperm.slane %v728, 0
        %v736 = vunpack.c.l.b16 %v723
        %v737 = vunpack.c.l.b16 %v724
        %v738 = vunpack.c.l.b16 %v725
        %v739 = vunpack.c.l.b16 %v726
        %v740 = vpack.c.b16 %v737, %v736
        %v741 = vpack.c.b16 %v739, %v738
        %744 = vmatpush.bf16.msra.mxu0 0
        %745 = vmatpush.bf16.msra.mxu0 0
        %746 = vmatpush.bf16.msra.mxu0 0
        %747 = vmatpush.bf16.msra.mxu0 0
        %748 = vmatpush.bf16.msra.mxu0 0
        %749 = vmatpush.bf16.msra.mxu0 0
        %750 = vmatpush.bf16.msra.mxu0 %v741
        %751 = vmatpush.bf16.msra.mxu0 %v740
        %752 = vmatmul.bf16.gmra.mxu0 %v593
        %v753 = vpop.f32.mrf.mxu0
        %v754 = vadd.f32 %v730, %v753
        %v755 = vpop.f32.mrf.mxu0
        %756 = vdwg.mxu0
        %s757 = scalar_lea.vmem %s5, 32
        %v758 = vld [vmem:[%s757] sm:$0xf]
        %v759 = vld [vmem:[%s757 + $0x4] sm:$0xf]
        %v760 = vld [vmem:[%s757 + $0x8] sm:$0xf]
        %v761 = vld [vmem:[%s757 + $0xc] sm:$0xf]
        %s762 = scalar_lea.vmem %s6, 2
        %v763 = vld [vmem:[%s762] sm:$0x1]
        %v765 = vperm.slane %v763, 0
        %v771 = vunpack.c.l.b16 %v758
        %v772 = vunpack.c.l.b16 %v759
        %v773 = vunpack.c.l.b16 %v760
        %v774 = vunpack.c.l.b16 %v761
        %v775 = vpack.c.b16 %v772, %v771
        %v776 = vpack.c.b16 %v774, %v773
        %779 = vmatpush.bf16.msra.mxu0 0
        %780 = vmatpush.bf16.msra.mxu0 0
        %781 = vmatpush.bf16.msra.mxu0 0
        %782 = vmatpush.bf16.msra.mxu0 0
        %783 = vmatpush.bf16.msra.mxu0 0
        %784 = vmatpush.bf16.msra.mxu0 0
        %785 = vmatpush.bf16.msra.mxu0 %v776
        %786 = vmatpush.bf16.msra.mxu0 %v775
        %787 = vmatmul.bf16.gmra.mxu0 %v593
        %v788 = vpop.f32.mrf.mxu0
        %v789 = vadd.f32 %v765, %v788
        %v790 = vpop.f32.mrf.mxu0
        %791 = vdwg.mxu0
        %v792 = vpack.c.bf16 %v754, %v754
        %s793 = scalar_lea.vmem [#allocation2], 8
        %794 = vst.msk [vmem:[%s793] sm:$0xf] %vm642, %v792
        %v795 = vpack.c.bf16 %v789, %v789
        %s796 = scalar_lea.vmem [#allocation3], 8
        %797 = vst.msk [vmem:[%s796] sm:$0xf] %vm642, %v795
        %s798 = scalar_lea.vmem %s3, 48
        %v799 = vld [vmem:[%s798] sm:$0xf]
        %v800 = vld [vmem:[%s798 + $0x4] sm:$0xf]
        %v801 = vld [vmem:[%s798 + $0x8] sm:$0xf]
        %v802 = vld [vmem:[%s798 + $0xc] sm:$0xf]
        %s803 = scalar_lea.vmem %s4, 3
        %v804 = vld [vmem:[%s803] sm:$0x1]
        %v806 = vperm.slane %v804, 0
        %v812 = vunpack.c.l.b16 %v799
        %v813 = vunpack.c.l.b16 %v800
        %v814 = vunpack.c.l.b16 %v801
        %v815 = vunpack.c.l.b16 %v802
        %v816 = vpack.c.b16 %v813, %v812
        %v817 = vpack.c.b16 %v815, %v814
        %820 = vmatpush.bf16.msra.mxu0 0
        %821 = vmatpush.bf16.msra.mxu0 0
        %822 = vmatpush.bf16.msra.mxu0 0
        %823 = vmatpush.bf16.msra.mxu0 0
        %824 = vmatpush.bf16.msra.mxu0 0
        %825 = vmatpush.bf16.msra.mxu0 0
        %826 = vmatpush.bf16.msra.mxu0 %v817
        %827 = vmatpush.bf16.msra.mxu0 %v816
        %828 = vmatmul.bf16.gmra.mxu0 %v593
        %v829 = vpop.f32.mrf.mxu0
        %v830 = vadd.f32 %v806, %v829
        %v831 = vpop.f32.mrf.mxu0
        %832 = vdwg.mxu0
        %s833 = scalar_lea.vmem %s5, 48
        %v834 = vld [vmem:[%s833] sm:$0xf]
        %v835 = vld [vmem:[%s833 + $0x4] sm:$0xf]
        %v836 = vld [vmem:[%s833 + $0x8] sm:$0xf]
        %v837 = vld [vmem:[%s833 + $0xc] sm:$0xf]
        %s838 = scalar_lea.vmem %s6, 3
        %v839 = vld [vmem:[%s838] sm:$0x1]
        %v841 = vperm.slane %v839, 0
        %v847 = vunpack.c.l.b16 %v834
        %v848 = vunpack.c.l.b16 %v835
        %v849 = vunpack.c.l.b16 %v836
        %v850 = vunpack.c.l.b16 %v837
        %v851 = vpack.c.b16 %v848, %v847
        %v852 = vpack.c.b16 %v850, %v849
        %855 = vmatpush.bf16.msra.mxu0 0
        %856 = vmatpush.bf16.msra.mxu0 0
        %857 = vmatpush.bf16.msra.mxu0 0
        %858 = vmatpush.bf16.msra.mxu0 0
        %859 = vmatpush.bf16.msra.mxu0 0
        %860 = vmatpush.bf16.msra.mxu0 0
        %861 = vmatpush.bf16.msra.mxu0 %v852
        %862 = vmatpush.bf16.msra.mxu0 %v851
        %863 = vmatmul.bf16.gmra.mxu0 %v593
        %v864 = vpop.f32.mrf.mxu0
        %v865 = vadd.f32 %v841, %v864
        %v866 = vpop.f32.mrf.mxu0
        %867 = vdwg.mxu0
        %v868 = vpack.c.bf16 %v830, %v830
        %s869 = scalar_lea.vmem [#allocation2], 12
        %870 = vst.msk [vmem:[%s869] sm:$0xf] %vm642, %v868
        %v871 = vpack.c.bf16 %v865, %v865
        %s872 = scalar_lea.vmem [#allocation3], 12
        %873 = vst.msk [vmem:[%s872] sm:$0xf] %vm642, %v871
      $region92: #{transformer_encoder_pallas.2} parent=87 // pred_fallthru
        _
      %s874 = smul.u32 %s33, 8
      %s875 = scalar_lea.vmem %s556, %s874
      %v876 = vld [vmem:[%s875] sm:$0xff]
      %v877 = vpack.c.bf16 %v876, %v876
      %v878 = vld [vmem:[%s1] sm:$0xf]
      %v879 = vld [vmem:[%s1 + $0x4] sm:$0xf]
      %v880 = vld [vmem:[%s1 + $0x8] sm:$0xf]
      %v881 = vld [vmem:[%s1 + $0xc] sm:$0xf]
      %v882 = vld [vmem:[%s2] sm:$0x1]
      %v884 = vperm.slane %v882, 0
      %v890 = vunpack.c.l.b16 %v878
      %v891 = vunpack.c.l.b16 %v879
      %v892 = vunpack.c.l.b16 %v880
      %v893 = vunpack.c.l.b16 %v881
      %v894 = vpack.c.b16 %v891, %v890
      %v895 = vpack.c.b16 %v893, %v892
      %vm898 = vcmask 261120
      %v900 = vsel %vm898, %v877, 0
      %902 = vmatpush.bf16.msra.mxu0 0
      %903 = vmatpush.bf16.msra.mxu0 0
      %904 = vmatpush.bf16.msra.mxu0 0
      %905 = vmatpush.bf16.msra.mxu0 0
      %906 = vmatpush.bf16.msra.mxu0 0
      %907 = vmatpush.bf16.msra.mxu0 0
      %908 = vmatpush.bf16.msra.mxu0 %v895
      %909 = vmatpush.bf16.msra.mxu0 %v894
      %910 = vmatmul.bf16.gmra.mxu0 %v900
      %v911 = vpop.f32.mrf.mxu0
      %v912 = vadd.f32 %v884, %v911
      %v913 = vpop.f32.mrf.mxu0
      %914 = vdwg.mxu0
      %v915 = vmul.f32 %v912, 0.35355338
      %v916 = vpack.c.bf16 %v915, %v915
      %v917 = vld [vmem:[#allocation2] sm:$0xf]
      %vm918 = vcmask 64512
      %v920 = vsel %vm918, %v916, 0
      %v923 = vsel %vm918, %v917, 0
      %925 = vmatpush.bf16.xpose.msra.mxu0 0
      %926 = vmatpush.bf16.xpose.msra.mxu0 0
      %927 = vmatpush.bf16.xpose.msra.mxu0 0
      %928 = vmatpush.bf16.xpose.msra.mxu0 0
      %929 = vmatpush.bf16.xpose.msra.mxu0 0
      %930 = vmatpush.bf16.xpose.msra.mxu0 0
      %931 = vmatpush.bf16.xpose.msra.mxu0 0
      %932 = vmatpush.bf16.xpose.msra.mxu0 %v923
      %933 = vmatmul.bf16.gmra.mxu0 %v920
      %v934 = vpop.f32.mrf.mxu0
      %v935 = vadd.f32 0.0, %v934
      %v936 = vpop.f32.mrf.mxu0
      %937 = vdwg.mxu0
      %v938 = vsel %vm918, %v935, -inf
      %939 = vmax.xlane.f32.xlu0 %v938
      %v940 = vpop.xlane.xlu0 %939
      %v941 = vsub.f32 %v935, %v940
      %v942 = vmul.f32 %v941, 1.442695
      %v943 = vpow.pop %v942
      %v944 = vsel %vm918, %v943, 0.0
      %945 = vadd.xlane.f32.xlu0 %v944
      %v946 = vpop.xlane.xlu0 %945
      %v947 = vrcp.pop %v946
      %v948 = vmul.f32 %v943, %v947
      %v949 = vpack.c.bf16 %v948, %v948
      %v950 = vld [vmem:[#allocation3] sm:$0xf]
      %v952 = vsel %vm918, %v949, 0
      %vm954 = vcmask 1043456
      %v956 = vsel %vm954, %v950, 0
      %958 = vmatpush.bf16.msra.mxu0 0
      %959 = vmatpush.bf16.msra.mxu0 0
      %960 = vmatpush.bf16.msra.mxu0 0
      %961 = vmatpush.bf16.msra.mxu0 0
      %962 = vmatpush.bf16.msra.mxu0 0
      %963 = vmatpush.bf16.msra.mxu0 0
      %964 = vmatpush.bf16.msra.mxu0 0
      %965 = vmatpush.bf16.msra.mxu0 %v956
      %966 = vmatmul.bf16.gmra.mxu0 %v952
      %v967 = vpop.f32.mrf.mxu0
      %v968 = vadd.f32 0.0, %v967
      %v969 = vpop.f32.mrf.mxu0
      %970 = vdwg.mxu0
      %v971 = vpack.c.bf16 %v968, %v968
      %v972 = vld [vmem:[%s7] sm:$0xf]
      %s973 = scalar_lea.vmem %s1, 16
      %v974 = vld [vmem:[%s973] sm:$0xf]
      %v975 = vld [vmem:[%s973 + $0x4] sm:$0xf]
      %v976 = vld [vmem:[%s973 + $0x8] sm:$0xf]
      %v977 = vld [vmem:[%s973 + $0xc] sm:$0xf]
      %s978 = scalar_lea.vmem %s2, 1
      %v979 = vld [vmem:[%s978] sm:$0x1]
      %v981 = vperm.slane %v979, 0
      %v987 = vunpack.c.l.b16 %v974
      %v988 = vunpack.c.l.b16 %v975
      %v989 = vunpack.c.l.b16 %v976
      %v990 = vunpack.c.l.b16 %v977
      %v991 = vpack.c.b16 %v988, %v987
      %v992 = vpack.c.b16 %v990, %v989
      %995 = vmatpush.bf16.msra.mxu0 0
      %996 = vmatpush.bf16.msra.mxu0 0
      %997 = vmatpush.bf16.msra.mxu0 0
      %998 = vmatpush.bf16.msra.mxu0 0
      %999 = vmatpush.bf16.msra.mxu0 0
      %1000 = vmatpush.bf16.msra.mxu0 0
      %1001 = vmatpush.bf16.msra.mxu0 %v992
      %1002 = vmatpush.bf16.msra.mxu0 %v991
      %1003 = vmatmul.bf16.gmra.mxu0 %v900
      %v1004 = vpop.f32.mrf.mxu0
      %v1005 = vadd.f32 %v981, %v1004
      %v1006 = vpop.f32.mrf.mxu0
      %1007 = vdwg.mxu0
      %v1008 = vmul.f32 %v1005, 0.35355338
      %v1009 = vpack.c.bf16 %v1008, %v1008
      %s1010 = scalar_lea.vmem [#allocation2], 4
      %v1011 = vld [vmem:[%s1010] sm:$0xf]
      %v1013 = vsel %vm918, %v1009, 0
      %v1016 = vsel %vm918, %v1011, 0
      %1018 = vmatpush.bf16.xpose.msra.mxu0 0
      %1019 = vmatpush.bf16.xpose.msra.mxu0 0
      %1020 = vmatpush.bf16.xpose.msra.mxu0 0
      %1021 = vmatpush.bf16.xpose.msra.mxu0 0
      %1022 = vmatpush.bf16.xpose.msra.mxu0 0
      %1023 = vmatpush.bf16.xpose.msra.mxu0 0
      %1024 = vmatpush.bf16.xpose.msra.mxu0 0
      %1025 = vmatpush.bf16.xpose.msra.mxu0 %v1016
      %1026 = vmatmul.bf16.gmra.mxu0 %v1013
      %v1027 = vpop.f32.mrf.mxu0
      %v1028 = vadd.f32 0.0, %v1027
      %v1029 = vpop.f32.mrf.mxu0
      %1030 = vdwg.mxu0
      %v1031 = vsel %vm918, %v1028, -inf
      %1032 = vmax.xlane.f32.xlu0 %v1031
      %v1033 = vpop.xlane.xlu0 %1032
      %v1034 = vsub.f32 %v1028, %v1033
      %v1035 = vmul.f32 %v1034, 1.442695
      %v1036 = vpow.pop %v1035
      %v1037 = vsel %vm918, %v1036, 0.0
      %1038 = vadd.xlane.f32.xlu0 %v1037
      %v1039 = vpop.xlane.xlu0 %1038
      %v1040 = vrcp.pop %v1039
      %v1041 = vmul.f32 %v1036, %v1040
      %v1042 = vpack.c.bf16 %v1041, %v1041
      %s1043 = scalar_lea.vmem [#allocation3], 4
      %v1044 = vld [vmem:[%s1043] sm:$0xf]
      %v1046 = vsel %vm918, %v1042, 0
      %v1049 = vsel %vm954, %v1044, 0
      %1051 = vmatpush.bf16.msra.mxu0 0
      %1052 = vmatpush.bf16.msra.mxu0 0
      %1053 = vmatpush.bf16.msra.mxu0 0
      %1054 = vmatpush.bf16.msra.mxu0 0
      %1055 = vmatpush.bf16.msra.mxu0 0
      %1056 = vmatpush.bf16.msra.mxu0 0
      %1057 = vmatpush.bf16.msra.mxu0 0
      %1058 = vmatpush.bf16.msra.mxu0 %v1049
      %1059 = vmatmul.bf16.gmra.mxu0 %v1046
      %v1060 = vpop.f32.mrf.mxu0
      %v1061 = vadd.f32 0.0, %v1060
      %v1062 = vpop.f32.mrf.mxu0
      %1063 = vdwg.mxu0
      %v1064 = vpack.c.bf16 %v1061, %v1061
      %s1065 = scalar_lea.vmem %s7, 4
      %v1066 = vld [vmem:[%s1065] sm:$0xf]
      %v1068 = vsel %vm918, %v1064, 0
      %v1071 = vsel %vm954, %v1066, 0
      %1073 = vmatpush.bf16.msra.mxu0 0
      %1074 = vmatpush.bf16.msra.mxu0 0
      %1075 = vmatpush.bf16.msra.mxu0 0
      %1076 = vmatpush.bf16.msra.mxu0 0
      %1077 = vmatpush.bf16.msra.mxu0 0
      %1078 = vmatpush.bf16.msra.mxu0 0
      %1079 = vmatpush.bf16.msra.mxu0 0
      %1080 = vmatpush.bf16.msra.mxu0 %v1071
      %1081 = vmatmul.bf16.gmra.mxu0 %v1068
      %v1082 = vpop.f32.mrf.mxu0
      %v1083 = vadd.f32 0.0, %v1082
      %v1084 = vpop.f32.mrf.mxu0
      %1085 = vdwg.mxu0
      %v1087 = vsel %vm918, %v971, 0
      %v1090 = vsel %vm954, %v972, 0
      %1092 = vmatpush.bf16.msra.mxu0 0
      %1093 = vmatpush.bf16.msra.mxu0 0
      %1094 = vmatpush.bf16.msra.mxu0 0
      %1095 = vmatpush.bf16.msra.mxu0 0
      %1096 = vmatpush.bf16.msra.mxu0 0
      %1097 = vmatpush.bf16.msra.mxu0 0
      %1098 = vmatpush.bf16.msra.mxu0 0
      %1099 = vmatpush.bf16.msra.mxu0 %v1090
      %1100 = vmatmul.bf16.gmra.mxu0 %v1087
      %v1101 = vpop.f32.mrf.mxu0
      %v1102 = vadd.f32 %v1083, %v1101
      %v1103 = vpop.f32.mrf.mxu0
      %1104 = vdwg.mxu0
      %s1105 = scalar_lea.vmem %s1, 32
      %v1106 = vld [vmem:[%s1105] sm:$0xf]
      %v1107 = vld [vmem:[%s1105 + $0x4] sm:$0xf]
      %v1108 = vld [vmem:[%s1105 + $0x8] sm:$0xf]
      %v1109 = vld [vmem:[%s1105 + $0xc] sm:$0xf]
      %s1110 = scalar_lea.vmem %s2, 2
      %v1111 = vld [vmem:[%s1110] sm:$0x1]
      %v1113 = vperm.slane %v1111, 0
      %v1119 = vunpack.c.l.b16 %v1106
      %v1120 = vunpack.c.l.b16 %v1107
      %v1121 = vunpack.c.l.b16 %v1108
      %v1122 = vunpack.c.l.b16 %v1109
      %v1123 = vpack.c.b16 %v1120, %v1119
      %v1124 = vpack.c.b16 %v1122, %v1121
      %1127 = vmatpush.bf16.msra.mxu0 0
      %1128 = vmatpush.bf16.msra.mxu0 0
      %1129 = vmatpush.bf16.msra.mxu0 0
      %1130 = vmatpush.bf16.msra.mxu0 0
      %1131 = vmatpush.bf16.msra.mxu0 0
      %1132 = vmatpush.bf16.msra.mxu0 0
      %1133 = vmatpush.bf16.msra.mxu0 %v1124
      %1134 = vmatpush.bf16.msra.mxu0 %v1123
      %1135 = vmatmul.bf16.gmra.mxu0 %v900
      %v1136 = vpop.f32.mrf.mxu0
      %v1137 = vadd.f32 %v1113, %v1136
      %v1138 = vpop.f32.mrf.mxu0
      %1139 = vdwg.mxu0
      %v1140 = vmul.f32 %v1137, 0.35355338
      %v1141 = vpack.c.bf16 %v1140, %v1140
      %s1142 = scalar_lea.vmem [#allocation2], 8
      %v1143 = vld [vmem:[%s1142] sm:$0xf]
      %v1145 = vsel %vm918, %v1141, 0
      %v1148 = vsel %vm918, %v1143, 0
      %1150 = vmatpush.bf16.xpose.msra.mxu0 0
      %1151 = vmatpush.bf16.xpose.msra.mxu0 0
      %1152 = vmatpush.bf16.xpose.msra.mxu0 0
      %1153 = vmatpush.bf16.xpose.msra.mxu0 0
      %1154 = vmatpush.bf16.xpose.msra.mxu0 0
      %1155 = vmatpush.bf16.xpose.msra.mxu0 0
      %1156 = vmatpush.bf16.xpose.msra.mxu0 0
      %1157 = vmatpush.bf16.xpose.msra.mxu0 %v1148
      %1158 = vmatmul.bf16.gmra.mxu0 %v1145
      %v1159 = vpop.f32.mrf.mxu0
      %v1160 = vadd.f32 0.0, %v1159
      %v1161 = vpop.f32.mrf.mxu0
      %1162 = vdwg.mxu0
      %v1163 = vsel %vm918, %v1160, -inf
      %1164 = vmax.xlane.f32.xlu0 %v1163
      %v1165 = vpop.xlane.xlu0 %1164
      %v1166 = vsub.f32 %v1160, %v1165
      %v1167 = vmul.f32 %v1166, 1.442695
      %v1168 = vpow.pop %v1167
      %v1169 = vsel %vm918, %v1168, 0.0
      %1170 = vadd.xlane.f32.xlu0 %v1169
      %v1171 = vpop.xlane.xlu0 %1170
      %v1172 = vrcp.pop %v1171
      %v1173 = vmul.f32 %v1168, %v1172
      %v1174 = vpack.c.bf16 %v1173, %v1173
      %s1175 = scalar_lea.vmem [#allocation3], 8
      %v1176 = vld [vmem:[%s1175] sm:$0xf]
      %v1178 = vsel %vm918, %v1174, 0
      %v1181 = vsel %vm954, %v1176, 0
      %1183 = vmatpush.bf16.msra.mxu0 0
      %1184 = vmatpush.bf16.msra.mxu0 0
      %1185 = vmatpush.bf16.msra.mxu0 0
      %1186 = vmatpush.bf16.msra.mxu0 0
      %1187 = vmatpush.bf16.msra.mxu0 0
      %1188 = vmatpush.bf16.msra.mxu0 0
      %1189 = vmatpush.bf16.msra.mxu0 0
      %1190 = vmatpush.bf16.msra.mxu0 %v1181
      %1191 = vmatmul.bf16.gmra.mxu0 %v1178
      %v1192 = vpop.f32.mrf.mxu0
      %v1193 = vadd.f32 0.0, %v1192
      %v1194 = vpop.f32.mrf.mxu0
      %1195 = vdwg.mxu0
      %v1196 = vpack.c.bf16 %v1193, %v1193
      %s1197 = scalar_lea.vmem %s7, 8
      %v1198 = vld [vmem:[%s1197] sm:$0xf]
      %v1200 = vsel %vm918, %v1196, 0
      %v1203 = vsel %vm954, %v1198, 0
      %1205 = vmatpush.bf16.msra.mxu0 0
      %1206 = vmatpush.bf16.msra.mxu0 0
      %1207 = vmatpush.bf16.msra.mxu0 0
      %1208 = vmatpush.bf16.msra.mxu0 0
      %1209 = vmatpush.bf16.msra.mxu0 0
      %1210 = vmatpush.bf16.msra.mxu0 0
      %1211 = vmatpush.bf16.msra.mxu0 0
      %1212 = vmatpush.bf16.msra.mxu0 %v1203
      %1213 = vmatmul.bf16.gmra.mxu0 %v1200
      %v1214 = vpop.f32.mrf.mxu0
      %v1215 = vadd.f32 0.0, %v1214
      %v1216 = vpop.f32.mrf.mxu0
      %1217 = vdwg.mxu0
      %v1218 = vadd.f32 %v1102, %v1215
      %s1219 = scalar_lea.vmem %s1, 48
      %v1220 = vld [vmem:[%s1219] sm:$0xf]
      %v1221 = vld [vmem:[%s1219 + $0x4] sm:$0xf]
      %v1222 = vld [vmem:[%s1219 + $0x8] sm:$0xf]
      %v1223 = vld [vmem:[%s1219 + $0xc] sm:$0xf]
      %s1224 = scalar_lea.vmem %s2, 3
      %v1225 = vld [vmem:[%s1224] sm:$0x1]
      %v1227 = vperm.slane %v1225, 0
      %v1233 = vunpack.c.l.b16 %v1220
      %v1234 = vunpack.c.l.b16 %v1221
      %v1235 = vunpack.c.l.b16 %v1222
      %v1236 = vunpack.c.l.b16 %v1223
      %v1237 = vpack.c.b16 %v1234, %v1233
      %v1238 = vpack.c.b16 %v1236, %v1235
      %1241 = vmatpush.bf16.msra.mxu0 0
      %1242 = vmatpush.bf16.msra.mxu0 0
      %1243 = vmatpush.bf16.msra.mxu0 0
      %1244 = vmatpush.bf16.msra.mxu0 0
      %1245 = vmatpush.bf16.msra.mxu0 0
      %1246 = vmatpush.bf16.msra.mxu0 0
      %1247 = vmatpush.bf16.msra.mxu0 %v1238
      %1248 = vmatpush.bf16.msra.mxu0 %v1237
      %1249 = vmatmul.bf16.gmra.mxu0 %v900
      %v1250 = vpop.f32.mrf.mxu0
      %v1251 = vadd.f32 %v1227, %v1250
      %v1252 = vpop.f32.mrf.mxu0
      %1253 = vdwg.mxu0
      %v1254 = vmul.f32 %v1251, 0.35355338
      %v1255 = vpack.c.bf16 %v1254, %v1254
      %s1256 = scalar_lea.vmem [#allocation2], 12
      %v1257 = vld [vmem:[%s1256] sm:$0xf]
      %v1259 = vsel %vm918, %v1255, 0
      %v1262 = vsel %vm918, %v1257, 0
      %1264 = vmatpush.bf16.xpose.msra.mxu0 0
      %1265 = vmatpush.bf16.xpose.msra.mxu0 0
      %1266 = vmatpush.bf16.xpose.msra.mxu0 0
      %1267 = vmatpush.bf16.xpose.msra.mxu0 0
      %1268 = vmatpush.bf16.xpose.msra.mxu0 0
      %1269 = vmatpush.bf16.xpose.msra.mxu0 0
      %1270 = vmatpush.bf16.xpose.msra.mxu0 0
      %1271 = vmatpush.bf16.xpose.msra.mxu0 %v1262
      %1272 = vmatmul.bf16.gmra.mxu0 %v1259
      %v1273 = vpop.f32.mrf.mxu0
      %v1274 = vadd.f32 0.0, %v1273
      %v1275 = vpop.f32.mrf.mxu0
      %1276 = vdwg.mxu0
      %v1277 = vsel %vm918, %v1274, -inf
      %1278 = vmax.xlane.f32.xlu0 %v1277
      %v1279 = vpop.xlane.xlu0 %1278
      %v1280 = vsub.f32 %v1274, %v1279
      %v1281 = vmul.f32 %v1280, 1.442695
      %v1282 = vpow.pop %v1281
      %v1283 = vsel %vm918, %v1282, 0.0
      %1284 = vadd.xlane.f32.xlu0 %v1283
      %v1285 = vpop.xlane.xlu0 %1284
      %v1286 = vrcp.pop %v1285
      %v1287 = vmul.f32 %v1282, %v1286
      %v1288 = vpack.c.bf16 %v1287, %v1287
      %s1289 = scalar_lea.vmem [#allocation3], 12
      %v1290 = vld [vmem:[%s1289] sm:$0xf]
      %v1292 = vsel %vm918, %v1288, 0
      %v1295 = vsel %vm954, %v1290, 0
      %1297 = vmatpush.bf16.msra.mxu0 0
      %1298 = vmatpush.bf16.msra.mxu0 0
      %1299 = vmatpush.bf16.msra.mxu0 0
      %1300 = vmatpush.bf16.msra.mxu0 0
      %1301 = vmatpush.bf16.msra.mxu0 0
      %1302 = vmatpush.bf16.msra.mxu0 0
      %1303 = vmatpush.bf16.msra.mxu0 0
      %1304 = vmatpush.bf16.msra.mxu0 %v1295
      %1305 = vmatmul.bf16.gmra.mxu0 %v1292
      %v1306 = vpop.f32.mrf.mxu0
      %v1307 = vadd.f32 0.0, %v1306
      %v1308 = vpop.f32.mrf.mxu0
      %1309 = vdwg.mxu0
      %v1310 = vpack.c.bf16 %v1307, %v1307
      %s1311 = scalar_lea.vmem %s7, 12
      %v1312 = vld [vmem:[%s1311] sm:$0xf]
      %v1314 = vsel %vm918, %v1310, 0
      %v1317 = vsel %vm954, %v1312, 0
      %1319 = vmatpush.bf16.msra.mxu0 0
      %1320 = vmatpush.bf16.msra.mxu0 0
      %1321 = vmatpush.bf16.msra.mxu0 0
      %1322 = vmatpush.bf16.msra.mxu0 0
      %1323 = vmatpush.bf16.msra.mxu0 0
      %1324 = vmatpush.bf16.msra.mxu0 0
      %1325 = vmatpush.bf16.msra.mxu0 0
      %1326 = vmatpush.bf16.msra.mxu0 %v1317
      %1327 = vmatmul.bf16.gmra.mxu0 %v1314
      %v1328 = vpop.f32.mrf.mxu0
      %v1329 = vadd.f32 0.0, %v1328
      %v1330 = vpop.f32.mrf.mxu0
      %1331 = vdwg.mxu0
      %v1332 = vadd.f32 %v1218, %v1329
      %v1333 = vld [vmem:[%s8] sm:$0x1]
      %v1335 = vperm.slane %v1333, 0
      %v1337 = vadd.f32 %v1332, %v1335
      %v1338 = vadd.f32 %v1337, %v876
      %v1339 = vsel %vm898, %v1338, 0.0
      %1340 = vadd.xlane.f32.xlu0 %v1339
      %v1341 = vpop.xlane.xlu0 %1340
      %v1342 = vrcp.pop 32.0
      %v1343 = vmul.f32 32.0, %v1342
      %v1344 = vsub.f32 1.0, %v1343
      %v1345 = vmul.f32 %v1342, %v1344
      %v1346 = vadd.f32 %v1342, %v1345
      %vm1347 = vweird.f32 %v1342
      %v1348 = vsel %vm1347, %v1342, %v1346
      %v1349 = vmul.f32 %v1341, %v1348
      %v1350 = vsub.f32 %v1338, %v1349
      %v1351 = vmul.f32 %v1350, %v1350
      %v1352 = vsel %vm898, %v1351, 0.0
      %1353 = vadd.xlane.f32.xlu0 %v1352
      %v1354 = vpop.xlane.xlu0 %1353
      %v1355 = vmul.f32 %v1354, %v1348
      %v1356 = vadd.f32 %v1355, 1e-05
      %v1357 = vrsqrt.pop %v1356
      %v1358 = vmul.f32 %v1357, %v1356
      %v1359 = vmul.f32 %v1358, %v1357
      %v1360 = vmul.f32 0.5, %v1359
      %v1361 = vsub.f32 1.5, %v1360
      %v1362 = vmul.f32 %v1357, %v1361
      %vm1363 = vweird.f32 %v1356
      %vm1364 = vweird.f32 %v1357
      %vm1365 = vmor %vm1363, %vm1364
      %v1366 = vsel %vm1365, %v1357, %v1362
      %v1367 = vmul.f32 %v1350, %v1366
      %v1368 = vld [vmem:[%s13] sm:$0x1]
      %v1370 = vperm.slane %v1368, 0
      %v1372 = vmul.f32 %v1367, %v1370
      %v1373 = vld [vmem:[%s14] sm:$0x1]
      %v1375 = vperm.slane %v1373, 0
      %v1377 = vadd.f32 %v1372, %v1375
      %v1378 = vpack.c.bf16 %v1377, %v1377
      %v1379 = vld [vmem:[%s9] sm:$0xf]
      %v1380 = vld [vmem:[%s9 + $0x4] sm:$0xf]
      %v1381 = vld [vmem:[%s9 + $0x8] sm:$0xf]
      %v1382 = vld [vmem:[%s9 + $0xc] sm:$0xf]
      %v1383 = vld [vmem:[%s10] sm:$0x1]
      %v1385 = vperm.slane %v1383, 0
      %v1391 = vunpack.c.l.b16 %v1379
      %v1392 = vunpack.c.l.b16 %v1380
      %v1393 = vunpack.c.l.b16 %v1381
      %v1394 = vunpack.c.l.b16 %v1382
      %v1395 = vpack.c.b16 %v1392, %v1391
      %v1396 = vpack.c.b16 %v1394, %v1393
      %v1400 = vsel %vm898, %v1378, 0
      %1402 = vmatpush.bf16.msra.mxu0 0
      %1403 = vmatpush.bf16.msra.mxu0 0
      %1404 = vmatpush.bf16.msra.mxu0 0
      %1405 = vmatpush.bf16.msra.mxu0 0
      %1406 = vmatpush.bf16.msra.mxu0 0
      %1407 = vmatpush.bf16.msra.mxu0 0
      %1408 = vmatpush.bf16.msra.mxu0 %v1396
      %1409 = vmatpush.bf16.msra.mxu0 %v1395
      %1410 = vmatmul.bf16.gmra.mxu0 %v1400
      %v1411 = vpop.f32.mrf.mxu0
      %v1412 = vadd.f32 %v1385, %v1411
      %v1413 = vpop.f32.mrf.mxu0
      %1414 = vdwg.mxu0
      %v1415 = vmul.f32 %v1412, 0.5
      %v1416 = vmul.f32 %v1412, 0.70710677
      %v1417 = vmul.f32 %v1416, %v1416
      %v1418 = vmin.f32 16.0, %v1417
      %v1419 = vmul.f32 %v1418, 2.1237322e-06
      %v1420 = vadd.f32 %v1419, 0.00028619796
      %v1421 = vmul.f32 %v1418, %v1420
      %v1422 = vadd.f32 %v1421, 0.0036580483
      %v1423 = vmul.f32 %v1418, %v1422
      %v1424 = vadd.f32 %v1423, 0.05243302
      %v1425 = vmul.f32 %v1418, %v1424
      %v1426 = vadd.f32 %v1425, 0.18741608
      %v1427 = vmul.f32 %v1418, %v1426
      %v1428 = vadd.f32 %v1427, 1.1283791
      %v1429 = vmul.f32 %v1416, %v1428
      %v1430 = vmul.f32 %v1418, 3.8918573e-05
      %v1431 = vadd.f32 %v1430, 0.001143296
      %v1432 = vmul.f32 %v1418, %v1431
      %v1433 = vadd.f32 %v1432, 0.014752088
      %v1434 = vmul.f32 %v1418, %v1433
      %v1435 = vadd.f32 %v1434, 0.112945676
      %v1436 = vmul.f32 %v1418, %v1435
      %v1437 = vadd.f32 %v1436, 0.4994258
      %v1438 = vmul.f32 %v1418, %v1437
      %v1439 = vadd.f32 %v1438, 1.0
      %v1440 = vrcp.pop %v1439
      %v1441 = vmul.f32 %v1439, %v1440
      %v1442 = vsub.f32 1.0, %v1441
      %v1443 = vmul.f32 %v1440, %v1442
      %v1444 = vadd.f32 %v1440, %v1443
      %vm1445 = vweird.f32 %v1439
      %vm1446 = vweird.f32 %v1440
      %vm1447 = vmor %vm1445, %vm1446
      %v1448 = vsel %vm1447, %v1440, %v1444
      %v1449 = vand.u32 2147483647, %v1439
      %vm1450 = vcmp.eq.f32.partialorder %v1449, 8.507059e+37
      %v1451 = vand.u32 %v1439, 2147483648
      %v1452 = vor.u32 1.1754944e-38, %v1451
      %v1453 = vsel %vm1450, %v1452, %v1448
      %v1454 = vmul.f32 %v1429, %v1453
      %v1455 = vmin.f32 %v1454, 1.0
      %v1456 = vmax.f32 %v1455, -1.0
      %v1457 = vadd.f32 %v1456, 1.0
      %v1458 = vmul.f32 %v1415, %v1457
      %v1459 = vpack.c.bf16 %v1458, %v1458
      %v1460 = vld [vmem:[%s11] sm:$0xf]
      %v1461 = vld [vmem:[%s11 + $0x4] sm:$0xf]
      %v1462 = vld [vmem:[%s11 + $0x8] sm:$0xf]
      %v1463 = vld [vmem:[%s11 + $0xc] sm:$0xf]
      %v1464 = vld [vmem:[%s12] sm:$0x1]
      %v1466 = vperm.slane %v1464, 0
      %v1472 = vunpack.c.l.b16 %v1460
      %v1473 = vunpack.c.l.b16 %v1461
      %v1474 = vunpack.c.l.b16 %v1462
      %v1475 = vunpack.c.l.b16 %v1463
      %v1476 = vpack.c.b16 %v1473, %v1472
      %v1477 = vpack.c.b16 %v1475, %v1474
      %v1481 = vsel %vm898, %v1459, 0
      %1483 = vmatpush.bf16.msra.mxu0 0
      %1484 = vmatpush.bf16.msra.mxu0 0
      %1485 = vmatpush.bf16.msra.mxu0 0
      %1486 = vmatpush.bf16.msra.mxu0 0
      %1487 = vmatpush.bf16.msra.mxu0 0
      %1488 = vmatpush.bf16.msra.mxu0 0
      %1489 = vmatpush.bf16.msra.mxu0 %v1477
      %1490 = vmatpush.bf16.msra.mxu0 %v1476
      %1491 = vmatmul.bf16.gmra.mxu0 %v1481
      %v1492 = vpop.f32.mrf.mxu0
      %v1493 = vadd.f32 %v1466, %v1492
      %v1494 = vpop.f32.mrf.mxu0
      %1495 = vdwg.mxu0
      %v1496 = vadd.f32 %v1493, %v1377
      %v1497 = vsel %vm898, %v1496, 0.0
      %1498 = vadd.xlane.f32.xlu0 %v1497
      %v1499 = vpop.xlane.xlu0 %1498
      %v1500 = vmul.f32 %v1499, %v1348
      %v1501 = vsub.f32 %v1496, %v1500
      %v1502 = vmul.f32 %v1501, %v1501
      %v1503 = vsel %vm898, %v1502, 0.0
      %1504 = vadd.xlane.f32.xlu0 %v1503
      %v1505 = vpop.xlane.xlu0 %1504
      %v1506 = vmul.f32 %v1505, %v1348
      %v1507 = vadd.f32 %v1506, 1e-05
      %v1508 = vrsqrt.pop %v1507
      %v1509 = vmul.f32 %v1508, %v1507
      %v1510 = vmul.f32 %v1509, %v1508
      %v1511 = vmul.f32 0.5, %v1510
      %v1512 = vsub.f32 1.5, %v1511
      %v1513 = vmul.f32 %v1508, %v1512
      %vm1514 = vweird.f32 %v1507
      %vm1515 = vweird.f32 %v1508
      %vm1516 = vmor %vm1514, %vm1515
      %v1517 = vsel %vm1516, %v1508, %v1513
      %v1518 = vmul.f32 %v1501, %v1517
      %v1519 = vld [vmem:[%s15] sm:$0x1]
      %v1521 = vperm.slane %v1519, 0
      %v1523 = vmul.f32 %v1518, %v1521
      %v1524 = vld [vmem:[%s16] sm:$0x1]
      %v1526 = vperm.slane %v1524, 0
      %v1528 = vadd.f32 %v1523, %v1526
      %1529 = vst.msk [vmem:[%s563] sm:$0xff] %vm898, %v1528
      %p1530 = scmp.lt.s32.totalorder %s32, 1
      %s1531 = scalar_select %p1530, %s32, 1
      %p1532 = scmp.lt.s32.totalorder %s33, 0
      %s1533 = scalar_select %p1532, %s33, 0
      %s1534 = sadd.s32 %s1533, %s1531
      %s1535 = smul.addr %s1534, 8
      %s1536 = scalar_lea.vmem %s17, %s1535
      // Predicated region
      $region93: #{transformer_encoder_pallas.2} parent=87 // pred_check
        %p1537 = pneg %p422
      $region94: #{transformer_encoder_pallas.2} parent=87 // pred_check_branch
        %1539 = sbr.rel (%p1537) target = $region96
      $region95: #{transformer_encoder_pallas.2} parent=87 // pred_region
        _
      $region96: #{transformer_encoder_pallas.2} parent=87 // pred_fallthru
        _
    $region88: #{transformer_encoder_pallas.2} parent=5 // pred_fallthru
      _
    %p1540 = scmp.le.s32.totalorder 2, %s23
    // Predicated region
    $region97: #{transformer_encoder_pallas.2} parent=5 // pred_check
      %p1541 = pneg %p1540
    $region98: #{transformer_encoder_pallas.2} parent=5 // pred_check_branch
      %1543 = sbr.rel (%p1541) target = $region100
    $region99: #{transformer_encoder_pallas.2} parent=5 // pred_region
      %s1544 = ssub.s32 %s23, 2
      // Predicated region
      $region101: #{transformer_encoder_pallas.2} parent=99 // pred_check
        %p1545 = pneg %p428
      $region102: #{transformer_encoder_pallas.2} parent=99 // pred_check_branch
        %1547 = sbr.rel (%p1545) target = $region104
      $region103: #{transformer_encoder_pallas.2} parent=99 // pred_region
        %p1548 = scmp.lt.s32.totalorder %s34, 1
        %s1549 = scalar_select %p1548, %s34, 1
        %p1550 = scmp.lt.s32.totalorder %s35, 0
        %s1551 = scalar_select %p1550, %s35, 0
        %s1552 = sadd.s32 %s1551, %s1549
        %s1553 = smul.addr %s1552, 8
        %s1554 = scalar_lea.vmem %s17, %s1553
      $region104: #{transformer_encoder_pallas.2} parent=99 // pred_fallthru
        _
    $region100: #{transformer_encoder_pallas.2} parent=5 // pred_fallthru
      _
  $region6: #{transformer_encoder_pallas.2} parent=0 // loop_footer
    %s27 = sadd.s32 1, %s23
  $region7: #{transformer_encoder_pallas.2} parent=0 // loop_footer_branch
    %22 = sbr.rel target = $region3
  $region8: #{transformer_encoder_pallas.2} parent=0 // loop_exit
    _

// kernel: transformer_encoder_pallas.3
$region0: #{transformer_encoder_pallas.3}
  #allocation0 [shape = 'u32[]', space=smem, size = 0x4, offset = 0x4, fixed_abs, tag = 'smem constant byte address 0x4 - core index']
  #allocation1 [shape = 'u32[72,128]{1,0:T(1,128)}', space=vmem, size = 0x9000, scoped, tag = 'internal scratch']
  #allocation2 [shape = 'bf16[4,8,8]{2,1,0:T(8,128)(2,1)}', space=vmem, size = 0x2000, scoped, tag = 'scratch operand']
  #allocation3 [shape = 'bf16[4,8,8]{2,1,0:T(8,128)(2,1)}', space=vmem, size = 0x2000, scoped, tag = 'scratch operand']
  %s0 = inlined_call_operand.vmem [shape: f32[2,8,32], index: 0, kind: input, shape index: {}]
  %s1 = inlined_call_operand.vmem [shape: bf16[4,32,8], index: 1, kind: input, shape index: {}]
  %s2 = inlined_call_operand.vmem [shape: f32[4,1,8], index: 2, kind: input, shape index: {}]
  %s3 = inlined_call_operand.vmem [shape: bf16[4,32,8], index: 3, kind: input, shape index: {}]
  %s4 = inlined_call_operand.vmem [shape: f32[4,1,8], index: 4, kind: input, shape index: {}]
  %s5 = inlined_call_operand.vmem [shape: bf16[4,32,8], index: 5, kind: input, shape index: {}]
  %s6 = inlined_call_operand.vmem [shape: f32[4,1,8], index: 6, kind: input, shape index: {}]
  %s7 = inlined_call_operand.vmem [shape: bf16[4,8,32], index: 7, kind: input, shape index: {}]
  %s8 = inlined_call_operand.vmem [shape: f32[1,32], index: 8, kind: input, shape index: {}]
  %s9 = inlined_call_operand.vmem [shape: bf16[32,32], index: 9, kind: input, shape index: {}]
  %s10 = inlined_call_operand.vmem [shape: f32[1,32], index: 10, kind: input, shape index: {}]
  %s11 = inlined_call_operand.vmem [shape: bf16[32,32], index: 11, kind: input, shape index: {}]
  %s12 = inlined_call_operand.vmem [shape: f32[1,32], index: 12, kind: input, shape index: {}]
  %s13 = inlined_call_operand.vmem [shape: f32[1,32], index: 13, kind: input, shape index: {}]
  %s14 = inlined_call_operand.vmem [shape: f32[1,32], index: 14, kind: input, shape index: {}]
  %s15 = inlined_call_operand.vmem [shape: f32[1,32], index: 15, kind: input, shape index: {}]
  %s16 = inlined_call_operand.vmem [shape: f32[1,32], index: 16, kind: input, shape index: {}]
  %s17 = inlined_call_operand.hbm [shape: f32[2,8,32], index: 17, kind: output, shape index: {}]
  %s18 = sld [smem:[#allocation0]]
  $region105: #{transformer_encoder_pallas.3} parent=0
    _
  %s20 = ssub.s32 1, %s18
  %s21 = scalar_select 0, %s20, %s18
  $region1: #{transformer_encoder_pallas.3} parent=0
    #allocation4 [shape = 'u8[8192]{0}', space=vmem, size = 0x2000, scoped, tag = 'output window, operand 0']
    #allocation5 [shape = 's32[2]{0}', space=sflag, size = 0x8, scoped, tag = 'scoped memory for transformer_encoder_pallas.3']
    %22 = vsyncpa [#allocation5], 0
    %s23 = scalar_lea.sflag [#allocation5], 1
    %24 = vsyncpa %s23, 0
    loop: start=0, step=1, limit=4
    $region2: #{transformer_encoder_pallas.3} parent=1 // loop_pre_header
      _
    $region3: #{transformer_encoder_pallas.3} parent=1 // loop_header
      %s26 = sphi 0, %s30
      %p27 = scmp.ge.s32.totalorder %s26, 4
      %s33 = sphi 0, %s45
      %s34 = sphi 0, %s41
      %s35 = sphi 0, %s33
      %s36 = sphi 0, %s34
      %s37 = sphi 0, %s35
      %s38 = sphi 0, %s36
      %s48 = sphi 0, %s50
      %s51 = sphi 0, %s48
      %s52 = sphi 0, %s51
      %s68 = sphi 0, %s52
      %s72 = sphi 0, %s72
      %s74 = sphi 0, %s72
      %s75 = sphi 0, %s74
      %s89 = sphi 0, %s75
      %s93 = sphi 0, %s93
      %s95 = sphi 0, %s93
      %s96 = sphi 0, %s95
      %s110 = sphi 0, %s96
      %s114 = sphi 0, %s114
      %s116 = sphi 0, %s114
      %s117 = sphi 0, %s116
      %s131 = sphi 0, %s117
      %s135 = sphi 0, %s135
      %s137 = sphi 0, %s135
      %s138 = sphi 0, %s137
      %s152 = sphi 0, %s138
      %s156 = sphi 0, %s156
      %s158 = sphi 0, %s156
      %s159 = sphi 0, %s158
      %s173 = sphi 0, %s159
      %s177 = sphi 0, %s177
      %s179 = sphi 0, %s177
      %s180 = sphi 0, %s179
      %s194 = sphi 0, %s180
      %s198 = sphi 0, %s198
      %s200 = sphi 0, %s198
      %s201 = sphi 0, %s200
      %s215 = sphi 0, %s201
      %s219 = sphi 0, %s219
      %s221 = sphi 0, %s219
      %s222 = sphi 0, %s221
      %s236 = sphi 0, %s222
      %s240 = sphi 0, %s240
      %s242 = sphi 0, %s240
      %s243 = sphi 0, %s242
      %s257 = sphi 0, %s243
      %s261 = sphi 0, %s261
      %s263 = sphi 0, %s261
      %s264 = sphi 0, %s263
      %s278 = sphi 0, %s264
      %s282 = sphi 0, %s282
      %s284 = sphi 0, %s282
      %s285 = sphi 0, %s284
      %s299 = sphi 0, %s285
      %s303 = sphi 0, %s303
      %s305 = sphi 0, %s303
      %s306 = sphi 0, %s305
      %s320 = sphi 0, %s306
      %s324 = sphi 0, %s324
      %s326 = sphi 0, %s324
      %s327 = sphi 0, %s326
      %s341 = sphi 0, %s327
      %s345 = sphi 0, %s345
      %s347 = sphi 0, %s345
      %s348 = sphi 0, %s347
      %s362 = sphi 0, %s348
      %s366 = sphi 0, %s366
      %s368 = sphi 0, %s366
      %s369 = sphi 0, %s368
      %s383 = sphi 0, %s369
      %s387 = sphi 0, %s387
      %s389 = sphi 0, %s387
      %s390 = sphi 0, %s389
      %s404 = sphi 0, %s390
      %s412 = sphi 0, %s414
      %s415 = sphi 0, %s412
      %s416 = sphi 0, %s415
      %s432 = sphi 0, %s416
    $region4: #{transformer_encoder_pallas.3} parent=1 // loop_header_branch
      %29 = sbr.rel (%p27) target = $region8
    $region5: #{transformer_encoder_pallas.3} parent=1 // loop_body
      %s31 = ssub.s32 %s26, 1
      %s32 = ssub.s32 %s26, 2
      %s39 = sadd.s32 1, %s34
      %p40 = scmp.ge.s32.totalorder %s39, 1
      %s41 = scalar_select %p40, 0, %s39
      %s42 = sadd.s32 1, %s33
      %s43 = scalar_select %p40, %s42, %s33
      %p44 = scmp.ge.s32.totalorder %s43, 2
      %s45 = scalar_select %p44, 0, %s43
      %s46 = ssub.s32 %s33, %s45
      %p47 = scmp.eq.s32.totalorder %s46, 0
      %s49 = sadd.s32 %s48, 1
      %s50 = scalar_select %p47, %s48, %s49
      %p53 = pneg %p47
      %p54 = scmp.eq.s32.totalorder %s26, 1
      %p55 = por %p53, %p54
      %p56 = scmp.ne.s32.totalorder %s48, %s51
      %p57 = scmp.eq.s32.totalorder %s26, 0
      %p58 = por %p56, %p57
      %p59 = scmp.ne.s32.totalorder %s48, %s51
      %p60 = scmp.eq.s32.totalorder %s31, 1
      %p61 = por %p59, %p60
      %p62 = scmp.ne.s32.totalorder %s51, %s52
      %p63 = scmp.eq.s32.totalorder %s31, 0
      %p64 = por %p62, %p63
      %p65 = scmp.ne.s32.totalorder %s51, %s52
      %p66 = scmp.eq.s32.totalorder %s32, 1
      %p67 = por %p65, %p66
      %p69 = scmp.ne.s32.totalorder %s52, %s68
      %p70 = scmp.eq.s32.totalorder %s32, 0
      %p71 = por %p69, %p70
      %s73 = sadd.s32 %s72, 1
      %p76 = scmp.eq.s32.totalorder %s26, 1
      %p77 = scmp.ne.s32.totalorder %s72, %s74
      %p78 = scmp.eq.s32.totalorder %s26, 0
      %p79 = por %p77, %p78
      %p80 = scmp.ne.s32.totalorder %s72, %s74
      %p81 = scmp.eq.s32.totalorder %s31, 1
      %p82 = por %p80, %p81
      %p83 = scmp.ne.s32.totalorder %s74, %s75
      %p84 = scmp.eq.s32.totalorder %s31, 0
      %p85 = por %p83, %p84
      %p86 = scmp.ne.s32.totalorder %s74, %s75
      %p87 = scmp.eq.s32.totalorder %s32, 1
      %p88 = por %p86, %p87
      %p90 = scmp.ne.s32.totalorder %s75, %s89
      %p91 = scmp.eq.s32.totalorder %s32, 0
      %p92 = por %p90, %p91
      %s94 = sadd.s32 %s93, 1
      %p97 = scmp.eq.s32.totalorder %s26, 1
      %p98 = scmp.ne.s32.totalorder %s93, %s95
      %p99 = scmp.eq.s32.totalorder %s26, 0
      %p100 = por %p98, %p99
      %p101 = scmp.ne.s32.totalorder %s93, %s95
      %p102 = scmp.eq.s32.totalorder %s31, 1
      %p103 = por %p101, %p102
      %p104 = scmp.ne.s32.totalorder %s95, %s96
      %p105 = scmp.eq.s32.totalorder %s31, 0
      %p106 = por %p104, %p105
      %p107 = scmp.ne.s32.totalorder %s95, %s96
      %p108 = scmp.eq.s32.totalorder %s32, 1
      %p109 = por %p107, %p108
      %p111 = scmp.ne.s32.totalorder %s96, %s110
      %p112 = scmp.eq.s32.totalorder %s32, 0
      %p113 = por %p111, %p112
      %s115 = sadd.s32 %s114, 1
      %p118 = scmp.eq.s32.totalorder %s26, 1
      %p119 = scmp.ne.s32.totalorder %s114, %s116
      %p120 = scmp.eq.s32.totalorder %s26, 0
      %p121 = por %p119, %p120
      %p122 = scmp.ne.s32.totalorder %s114, %s116
      %p123 = scmp.eq.s32.totalorder %s31, 1
      %p124 = por %p122, %p123
      %p125 = scmp.ne.s32.totalorder %s116, %s117
      %p126 = scmp.eq.s32.totalorder %s31, 0
      %p127 = por %p125, %p126
      %p128 = scmp.ne.s32.totalorder %s116, %s117
      %p129 = scmp.eq.s32.totalorder %s32, 1
      %p130 = por %p128, %p129
      %p132 = scmp.ne.s32.totalorder %s117, %s131
      %p133 = scmp.eq.s32.totalorder %s32, 0
      %p134 = por %p132, %p133
      %s136 = sadd.s32 %s135, 1
      %p139 = scmp.eq.s32.totalorder %s26, 1
      %p140 = scmp.ne.s32.totalorder %s135, %s137
      %p141 = scmp.eq.s32.totalorder %s26, 0
      %p142 = por %p140, %p141
      %p143 = scmp.ne.s32.totalorder %s135, %s137
      %p144 = scmp.eq.s32.totalorder %s31, 1
      %p145 = por %p143, %p144
      %p146 = scmp.ne.s32.totalorder %s137, %s138
      %p147 = scmp.eq.s32.totalorder %s31, 0
      %p148 = por %p146, %p147
      %p149 = scmp.ne.s32.totalorder %s137, %s138
      %p150 = scmp.eq.s32.totalorder %s32, 1
      %p151 = por %p149, %p150
      %p153 = scmp.ne.s32.totalorder %s138, %s152
      %p154 = scmp.eq.s32.totalorder %s32, 0
      %p155 = por %p153, %p154
      %s157 = sadd.s32 %s156, 1
      %p160 = scmp.eq.s32.totalorder %s26, 1
      %p161 = scmp.ne.s32.totalorder %s156, %s158
      %p162 = scmp.eq.s32.totalorder %s26, 0
      %p163 = por %p161, %p162
      %p164 = scmp.ne.s32.totalorder %s156, %s158
      %p165 = scmp.eq.s32.totalorder %s31, 1
      %p166 = por %p164, %p165
      %p167 = scmp.ne.s32.totalorder %s158, %s159
      %p168 = scmp.eq.s32.totalorder %s31, 0
      %p169 = por %p167, %p168
      %p170 = scmp.ne.s32.totalorder %s158, %s159
      %p171 = scmp.eq.s32.totalorder %s32, 1
      %p172 = por %p170, %p171
      %p174 = scmp.ne.s32.totalorder %s159, %s173
      %p175 = scmp.eq.s32.totalorder %s32, 0
      %p176 = por %p174, %p175
      %s178 = sadd.s32 %s177, 1
      %p181 = scmp.eq.s32.totalorder %s26, 1
      %p182 = scmp.ne.s32.totalorder %s177, %s179
      %p183 = scmp.eq.s32.totalorder %s26, 0
      %p184 = por %p182, %p183
      %p185 = scmp.ne.s32.totalorder %s177, %s179
      %p186 = scmp.eq.s32.totalorder %s31, 1
      %p187 = por %p185, %p186
      %p188 = scmp.ne.s32.totalorder %s179, %s180
      %p189 = scmp.eq.s32.totalorder %s31, 0
      %p190 = por %p188, %p189
      %p191 = scmp.ne.s32.totalorder %s179, %s180
      %p192 = scmp.eq.s32.totalorder %s32, 1
      %p193 = por %p191, %p192
      %p195 = scmp.ne.s32.totalorder %s180, %s194
      %p196 = scmp.eq.s32.totalorder %s32, 0
      %p197 = por %p195, %p196
      %s199 = sadd.s32 %s198, 1
      %p202 = scmp.eq.s32.totalorder %s26, 1
      %p203 = scmp.ne.s32.totalorder %s198, %s200
      %p204 = scmp.eq.s32.totalorder %s26, 0
      %p205 = por %p203, %p204
      %p206 = scmp.ne.s32.totalorder %s198, %s200
      %p207 = scmp.eq.s32.totalorder %s31, 1
      %p208 = por %p206, %p207
      %p209 = scmp.ne.s32.totalorder %s200, %s201
      %p210 = scmp.eq.s32.totalorder %s31, 0
      %p211 = por %p209, %p210
      %p212 = scmp.ne.s32.totalorder %s200, %s201
      %p213 = scmp.eq.s32.totalorder %s32, 1
      %p214 = por %p212, %p213
      %p216 = scmp.ne.s32.totalorder %s201, %s215
      %p217 = scmp.eq.s32.totalorder %s32, 0
      %p218 = por %p216, %p217
      %s220 = sadd.s32 %s219, 1
      %p223 = scmp.eq.s32.totalorder %s26, 1
      %p224 = scmp.ne.s32.totalorder %s219, %s221
      %p225 = scmp.eq.s32.totalorder %s26, 0
      %p226 = por %p224, %p225
      %p227 = scmp.ne.s32.totalorder %s219, %s221
      %p228 = scmp.eq.s32.totalorder %s31, 1
      %p229 = por %p227, %p228
      %p230 = scmp.ne.s32.totalorder %s221, %s222
      %p231 = scmp.eq.s32.totalorder %s31, 0
      %p232 = por %p230, %p231
      %p233 = scmp.ne.s32.totalorder %s221, %s222
      %p234 = scmp.eq.s32.totalorder %s32, 1
      %p235 = por %p233, %p234
      %p237 = scmp.ne.s32.totalorder %s222, %s236
      %p238 = scmp.eq.s32.totalorder %s32, 0
      %p239 = por %p237, %p238
      %s241 = sadd.s32 %s240, 1
      %p244 = scmp.eq.s32.totalorder %s26, 1
      %p245 = scmp.ne.s32.totalorder %s240, %s242
      %p246 = scmp.eq.s32.totalorder %s26, 0
      %p247 = por %p245, %p246
      %p248 = scmp.ne.s32.totalorder %s240, %s242
      %p249 = scmp.eq.s32.totalorder %s31, 1
      %p250 = por %p248, %p249
      %p251 = scmp.ne.s32.totalorder %s242, %s243
      %p252 = scmp.eq.s32.totalorder %s31, 0
      %p253 = por %p251, %p252
      %p254 = scmp.ne.s32.totalorder %s242, %s243
      %p255 = scmp.eq.s32.totalorder %s32, 1
      %p256 = por %p254, %p255
      %p258 = scmp.ne.s32.totalorder %s243, %s257
      %p259 = scmp.eq.s32.totalorder %s32, 0
      %p260 = por %p258, %p259
      %s262 = sadd.s32 %s261, 1
      %p265 = scmp.eq.s32.totalorder %s26, 1
      %p266 = scmp.ne.s32.totalorder %s261, %s263
      %p267 = scmp.eq.s32.totalorder %s26, 0
      %p268 = por %p266, %p267
      %p269 = scmp.ne.s32.totalorder %s261, %s263
      %p270 = scmp.eq.s32.totalorder %s31, 1
      %p271 = por %p269, %p270
      %p272 = scmp.ne.s32.totalorder %s263, %s264
      %p273 = scmp.eq.s32.totalorder %s31, 0
      %p274 = por %p272, %p273
      %p275 = scmp.ne.s32.totalorder %s263, %s264
      %p276 = scmp.eq.s32.totalorder %s32, 1
      %p277 = por %p275, %p276
      %p279 = scmp.ne.s32.totalorder %s264, %s278
      %p280 = scmp.eq.s32.totalorder %s32, 0
      %p281 = por %p279, %p280
      %s283 = sadd.s32 %s282, 1
      %p286 = scmp.eq.s32.totalorder %s26, 1
      %p287 = scmp.ne.s32.totalorder %s282, %s284
      %p288 = scmp.eq.s32.totalorder %s26, 0
      %p289 = por %p287, %p288
      %p290 = scmp.ne.s32.totalorder %s282, %s284
      %p291 = scmp.eq.s32.totalorder %s31, 1
      %p292 = por %p290, %p291
      %p293 = scmp.ne.s32.totalorder %s284, %s285
      %p294 = scmp.eq.s32.totalorder %s31, 0
      %p295 = por %p293, %p294
      %p296 = scmp.ne.s32.totalorder %s284, %s285
      %p297 = scmp.eq.s32.totalorder %s32, 1
      %p298 = por %p296, %p297
      %p300 = scmp.ne.s32.totalorder %s285, %s299
      %p301 = scmp.eq.s32.totalorder %s32, 0
      %p302 = por %p300, %p301
      %s304 = sadd.s32 %s303, 1
      %p307 = scmp.eq.s32.totalorder %s26, 1
      %p308 = scmp.ne.s32.totalorder %s303, %s305
      %p309 = scmp.eq.s32.totalorder %s26, 0
      %p310 = por %p308, %p309
      %p311 = scmp.ne.s32.totalorder %s303, %s305
      %p312 = scmp.eq.s32.totalorder %s31, 1
      %p313 = por %p311, %p312
      %p314 = scmp.ne.s32.totalorder %s305, %s306
      %p315 = scmp.eq.s32.totalorder %s31, 0
      %p316 = por %p314, %p315
      %p317 = scmp.ne.s32.totalorder %s305, %s306
      %p318 = scmp.eq.s32.totalorder %s32, 1
      %p319 = por %p317, %p318
      %p321 = scmp.ne.s32.totalorder %s306, %s320
      %p322 = scmp.eq.s32.totalorder %s32, 0
      %p323 = por %p321, %p322
      %s325 = sadd.s32 %s324, 1
      %p328 = scmp.eq.s32.totalorder %s26, 1
      %p329 = scmp.ne.s32.totalorder %s324, %s326
      %p330 = scmp.eq.s32.totalorder %s26, 0
      %p331 = por %p329, %p330
      %p332 = scmp.ne.s32.totalorder %s324, %s326
      %p333 = scmp.eq.s32.totalorder %s31, 1
      %p334 = por %p332, %p333
      %p335 = scmp.ne.s32.totalorder %s326, %s327
      %p336 = scmp.eq.s32.totalorder %s31, 0
      %p337 = por %p335, %p336
      %p338 = scmp.ne.s32.totalorder %s326, %s327
      %p339 = scmp.eq.s32.totalorder %s32, 1
      %p340 = por %p338, %p339
      %p342 = scmp.ne.s32.totalorder %s327, %s341
      %p343 = scmp.eq.s32.totalorder %s32, 0
      %p344 = por %p342, %p343
      %s346 = sadd.s32 %s345, 1
      %p349 = scmp.eq.s32.totalorder %s26, 1
      %p350 = scmp.ne.s32.totalorder %s345, %s347
      %p351 = scmp.eq.s32.totalorder %s26, 0
      %p352 = por %p350, %p351
      %p353 = scmp.ne.s32.totalorder %s345, %s347
      %p354 = scmp.eq.s32.totalorder %s31, 1
      %p355 = por %p353, %p354
      %p356 = scmp.ne.s32.totalorder %s347, %s348
      %p357 = scmp.eq.s32.totalorder %s31, 0
      %p358 = por %p356, %p357
      %p359 = scmp.ne.s32.totalorder %s347, %s348
      %p360 = scmp.eq.s32.totalorder %s32, 1
      %p361 = por %p359, %p360
      %p363 = scmp.ne.s32.totalorder %s348, %s362
      %p364 = scmp.eq.s32.totalorder %s32, 0
      %p365 = por %p363, %p364
      %s367 = sadd.s32 %s366, 1
      %p370 = scmp.eq.s32.totalorder %s26, 1
      %p371 = scmp.ne.s32.totalorder %s366, %s368
      %p372 = scmp.eq.s32.totalorder %s26, 0
      %p373 = por %p371, %p372
      %p374 = scmp.ne.s32.totalorder %s366, %s368
      %p375 = scmp.eq.s32.totalorder %s31, 1
      %p376 = por %p374, %p375
      %p377 = scmp.ne.s32.totalorder %s368, %s369
      %p378 = scmp.eq.s32.totalorder %s31, 0
      %p379 = por %p377, %p378
      %p380 = scmp.ne.s32.totalorder %s368, %s369
      %p381 = scmp.eq.s32.totalorder %s32, 1
      %p382 = por %p380, %p381
      %p384 = scmp.ne.s32.totalorder %s369, %s383
      %p385 = scmp.eq.s32.totalorder %s32, 0
      %p386 = por %p384, %p385
      %s388 = sadd.s32 %s387, 1
      %p391 = scmp.eq.s32.totalorder %s26, 1
      %p392 = scmp.ne.s32.totalorder %s387, %s389
      %p393 = scmp.eq.s32.totalorder %s26, 0
      %p394 = por %p392, %p393
      %p395 = scmp.ne.s32.totalorder %s387, %s389
      %p396 = scmp.eq.s32.totalorder %s31, 1
      %p397 = por %p395, %p396
      %p398 = scmp.ne.s32.totalorder %s389, %s390
      %p399 = scmp.eq.s32.totalorder %s31, 0
      %p400 = por %p398, %p399
      %p401 = scmp.ne.s32.totalorder %s389, %s390
      %p402 = scmp.eq.s32.totalorder %s32, 1
      %p403 = por %p401, %p402
      %p405 = scmp.ne.s32.totalorder %s390, %s404
      %p406 = scmp.eq.s32.totalorder %s32, 0
      %p407 = por %p405, %p406
      %s408 = ssub.s32 %s33, %s45
      %s409 = ssub.s32 %s34, %s41
      %s410 = sor.u32 %s408, %s409
      %p411 = scmp.eq.s32.totalorder %s410, 0
      %s413 = sadd.s32 %s412, 1
      %s414 = scalar_select %p411, %s412, %s413
      %p417 = pneg %p411
      %p418 = scmp.eq.s32.totalorder %s26, 1
      %p419 = por %p417, %p418
      %p420 = scmp.ne.s32.totalorder %s412, %s415
      %p421 = scmp.eq.s32.totalorder %s26, 0
      %p422 = por %p420, %p421
      %p423 = scmp.ne.s32.totalorder %s412, %s415
      %p424 = scmp.eq.s32.totalorder %s31, 1
      %p425 = por %p423, %p424
      %p426 = scmp.ne.s32.totalorder %s415, %s416
      %p427 = scmp.eq.s32.totalorder %s31, 0
      %p428 = por %p426, %p427
      %p429 = scmp.ne.s32.totalorder %s415, %s416
      %p430 = scmp.eq.s32.totalorder %s32, 1
      %p431 = por %p429, %p430
      %p433 = scmp.ne.s32.totalorder %s416, %s432
      %p434 = scmp.eq.s32.totalorder %s32, 0
      %p435 = por %p433, %p434
      %p436 = scmp.le.s32.totalorder 1, %s26
      %p437 = scmp.lt.s32.totalorder %s26, 3
      %p438 = pnand %p436, %p437
      %p439 = pneg %p438
      // Predicated region
      $region9: #{transformer_encoder_pallas.3} parent=5 // pred_check
        _
      $region10: #{transformer_encoder_pallas.3} parent=5 // pred_check_branch
        %441 = sbr.rel (%p438) target = $region12
      $region11: #{transformer_encoder_pallas.3} parent=5 // pred_region
        %s442 = ssub.s32 %s26, 1
        // Predicated region
        $region13: #{transformer_encoder_pallas.3} parent=11 // pred_check
          %p443 = pneg %p85
        $region14: #{transformer_encoder_pallas.3} parent=11 // pred_check_branch
          %445 = sbr.rel (%p443) target = $region16
        $region15: #{transformer_encoder_pallas.3} parent=11 // pred_region
          _
        $region16: #{transformer_encoder_pallas.3} parent=11 // pred_fallthru
          _
        // Predicated region
        $region17: #{transformer_encoder_pallas.3} parent=11 // pred_check
          %p446 = pneg %p106
        $region18: #{transformer_encoder_pallas.3} parent=11 // pred_check_branch
          %448 = sbr.rel (%p446) target = $region20
        $region19: #{transformer_encoder_pallas.3} parent=11 // pred_region
          _
        $region20: #{transformer_encoder_pallas.3} parent=11 // pred_fallthru
          _
        // Predicated region
        $region21: #{transformer_encoder_pallas.3} parent=11 // pred_check
          %p449 = pneg %p127
        $region22: #{transformer_encoder_pallas.3} parent=11 // pred_check_branch
          %451 = sbr.rel (%p449) target = $region24
        $region23: #{transformer_encoder_pallas.3} parent=11 // pred_region
          _
        $region24: #{transformer_encoder_pallas.3} parent=11 // pred_fallthru
          _
        // Predicated region
        $region25: #{transformer_encoder_pallas.3} parent=11 // pred_check
          %p452 = pneg %p148
        $region26: #{transformer_encoder_pallas.3} parent=11 // pred_check_branch
          %454 = sbr.rel (%p452) target = $region28
        $region27: #{transformer_encoder_pallas.3} parent=11 // pred_region
          _
        $region28: #{transformer_encoder_pallas.3} parent=11 // pred_fallthru
          _
        // Predicated region
        $region29: #{transformer_encoder_pallas.3} parent=11 // pred_check
          %p455 = pneg %p169
        $region30: #{transformer_encoder_pallas.3} parent=11 // pred_check_branch
          %457 = sbr.rel (%p455) target = $region32
        $region31: #{transformer_encoder_pallas.3} parent=11 // pred_region
          _
        $region32: #{transformer_encoder_pallas.3} parent=11 // pred_fallthru
          _
        // Predicated region
        $region33: #{transformer_encoder_pallas.3} parent=11 // pred_check
          %p458 = pneg %p190
        $region34: #{transformer_encoder_pallas.3} parent=11 // pred_check_branch
          %460 = sbr.rel (%p458) target = $region36
        $region35: #{transformer_encoder_pallas.3} parent=11 // pred_region
          _
        $region36: #{transformer_encoder_pallas.3} parent=11 // pred_fallthru
          _
        // Predicated region
        $region37: #{transformer_encoder_pallas.3} parent=11 // pred_check
          %p461 = pneg %p211
        $region38: #{transformer_encoder_pallas.3} parent=11 // pred_check_branch
          %463 = sbr.rel (%p461) target = $region40
        $region39: #{transformer_encoder_pallas.3} parent=11 // pred_region
          _
        $region40: #{transformer_encoder_pallas.3} parent=11 // pred_fallthru
          _
        // Predicated region
        $region41: #{transformer_encoder_pallas.3} parent=11 // pred_check
          %p464 = pneg %p232
        $region42: #{transformer_encoder_pallas.3} parent=11 // pred_check_branch
          %466 = sbr.rel (%p464) target = $region44
        $region43: #{transformer_encoder_pallas.3} parent=11 // pred_region
          _
        $region44: #{transformer_encoder_pallas.3} parent=11 // pred_fallthru
          _
        // Predicated region
        $region45: #{transformer_encoder_pallas.3} parent=11 // pred_check
          %p467 = pneg %p253
        $region46: #{transformer_encoder_pallas.3} parent=11 // pred_check_branch
          %469 = sbr.rel (%p467) target = $region48
        $region47: #{transformer_encoder_pallas.3} parent=11 // pred_region
          _
        $region48: #{transformer_encoder_pallas.3} parent=11 // pred_fallthru
          _
        // Predicated region
        $region49: #{transformer_encoder_pallas.3} parent=11 // pred_check
          %p470 = pneg %p274
        $region50: #{transformer_encoder_pallas.3} parent=11 // pred_check_branch
          %472 = sbr.rel (%p470) target = $region52
        $region51: #{transformer_encoder_pallas.3} parent=11 // pred_region
          _
        $region52: #{transformer_encoder_pallas.3} parent=11 // pred_fallthru
          _
        // Predicated region
        $region53: #{transformer_encoder_pallas.3} parent=11 // pred_check
          %p473 = pneg %p295
        $region54: #{transformer_encoder_pallas.3} parent=11 // pred_check_branch
          %475 = sbr.rel (%p473) target = $region56
        $region55: #{transformer_encoder_pallas.3} parent=11 // pred_region
          _
        $region56: #{transformer_encoder_pallas.3} parent=11 // pred_fallthru
          _
        // Predicated region
        $region57: #{transformer_encoder_pallas.3} parent=11 // pred_check
          %p476 = pneg %p316
        $region58: #{transformer_encoder_pallas.3} parent=11 // pred_check_branch
          %478 = sbr.rel (%p476) target = $region60
        $region59: #{transformer_encoder_pallas.3} parent=11 // pred_region
          _
        $region60: #{transformer_encoder_pallas.3} parent=11 // pred_fallthru
          _
        // Predicated region
        $region61: #{transformer_encoder_pallas.3} parent=11 // pred_check
          %p479 = pneg %p337
        $region62: #{transformer_encoder_pallas.3} parent=11 // pred_check_branch
          %481 = sbr.rel (%p479) target = $region64
        $region63: #{transformer_encoder_pallas.3} parent=11 // pred_region
          _
        $region64: #{transformer_encoder_pallas.3} parent=11 // pred_fallthru
          _
        // Predicated region
        $region65: #{transformer_encoder_pallas.3} parent=11 // pred_check
          %p482 = pneg %p358
        $region66: #{transformer_encoder_pallas.3} parent=11 // pred_check_branch
          %484 = sbr.rel (%p482) target = $region68
        $region67: #{transformer_encoder_pallas.3} parent=11 // pred_region
          _
        $region68: #{transformer_encoder_pallas.3} parent=11 // pred_fallthru
          _
        // Predicated region
        $region69: #{transformer_encoder_pallas.3} parent=11 // pred_check
          %p485 = pneg %p379
        $region70: #{transformer_encoder_pallas.3} parent=11 // pred_check_branch
          %487 = sbr.rel (%p485) target = $region72
        $region71: #{transformer_encoder_pallas.3} parent=11 // pred_region
          _
        $region72: #{transformer_encoder_pallas.3} parent=11 // pred_fallthru
          _
        // Predicated region
        $region73: #{transformer_encoder_pallas.3} parent=11 // pred_check
          %p488 = pneg %p400
        $region74: #{transformer_encoder_pallas.3} parent=11 // pred_check_branch
          %490 = sbr.rel (%p488) target = $region76
        $region75: #{transformer_encoder_pallas.3} parent=11 // pred_region
          _
        $region76: #{transformer_encoder_pallas.3} parent=11 // pred_fallthru
          _
      $region12: #{transformer_encoder_pallas.3} parent=5 // pred_fallthru
        _
      %p491 = scmp.lt.s32.totalorder %s26, 2
      // Predicated region
      $region77: #{transformer_encoder_pallas.3} parent=5 // pred_check
        %p492 = pneg %p491
      $region78: #{transformer_encoder_pallas.3} parent=5 // pred_check_branch
        %494 = sbr.rel (%p492) target = $region80
      $region79: #{transformer_encoder_pallas.3} parent=5 // pred_region
        // Predicated region
        $region81: #{transformer_encoder_pallas.3} parent=79 // pred_check
          %p495 = pneg %p58
        $region82: #{transformer_encoder_pallas.3} parent=79 // pred_check_branch
          %497 = sbr.rel (%p495) target = $region84
        $region83: #{transformer_encoder_pallas.3} parent=79 // pred_region
          %p498 = scmp.lt.s32.totalorder %s33, 1
          %s499 = scalar_select %p498, %s33, 1
          %s500 = smul.addr %s499, 8
          %s501 = scalar_lea.vmem %s0, %s500
        $region84: #{transformer_encoder_pallas.3} parent=79 // pred_fallthru
          _
      $region80: #{transformer_encoder_pallas.3} parent=5 // pred_fallthru
        _
      %p502 = scmp.le.s32.totalorder 1, %s26
      %p503 = scmp.lt.s32.totalorder %s26, 3
      %p504 = pnand %p502, %p503
      %p505 = pneg %p504
      // Predicated region
      $region85: #{transformer_encoder_pallas.3} parent=5 // pred_check
        _
      $region86: #{transformer_encoder_pallas.3} parent=5 // pred_check_branch
        %507 = sbr.rel (%p504) target = $region88
      $region87: #{transformer_encoder_pallas.3} parent=5 // pred_region
        %s508 = ssub.s32 %s26, 1
        %p509 = scmp.lt.s32.totalorder %s35, 1
        %s510 = scalar_select %p509, %s35, 1
        %s511 = smul.addr %s510, 8
        %s512 = scalar_lea.vmem %s0, %s511
        %p513 = pneg %p64
        %p514 = pneg %p61
        %p515 = pneg %p85
        %p516 = pneg %p82
        %p517 = pneg %p106
        %p518 = pneg %p103
        %p519 = pneg %p127
        %p520 = pneg %p124
        %p521 = pneg %p148
        %p522 = pneg %p145
        %p523 = pneg %p169
        %p524 = pneg %p166
        %p525 = pneg %p190
        %p526 = pneg %p187
        %p527 = pneg %p211
        %p528 = pneg %p208
        %p529 = pneg %p232
        %p530 = pneg %p229
        %p531 = pneg %p253
        %p532 = pneg %p250
        %p533 = pneg %p274
        %p534 = pneg %p271
        %p535 = pneg %p295
        %p536 = pneg %p292
        %p537 = pneg %p316
        %p538 = pneg %p313
        %p539 = pneg %p337
        %p540 = pneg %p334
        %p541 = pneg %p358
        %p542 = pneg %p355
        %p543 = pneg %p379
        %p544 = pneg %p376
        %p545 = pneg %p400
        %p546 = pneg %p397
        %p547 = pneg %p428
        %p548 = pneg %p425
        %s549 = sand.u32 %s415, 1
        %s550 = scalar_lea.sflag [#allocation5], %s549
        %s551 = sand.u32 %s415, 1
        %s552 = smul.addr %s551, 8
        %s553 = scalar_lea.vmem [#allocation4], %s552
        %p554 = scmp.lt.s32.totalorder %s35, 1
        %s555 = scalar_select %p554, %s35, 1
        %s556 = smul.addr %s555, 8
        %s557 = scalar_lea.vmem %s0, %s556
        %p559 = scmp.eq.s32.totalorder %s36, 0
        // Predicated region
        $region89: #{transformer_encoder_pallas.3} parent=87 // pred_check
          %p560 = pneg %p559
        $region90: #{transformer_encoder_pallas.3} parent=87 // pred_check_branch
          %562 = sbr.rel (%p560) target = $region92
        $region91: #{transformer_encoder_pallas.3} parent=87 // pred_region
          %v563 = vld [vmem:[%s557] sm:$0xff]
          %v564 = vpack.c.bf16 %v563, %v563
          %v565 = vld [vmem:[%s3] sm:$0xf]
          %v566 = vld [vmem:[%s3 + $0x4] sm:$0xf]
          %v567 = vld [vmem:[%s3 + $0x8] sm:$0xf]
          %v568 = vld [vmem:[%s3 + $0xc] sm:$0xf]
          %v569 = vld [vmem:[%s4] sm:$0x1]
          %v571 = vperm.slane %v569, 0
          %v577 = vunpack.c.l.b16 %v565
          %v578 = vunpack.c.l.b16 %v566
          %v579 = vunpack.c.l.b16 %v567
          %v580 = vunpack.c.l.b16 %v568
          %v581 = vpack.c.b16 %v578, %v577
          %v582 = vpack.c.b16 %v580, %v579
          %vm585 = vcmask 261120
          %v587 = vsel %vm585, %v564, 0
          %589 = vmatpush.bf16.msra.mxu0 0
          %590 = vmatpush.bf16.msra.mxu0 0
          %591 = vmatpush.bf16.msra.mxu0 0
          %592 = vmatpush.bf16.msra.mxu0 0
          %593 = vmatpush.bf16.msra.mxu0 0
          %594 = vmatpush.bf16.msra.mxu0 0
          %595 = vmatpush.bf16.msra.mxu0 %v582
          %596 = vmatpush.bf16.msra.mxu0 %v581
          %597 = vmatmul.bf16.gmra.mxu0 %v587
          %v598 = vpop.f32.mrf.mxu0
          %v599 = vadd.f32 %v571, %v598
          %v600 = vpop.f32.mrf.mxu0
          %601 = vdwg.mxu0
          %v602 = vld [vmem:[%s5] sm:$0xf]
          %v603 = vld [vmem:[%s5 + $0x4] sm:$0xf]
          %v604 = vld [vmem:[%s5 + $0x8] sm:$0xf]
          %v605 = vld [vmem:[%s5 + $0xc] sm:$0xf]
          %v606 = vld [vmem:[%s6] sm:$0x1]
          %v608 = vperm.slane %v606, 0
          %v614 = vunpack.c.l.b16 %v602
          %v615 = vunpack.c.l.b16 %v603
          %v616 = vunpack.c.l.b16 %v604
          %v617 = vunpack.c.l.b16 %v605
          %v618 = vpack.c.b16 %v615, %v614
          %v619 = vpack.c.b16 %v617, %v616
          %622 = vmatpush.bf16.msra.mxu0 0
          %623 = vmatpush.bf16.msra.mxu0 0
          %624 = vmatpush.bf16.msra.mxu0 0
          %625 = vmatpush.bf16.msra.mxu0 0
          %626 = vmatpush.bf16.msra.mxu0 0
          %627 = vmatpush.bf16.msra.mxu0 0
          %628 = vmatpush.bf16.msra.mxu0 %v619
          %629 = vmatpush.bf16.msra.mxu0 %v618
          %630 = vmatmul.bf16.gmra.mxu0 %v587
          %v631 = vpop.f32.mrf.mxu0
          %v632 = vadd.f32 %v608, %v631
          %v633 = vpop.f32.mrf.mxu0
          %634 = vdwg.mxu0
          %v635 = vpack.c.bf16 %v599, %v599
          %vm636 = vcmask 60416
          %637 = vst.msk [vmem:[#allocation2] sm:$0xf] %vm636, %v635
          %v638 = vpack.c.bf16 %v632, %v632
          %639 = vst.msk [vmem:[#allocation3] sm:$0xf] %vm636, %v638
          %s640 = scalar_lea.vmem %s3, 16
          %v641 = vld [vmem:[%s640] sm:$0xf]
          %v642 = vld [vmem:[%s640 + $0x4] sm:$0xf]
          %v643 = vld [vmem:[%s640 + $0x8] sm:$0xf]
          %v644 = vld [vmem:[%s640 + $0xc] sm:$0xf]
          %s645 = scalar_lea.vmem %s4, 1
          %v646 = vld [vmem:[%s645] sm:$0x1]
          %v648 = vperm.slane %v646, 0
          %v654 = vunpack.c.l.b16 %v641
          %v655 = vunpack.c.l.b16 %v642
          %v656 = vunpack.c.l.b16 %v643
          %v657 = vunpack.c.l.b16 %v644
          %v658 = vpack.c.b16 %v655, %v654
          %v659 = vpack.c.b16 %v657, %v656
          %662 = vmatpush.bf16.msra.mxu0 0
          %663 = vmatpush.bf16.msra.mxu0 0
          %664 = vmatpush.bf16.msra.mxu0 0
          %665 = vmatpush.bf16.msra.mxu0 0
          %666 = vmatpush.bf16.msra.mxu0 0
          %667 = vmatpush.bf16.msra.mxu0 0
          %668 = vmatpush.bf16.msra.mxu0 %v659
          %669 = vmatpush.bf16.msra.mxu0 %v658
          %670 = vmatmul.bf16.gmra.mxu0 %v587
          %v671 = vpop.f32.mrf.mxu0
          %v672 = vadd.f32 %v648, %v671
          %v673 = vpop.f32.mrf.mxu0
          %674 = vdwg.mxu0
          %s675 = scalar_lea.vmem %s5, 16
          %v676 = vld [vmem:[%s675] sm:$0xf]
          %v677 = vld [vmem:[%s675 + $0x4] sm:$0xf]
          %v678 = vld [vmem:[%s675 + $0x8] sm:$0xf]
          %v679 = vld [vmem:[%s675 + $0xc] sm:$0xf]
          %s680 = scalar_lea.vmem %s6, 1
          %v681 = vld [vmem:[%s680] sm:$0x1]
          %v683 = vperm.slane %v681, 0
          %v689 = vunpack.c.l.b16 %v676
          %v690 = vunpack.c.l.b16 %v677
          %v691 = vunpack.c.l.b16 %v678
          %v692 = vunpack.c.l.b16 %v679
          %v693 = vpack.c.b16 %v690, %v689
          %v694 = vpack.c.b16 %v692, %v691
          %697 = vmatpush.bf16.msra.mxu0 0
          %698 = vmatpush.bf16.msra.mxu0 0
          %699 = vmatpush.bf16.msra.mxu0 0
          %700 = vmatpush.bf16.msra.mxu0 0
          %701 = vmatpush.bf16.msra.mxu0 0
          %702 = vmatpush.bf16.msra.mxu0 0
          %703 = vmatpush.bf16.msra.mxu0 %v694
          %704 = vmatpush.bf16.msra.mxu0 %v693
          %705 = vmatmul.bf16.gmra.mxu0 %v587
          %v706 = vpop.f32.mrf.mxu0
          %v707 = vadd.f32 %v683, %v706
          %v708 = vpop.f32.mrf.mxu0
          %709 = vdwg.mxu0
          %v710 = vpack.c.bf16 %v672, %v672
          %s711 = scalar_lea.vmem [#allocation2], 4
          %712 = vst.msk [vmem:[%s711] sm:$0xf] %vm636, %v710
          %v713 = vpack.c.bf16 %v707, %v707
          %s714 = scalar_lea.vmem [#allocation3], 4
          %715 = vst.msk [vmem:[%s714] sm:$0xf] %vm636, %v713
          %s716 = scalar_lea.vmem %s3, 32
          %v717 = vld [vmem:[%s716] sm:$0xf]
          %v718 = vld [vmem:[%s716 + $0x4] sm:$0xf]
          %v719 = vld [vmem:[%s716 + $0x8] sm:$0xf]
          %v720 = vld [vmem:[%s716 + $0xc] sm:$0xf]
          %s721 = scalar_lea.vmem %s4, 2
          %v722 = vld [vmem:[%s721] sm:$0x1]
          %v724 = vperm.slane %v722, 0
          %v730 = vunpack.c.l.b16 %v717
          %v731 = vunpack.c.l.b16 %v718
          %v732 = vunpack.c.l.b16 %v719
          %v733 = vunpack.c.l.b16 %v720
          %v734 = vpack.c.b16 %v731, %v730
          %v735 = vpack.c.b16 %v733, %v732
          %738 = vmatpush.bf16.msra.mxu0 0
          %739 = vmatpush.bf16.msra.mxu0 0
          %740 = vmatpush.bf16.msra.mxu0 0
          %741 = vmatpush.bf16.msra.mxu0 0
          %742 = vmatpush.bf16.msra.mxu0 0
          %743 = vmatpush.bf16.msra.mxu0 0
          %744 = vmatpush.bf16.msra.mxu0 %v735
          %745 = vmatpush.bf16.msra.mxu0 %v734
          %746 = vmatmul.bf16.gmra.mxu0 %v587
          %v747 = vpop.f32.mrf.mxu0
          %v748 = vadd.f32 %v724, %v747
          %v749 = vpop.f32.mrf.mxu0
          %750 = vdwg.mxu0
          %s751 = scalar_lea.vmem %s5, 32
          %v752 = vld [vmem:[%s751] sm:$0xf]
          %v753 = vld [vmem:[%s751 + $0x4] sm:$0xf]
          %v754 = vld [vmem:[%s751 + $0x8] sm:$0xf]
          %v755 = vld [vmem:[%s751 + $0xc] sm:$0xf]
          %s756 = scalar_lea.vmem %s6, 2
          %v757 = vld [vmem:[%s756] sm:$0x1]
          %v759 = vperm.slane %v757, 0
          %v765 = vunpack.c.l.b16 %v752
          %v766 = vunpack.c.l.b16 %v753
          %v767 = vunpack.c.l.b16 %v754
          %v768 = vunpack.c.l.b16 %v755
          %v769 = vpack.c.b16 %v766, %v765
          %v770 = vpack.c.b16 %v768, %v767
          %773 = vmatpush.bf16.msra.mxu0 0
          %774 = vmatpush.bf16.msra.mxu0 0
          %775 = vmatpush.bf16.msra.mxu0 0
          %776 = vmatpush.bf16.msra.mxu0 0
          %777 = vmatpush.bf16.msra.mxu0 0
          %778 = vmatpush.bf16.msra.mxu0 0
          %779 = vmatpush.bf16.msra.mxu0 %v770
          %780 = vmatpush.bf16.msra.mxu0 %v769
          %781 = vmatmul.bf16.gmra.mxu0 %v587
          %v782 = vpop.f32.mrf.mxu0
          %v783 = vadd.f32 %v759, %v782
          %v784 = vpop.f32.mrf.mxu0
          %785 = vdwg.mxu0
          %v786 = vpack.c.bf16 %v748, %v748
          %s787 = scalar_lea.vmem [#allocation2], 8
          %788 = vst.msk [vmem:[%s787] sm:$0xf] %vm636, %v786
          %v789 = vpack.c.bf16 %v783, %v783
          %s790 = scalar_lea.vmem [#allocation3], 8
          %791 = vst.msk [vmem:[%s790] sm:$0xf] %vm636, %v789
          %s792 = scalar_lea.vmem %s3, 48
          %v793 = vld [vmem:[%s792] sm:$0xf]
          %v794 = vld [vmem:[%s792 + $0x4] sm:$0xf]
          %v795 = vld [vmem:[%s792 + $0x8] sm:$0xf]
          %v796 = vld [vmem:[%s792 + $0xc] sm:$0xf]
          %s797 = scalar_lea.vmem %s4, 3
          %v798 = vld [vmem:[%s797] sm:$0x1]
          %v800 = vperm.slane %v798, 0
          %v806 = vunpack.c.l.b16 %v793
          %v807 = vunpack.c.l.b16 %v794
          %v808 = vunpack.c.l.b16 %v795
          %v809 = vunpack.c.l.b16 %v796
          %v810 = vpack.c.b16 %v807, %v806
          %v811 = vpack.c.b16 %v809, %v808
          %814 = vmatpush.bf16.msra.mxu0 0
          %815 = vmatpush.bf16.msra.mxu0 0
          %816 = vmatpush.bf16.msra.mxu0 0
          %817 = vmatpush.bf16.msra.mxu0 0
          %818 = vmatpush.bf16.msra.mxu0 0
          %819 = vmatpush.bf16.msra.mxu0 0
          %820 = vmatpush.bf16.msra.mxu0 %v811
          %821 = vmatpush.bf16.msra.mxu0 %v810
          %822 = vmatmul.bf16.gmra.mxu0 %v587
          %v823 = vpop.f32.mrf.mxu0
          %v824 = vadd.f32 %v800, %v823
          %v825 = vpop.f32.mrf.mxu0
          %826 = vdwg.mxu0
          %s827 = scalar_lea.vmem %s5, 48
          %v828 = vld [vmem:[%s827] sm:$0xf]
          %v829 = vld [vmem:[%s827 + $0x4] sm:$0xf]
          %v830 = vld [vmem:[%s827 + $0x8] sm:$0xf]
          %v831 = vld [vmem:[%s827 + $0xc] sm:$0xf]
          %s832 = scalar_lea.vmem %s6, 3
          %v833 = vld [vmem:[%s832] sm:$0x1]
          %v835 = vperm.slane %v833, 0
          %v841 = vunpack.c.l.b16 %v828
          %v842 = vunpack.c.l.b16 %v829
          %v843 = vunpack.c.l.b16 %v830
          %v844 = vunpack.c.l.b16 %v831
          %v845 = vpack.c.b16 %v842, %v841
          %v846 = vpack.c.b16 %v844, %v843
          %849 = vmatpush.bf16.msra.mxu0 0
          %850 = vmatpush.bf16.msra.mxu0 0
          %851 = vmatpush.bf16.msra.mxu0 0
          %852 = vmatpush.bf16.msra.mxu0 0
          %853 = vmatpush.bf16.msra.mxu0 0
          %854 = vmatpush.bf16.msra.mxu0 0
          %855 = vmatpush.bf16.msra.mxu0 %v846
          %856 = vmatpush.bf16.msra.mxu0 %v845
          %857 = vmatmul.bf16.gmra.mxu0 %v587
          %v858 = vpop.f32.mrf.mxu0
          %v859 = vadd.f32 %v835, %v858
          %v860 = vpop.f32.mrf.mxu0
          %861 = vdwg.mxu0
          %v862 = vpack.c.bf16 %v824, %v824
          %s863 = scalar_lea.vmem [#allocation2], 12
          %864 = vst.msk [vmem:[%s863] sm:$0xf] %vm636, %v862
          %v865 = vpack.c.bf16 %v859, %v859
          %s866 = scalar_lea.vmem [#allocation3], 12
          %867 = vst.msk [vmem:[%s866] sm:$0xf] %vm636, %v865
        $region92: #{transformer_encoder_pallas.3} parent=87 // pred_fallthru
          _
        %s868 = smul.u32 %s36, 8
        %s869 = scalar_lea.vmem %s557, %s868
        %v870 = vld [vmem:[%s869] sm:$0xff]
        %v871 = vpack.c.bf16 %v870, %v870
        %v872 = vld [vmem:[%s1] sm:$0xf]
        %v873 = vld [vmem:[%s1 + $0x4] sm:$0xf]
        %v874 = vld [vmem:[%s1 + $0x8] sm:$0xf]
        %v875 = vld [vmem:[%s1 + $0xc] sm:$0xf]
        %v876 = vld [vmem:[%s2] sm:$0x1]
        %v878 = vperm.slane %v876, 0
        %v884 = vunpack.c.l.b16 %v872
        %v885 = vunpack.c.l.b16 %v873
        %v886 = vunpack.c.l.b16 %v874
        %v887 = vunpack.c.l.b16 %v875
        %v888 = vpack.c.b16 %v885, %v884
        %v889 = vpack.c.b16 %v887, %v886
        %vm892 = vcmask 261120
        %v894 = vsel %vm892, %v871, 0
        %896 = vmatpush.bf16.msra.mxu0 0
        %897 = vmatpush.bf16.msra.mxu0 0
        %898 = vmatpush.bf16.msra.mxu0 0
        %899 = vmatpush.bf16.msra.mxu0 0
        %900 = vmatpush.bf16.msra.mxu0 0
        %901 = vmatpush.bf16.msra.mxu0 0
        %902 = vmatpush.bf16.msra.mxu0 %v889
        %903 = vmatpush.bf16.msra.mxu0 %v888
        %904 = vmatmul.bf16.gmra.mxu0 %v894
        %v905 = vpop.f32.mrf.mxu0
        %v906 = vadd.f32 %v878, %v905
        %v907 = vpop.f32.mrf.mxu0
        %908 = vdwg.mxu0
        %v909 = vmul.f32 %v906, 0.35355338
        %v910 = vpack.c.bf16 %v909, %v909
        %v911 = vld [vmem:[#allocation2] sm:$0xf]
        %vm912 = vcmask 64512
        %v914 = vsel %vm912, %v910, 0
        %v917 = vsel %vm912, %v911, 0
        %919 = vmatpush.bf16.xpose.msra.mxu0 0
        %920 = vmatpush.bf16.xpose.msra.mxu0 0
        %921 = vmatpush.bf16.xpose.msra.mxu0 0
        %922 = vmatpush.bf16.xpose.msra.mxu0 0
        %923 = vmatpush.bf16.xpose.msra.mxu0 0
        %924 = vmatpush.bf16.xpose.msra.mxu0 0
        %925 = vmatpush.bf16.xpose.msra.mxu0 0
        %926 = vmatpush.bf16.xpose.msra.mxu0 %v917
        %927 = vmatmul.bf16.gmra.mxu0 %v914
        %v928 = vpop.f32.mrf.mxu0
        %v929 = vadd.f32 0.0, %v928
        %v930 = vpop.f32.mrf.mxu0
        %931 = vdwg.mxu0
        %v932 = vsel %vm912, %v929, -inf
        %933 = vmax.xlane.f32.xlu0 %v932
        %v934 = vpop.xlane.xlu0 %933
        %v935 = vsub.f32 %v929, %v934
        %v936 = vmul.f32 %v935, 1.442695
        %v937 = vpow.pop %v936
        %v938 = vsel %vm912, %v937, 0.0
        %939 = vadd.xlane.f32.xlu0 %v938
        %v940 = vpop.xlane.xlu0 %939
        %v941 = vrcp.pop %v940
        %v942 = vmul.f32 %v937, %v941
        %v943 = vpack.c.bf16 %v942, %v942
        %v944 = vld [vmem:[#allocation3] sm:$0xf]
        %v946 = vsel %vm912, %v943, 0
        %vm948 = vcmask 1043456
        %v950 = vsel %vm948, %v944, 0
        %952 = vmatpush.bf16.msra.mxu0 0
        %953 = vmatpush.bf16.msra.mxu0 0
        %954 = vmatpush.bf16.msra.mxu0 0
        %955 = vmatpush.bf16.msra.mxu0 0
        %956 = vmatpush.bf16.msra.mxu0 0
        %957 = vmatpush.bf16.msra.mxu0 0
        %958 = vmatpush.bf16.msra.mxu0 0
        %959 = vmatpush.bf16.msra.mxu0 %v950
        %960 = vmatmul.bf16.gmra.mxu0 %v946
        %v961 = vpop.f32.mrf.mxu0
        %v962 = vadd.f32 0.0, %v961
        %v963 = vpop.f32.mrf.mxu0
        %964 = vdwg.mxu0
        %v965 = vpack.c.bf16 %v962, %v962
        %v966 = vld [vmem:[%s7] sm:$0xf]
        %s967 = scalar_lea.vmem %s1, 16
        %v968 = vld [vmem:[%s967] sm:$0xf]
        %v969 = vld [vmem:[%s967 + $0x4] sm:$0xf]
        %v970 = vld [vmem:[%s967 + $0x8] sm:$0xf]
        %v971 = vld [vmem:[%s967 + $0xc] sm:$0xf]
        %s972 = scalar_lea.vmem %s2, 1
        %v973 = vld [vmem:[%s972] sm:$0x1]
        %v975 = vperm.slane %v973, 0
        %v981 = vunpack.c.l.b16 %v968
        %v982 = vunpack.c.l.b16 %v969
        %v983 = vunpack.c.l.b16 %v970
        %v984 = vunpack.c.l.b16 %v971
        %v985 = vpack.c.b16 %v982, %v981
        %v986 = vpack.c.b16 %v984, %v983
        %989 = vmatpush.bf16.msra.mxu0 0
        %990 = vmatpush.bf16.msra.mxu0 0
        %991 = vmatpush.bf16.msra.mxu0 0
        %992 = vmatpush.bf16.msra.mxu0 0
        %993 = vmatpush.bf16.msra.mxu0 0
        %994 = vmatpush.bf16.msra.mxu0 0
        %995 = vmatpush.bf16.msra.mxu0 %v986
        %996 = vmatpush.bf16.msra.mxu0 %v985
        %997 = vmatmul.bf16.gmra.mxu0 %v894
        %v998 = vpop.f32.mrf.mxu0
        %v999 = vadd.f32 %v975, %v998
        %v1000 = vpop.f32.mrf.mxu0
        %1001 = vdwg.mxu0
        %v1002 = vmul.f32 %v999, 0.35355338
        %v1003 = vpack.c.bf16 %v1002, %v1002
        %s1004 = scalar_lea.vmem [#allocation2], 4
        %v1005 = vld [vmem:[%s1004] sm:$0xf]
        %v1007 = vsel %vm912, %v1003, 0
        %v1010 = vsel %vm912, %v1005, 0
        %1012 = vmatpush.bf16.xpose.msra.mxu0 0
        %1013 = vmatpush.bf16.xpose.msra.mxu0 0
        %1014 = vmatpush.bf16.xpose.msra.mxu0 0
        %1015 = vmatpush.bf16.xpose.msra.mxu0 0
        %1016 = vmatpush.bf16.xpose.msra.mxu0 0
        %1017 = vmatpush.bf16.xpose.msra.mxu0 0
        %1018 = vmatpush.bf16.xpose.msra.mxu0 0
        %1019 = vmatpush.bf16.xpose.msra.mxu0 %v1010
        %1020 = vmatmul.bf16.gmra.mxu0 %v1007
        %v1021 = vpop.f32.mrf.mxu0
        %v1022 = vadd.f32 0.0, %v1021
        %v1023 = vpop.f32.mrf.mxu0
        %1024 = vdwg.mxu0
        %v1025 = vsel %vm912, %v1022, -inf
        %1026 = vmax.xlane.f32.xlu0 %v1025
        %v1027 = vpop.xlane.xlu0 %1026
        %v1028 = vsub.f32 %v1022, %v1027
        %v1029 = vmul.f32 %v1028, 1.442695
        %v1030 = vpow.pop %v1029
        %v1031 = vsel %vm912, %v1030, 0.0
        %1032 = vadd.xlane.f32.xlu0 %v1031
        %v1033 = vpop.xlane.xlu0 %1032
        %v1034 = vrcp.pop %v1033
        %v1035 = vmul.f32 %v1030, %v1034
        %v1036 = vpack.c.bf16 %v1035, %v1035
        %s1037 = scalar_lea.vmem [#allocation3], 4
        %v1038 = vld [vmem:[%s1037] sm:$0xf]
        %v1040 = vsel %vm912, %v1036, 0
        %v1043 = vsel %vm948, %v1038, 0
        %1045 = vmatpush.bf16.msra.mxu0 0
        %1046 = vmatpush.bf16.msra.mxu0 0
        %1047 = vmatpush.bf16.msra.mxu0 0
        %1048 = vmatpush.bf16.msra.mxu0 0
        %1049 = vmatpush.bf16.msra.mxu0 0
        %1050 = vmatpush.bf16.msra.mxu0 0
        %1051 = vmatpush.bf16.msra.mxu0 0
        %1052 = vmatpush.bf16.msra.mxu0 %v1043
        %1053 = vmatmul.bf16.gmra.mxu0 %v1040
        %v1054 = vpop.f32.mrf.mxu0
        %v1055 = vadd.f32 0.0, %v1054
        %v1056 = vpop.f32.mrf.mxu0
        %1057 = vdwg.mxu0
        %v1058 = vpack.c.bf16 %v1055, %v1055
        %s1059 = scalar_lea.vmem %s7, 4
        %v1060 = vld [vmem:[%s1059] sm:$0xf]
        %v1062 = vsel %vm912, %v1058, 0
        %v1065 = vsel %vm948, %v1060, 0
        %1067 = vmatpush.bf16.msra.mxu0 0
        %1068 = vmatpush.bf16.msra.mxu0 0
        %1069 = vmatpush.bf16.msra.mxu0 0
        %1070 = vmatpush.bf16.msra.mxu0 0
        %1071 = vmatpush.bf16.msra.mxu0 0
        %1072 = vmatpush.bf16.msra.mxu0 0
        %1073 = vmatpush.bf16.msra.mxu0 0
        %1074 = vmatpush.bf16.msra.mxu0 %v1065
        %1075 = vmatmul.bf16.gmra.mxu0 %v1062
        %v1076 = vpop.f32.mrf.mxu0
        %v1077 = vadd.f32 0.0, %v1076
        %v1078 = vpop.f32.mrf.mxu0
        %1079 = vdwg.mxu0
        %v1081 = vsel %vm912, %v965, 0
        %v1084 = vsel %vm948, %v966, 0
        %1086 = vmatpush.bf16.msra.mxu0 0
        %1087 = vmatpush.bf16.msra.mxu0 0
        %1088 = vmatpush.bf16.msra.mxu0 0
        %1089 = vmatpush.bf16.msra.mxu0 0
        %1090 = vmatpush.bf16.msra.mxu0 0
        %1091 = vmatpush.bf16.msra.mxu0 0
        %1092 = vmatpush.bf16.msra.mxu0 0
        %1093 = vmatpush.bf16.msra.mxu0 %v1084
        %1094 = vmatmul.bf16.gmra.mxu0 %v1081
        %v1095 = vpop.f32.mrf.mxu0
        %v1096 = vadd.f32 %v1077, %v1095
        %v1097 = vpop.f32.mrf.mxu0
        %1098 = vdwg.mxu0
        %s1099 = scalar_lea.vmem %s1, 32
        %v1100 = vld [vmem:[%s1099] sm:$0xf]
        %v1101 = vld [vmem:[%s1099 + $0x4] sm:$0xf]
        %v1102 = vld [vmem:[%s1099 + $0x8] sm:$0xf]
        %v1103 = vld [vmem:[%s1099 + $0xc] sm:$0xf]
        %s1104 = scalar_lea.vmem %s2, 2
        %v1105 = vld [vmem:[%s1104] sm:$0x1]
        %v1107 = vperm.slane %v1105, 0
        %v1113 = vunpack.c.l.b16 %v1100
        %v1114 = vunpack.c.l.b16 %v1101
        %v1115 = vunpack.c.l.b16 %v1102
        %v1116 = vunpack.c.l.b16 %v1103
        %v1117 = vpack.c.b16 %v1114, %v1113
        %v1118 = vpack.c.b16 %v1116, %v1115
        %1121 = vmatpush.bf16.msra.mxu0 0
        %1122 = vmatpush.bf16.msra.mxu0 0
        %1123 = vmatpush.bf16.msra.mxu0 0
        %1124 = vmatpush.bf16.msra.mxu0 0
        %1125 = vmatpush.bf16.msra.mxu0 0
        %1126 = vmatpush.bf16.msra.mxu0 0
        %1127 = vmatpush.bf16.msra.mxu0 %v1118
        %1128 = vmatpush.bf16.msra.mxu0 %v1117
        %1129 = vmatmul.bf16.gmra.mxu0 %v894
        %v1130 = vpop.f32.mrf.mxu0
        %v1131 = vadd.f32 %v1107, %v1130
        %v1132 = vpop.f32.mrf.mxu0
        %1133 = vdwg.mxu0
        %v1134 = vmul.f32 %v1131, 0.35355338
        %v1135 = vpack.c.bf16 %v1134, %v1134
        %s1136 = scalar_lea.vmem [#allocation2], 8
        %v1137 = vld [vmem:[%s1136] sm:$0xf]
        %v1139 = vsel %vm912, %v1135, 0
        %v1142 = vsel %vm912, %v1137, 0
        %1144 = vmatpush.bf16.xpose.msra.mxu0 0
        %1145 = vmatpush.bf16.xpose.msra.mxu0 0
        %1146 = vmatpush.bf16.xpose.msra.mxu0 0
        %1147 = vmatpush.bf16.xpose.msra.mxu0 0
        %1148 = vmatpush.bf16.xpose.msra.mxu0 0
        %1149 = vmatpush.bf16.xpose.msra.mxu0 0
        %1150 = vmatpush.bf16.xpose.msra.mxu0 0
        %1151 = vmatpush.bf16.xpose.msra.mxu0 %v1142
        %1152 = vmatmul.bf16.gmra.mxu0 %v1139
        %v1153 = vpop.f32.mrf.mxu0
        %v1154 = vadd.f32 0.0, %v1153
        %v1155 = vpop.f32.mrf.mxu0
        %1156 = vdwg.mxu0
        %v1157 = vsel %vm912, %v1154, -inf
        %1158 = vmax.xlane.f32.xlu0 %v1157
        %v1159 = vpop.xlane.xlu0 %1158
        %v1160 = vsub.f32 %v1154, %v1159
        %v1161 = vmul.f32 %v1160, 1.442695
        %v1162 = vpow.pop %v1161
        %v1163 = vsel %vm912, %v1162, 0.0
        %1164 = vadd.xlane.f32.xlu0 %v1163
        %v1165 = vpop.xlane.xlu0 %1164
        %v1166 = vrcp.pop %v1165
        %v1167 = vmul.f32 %v1162, %v1166
        %v1168 = vpack.c.bf16 %v1167, %v1167
        %s1169 = scalar_lea.vmem [#allocation3], 8
        %v1170 = vld [vmem:[%s1169] sm:$0xf]
        %v1172 = vsel %vm912, %v1168, 0
        %v1175 = vsel %vm948, %v1170, 0
        %1177 = vmatpush.bf16.msra.mxu0 0
        %1178 = vmatpush.bf16.msra.mxu0 0
        %1179 = vmatpush.bf16.msra.mxu0 0
        %1180 = vmatpush.bf16.msra.mxu0 0
        %1181 = vmatpush.bf16.msra.mxu0 0
        %1182 = vmatpush.bf16.msra.mxu0 0
        %1183 = vmatpush.bf16.msra.mxu0 0
        %1184 = vmatpush.bf16.msra.mxu0 %v1175
        %1185 = vmatmul.bf16.gmra.mxu0 %v1172
        %v1186 = vpop.f32.mrf.mxu0
        %v1187 = vadd.f32 0.0, %v1186
        %v1188 = vpop.f32.mrf.mxu0
        %1189 = vdwg.mxu0
        %v1190 = vpack.c.bf16 %v1187, %v1187
        %s1191 = scalar_lea.vmem %s7, 8
        %v1192 = vld [vmem:[%s1191] sm:$0xf]
        %v1194 = vsel %vm912, %v1190, 0
        %v1197 = vsel %vm948, %v1192, 0
        %1199 = vmatpush.bf16.msra.mxu0 0
        %1200 = vmatpush.bf16.msra.mxu0 0
        %1201 = vmatpush.bf16.msra.mxu0 0
        %1202 = vmatpush.bf16.msra.mxu0 0
        %1203 = vmatpush.bf16.msra.mxu0 0
        %1204 = vmatpush.bf16.msra.mxu0 0
        %1205 = vmatpush.bf16.msra.mxu0 0
        %1206 = vmatpush.bf16.msra.mxu0 %v1197
        %1207 = vmatmul.bf16.gmra.mxu0 %v1194
        %v1208 = vpop.f32.mrf.mxu0
        %v1209 = vadd.f32 0.0, %v1208
        %v1210 = vpop.f32.mrf.mxu0
        %1211 = vdwg.mxu0
        %v1212 = vadd.f32 %v1096, %v1209
        %s1213 = scalar_lea.vmem %s1, 48
        %v1214 = vld [vmem:[%s1213] sm:$0xf]
        %v1215 = vld [vmem:[%s1213 + $0x4] sm:$0xf]
        %v1216 = vld [vmem:[%s1213 + $0x8] sm:$0xf]
        %v1217 = vld [vmem:[%s1213 + $0xc] sm:$0xf]
        %s1218 = scalar_lea.vmem %s2, 3
        %v1219 = vld [vmem:[%s1218] sm:$0x1]
        %v1221 = vperm.slane %v1219, 0
        %v1227 = vunpack.c.l.b16 %v1214
        %v1228 = vunpack.c.l.b16 %v1215
        %v1229 = vunpack.c.l.b16 %v1216
        %v1230 = vunpack.c.l.b16 %v1217
        %v1231 = vpack.c.b16 %v1228, %v1227
        %v1232 = vpack.c.b16 %v1230, %v1229
        %1235 = vmatpush.bf16.msra.mxu0 0
        %1236 = vmatpush.bf16.msra.mxu0 0
        %1237 = vmatpush.bf16.msra.mxu0 0
        %1238 = vmatpush.bf16.msra.mxu0 0
        %1239 = vmatpush.bf16.msra.mxu0 0
        %1240 = vmatpush.bf16.msra.mxu0 0
        %1241 = vmatpush.bf16.msra.mxu0 %v1232
        %1242 = vmatpush.bf16.msra.mxu0 %v1231
        %1243 = vmatmul.bf16.gmra.mxu0 %v894
        %v1244 = vpop.f32.mrf.mxu0
        %v1245 = vadd.f32 %v1221, %v1244
        %v1246 = vpop.f32.mrf.mxu0
        %1247 = vdwg.mxu0
        %v1248 = vmul.f32 %v1245, 0.35355338
        %v1249 = vpack.c.bf16 %v1248, %v1248
        %s1250 = scalar_lea.vmem [#allocation2], 12
        %v1251 = vld [vmem:[%s1250] sm:$0xf]
        %v1253 = vsel %vm912, %v1249, 0
        %v1256 = vsel %vm912, %v1251, 0
        %1258 = vmatpush.bf16.xpose.msra.mxu0 0
        %1259 = vmatpush.bf16.xpose.msra.mxu0 0
        %1260 = vmatpush.bf16.xpose.msra.mxu0 0
        %1261 = vmatpush.bf16.xpose.msra.mxu0 0
        %1262 = vmatpush.bf16.xpose.msra.mxu0 0
        %1263 = vmatpush.bf16.xpose.msra.mxu0 0
        %1264 = vmatpush.bf16.xpose.msra.mxu0 0
        %1265 = vmatpush.bf16.xpose.msra.mxu0 %v1256
        %1266 = vmatmul.bf16.gmra.mxu0 %v1253
        %v1267 = vpop.f32.mrf.mxu0
        %v1268 = vadd.f32 0.0, %v1267
        %v1269 = vpop.f32.mrf.mxu0
        %1270 = vdwg.mxu0
        %v1271 = vsel %vm912, %v1268, -inf
        %1272 = vmax.xlane.f32.xlu0 %v1271
        %v1273 = vpop.xlane.xlu0 %1272
        %v1274 = vsub.f32 %v1268, %v1273
        %v1275 = vmul.f32 %v1274, 1.442695
        %v1276 = vpow.pop %v1275
        %v1277 = vsel %vm912, %v1276, 0.0
        %1278 = vadd.xlane.f32.xlu0 %v1277
        %v1279 = vpop.xlane.xlu0 %1278
        %v1280 = vrcp.pop %v1279
        %v1281 = vmul.f32 %v1276, %v1280
        %v1282 = vpack.c.bf16 %v1281, %v1281
        %s1283 = scalar_lea.vmem [#allocation3], 12
        %v1284 = vld [vmem:[%s1283] sm:$0xf]
        %v1286 = vsel %vm912, %v1282, 0
        %v1289 = vsel %vm948, %v1284, 0
        %1291 = vmatpush.bf16.msra.mxu0 0
        %1292 = vmatpush.bf16.msra.mxu0 0
        %1293 = vmatpush.bf16.msra.mxu0 0
        %1294 = vmatpush.bf16.msra.mxu0 0
        %1295 = vmatpush.bf16.msra.mxu0 0
        %1296 = vmatpush.bf16.msra.mxu0 0
        %1297 = vmatpush.bf16.msra.mxu0 0
        %1298 = vmatpush.bf16.msra.mxu0 %v1289
        %1299 = vmatmul.bf16.gmra.mxu0 %v1286
        %v1300 = vpop.f32.mrf.mxu0
        %v1301 = vadd.f32 0.0, %v1300
        %v1302 = vpop.f32.mrf.mxu0
        %1303 = vdwg.mxu0
        %v1304 = vpack.c.bf16 %v1301, %v1301
        %s1305 = scalar_lea.vmem %s7, 12
        %v1306 = vld [vmem:[%s1305] sm:$0xf]
        %v1308 = vsel %vm912, %v1304, 0
        %v1311 = vsel %vm948, %v1306, 0
        %1313 = vmatpush.bf16.msra.mxu0 0
        %1314 = vmatpush.bf16.msra.mxu0 0
        %1315 = vmatpush.bf16.msra.mxu0 0
        %1316 = vmatpush.bf16.msra.mxu0 0
        %1317 = vmatpush.bf16.msra.mxu0 0
        %1318 = vmatpush.bf16.msra.mxu0 0
        %1319 = vmatpush.bf16.msra.mxu0 0
        %1320 = vmatpush.bf16.msra.mxu0 %v1311
        %1321 = vmatmul.bf16.gmra.mxu0 %v1308
        %v1322 = vpop.f32.mrf.mxu0
        %v1323 = vadd.f32 0.0, %v1322
        %v1324 = vpop.f32.mrf.mxu0
        %1325 = vdwg.mxu0
        %v1326 = vadd.f32 %v1212, %v1323
        %v1327 = vld [vmem:[%s8] sm:$0x1]
        %v1329 = vperm.slane %v1327, 0
        %v1331 = vadd.f32 %v1326, %v1329
        %v1332 = vadd.f32 %v1331, %v870
        %v1333 = vsel %vm892, %v1332, 0.0
        %1334 = vadd.xlane.f32.xlu0 %v1333
        %v1335 = vpop.xlane.xlu0 %1334
        %v1336 = vrcp.pop 32.0
        %v1337 = vmul.f32 32.0, %v1336
        %v1338 = vsub.f32 1.0, %v1337
        %v1339 = vmul.f32 %v1336, %v1338
        %v1340 = vadd.f32 %v1336, %v1339
        %vm1341 = vweird.f32 %v1336
        %v1342 = vsel %vm1341, %v1336, %v1340
        %v1343 = vmul.f32 %v1335, %v1342
        %v1344 = vsub.f32 %v1332, %v1343
        %v1345 = vmul.f32 %v1344, %v1344
        %v1346 = vsel %vm892, %v1345, 0.0
        %1347 = vadd.xlane.f32.xlu0 %v1346
        %v1348 = vpop.xlane.xlu0 %1347
        %v1349 = vmul.f32 %v1348, %v1342
        %v1350 = vadd.f32 %v1349, 1e-05
        %v1351 = vrsqrt.pop %v1350
        %v1352 = vmul.f32 %v1351, %v1350
        %v1353 = vmul.f32 %v1352, %v1351
        %v1354 = vmul.f32 0.5, %v1353
        %v1355 = vsub.f32 1.5, %v1354
        %v1356 = vmul.f32 %v1351, %v1355
        %vm1357 = vweird.f32 %v1350
        %vm1358 = vweird.f32 %v1351
        %vm1359 = vmor %vm1357, %vm1358
        %v1360 = vsel %vm1359, %v1351, %v1356
        %v1361 = vmul.f32 %v1344, %v1360
        %v1362 = vld [vmem:[%s13] sm:$0x1]
        %v1364 = vperm.slane %v1362, 0
        %v1366 = vmul.f32 %v1361, %v1364
        %v1367 = vld [vmem:[%s14] sm:$0x1]
        %v1369 = vperm.slane %v1367, 0
        %v1371 = vadd.f32 %v1366, %v1369
        %v1372 = vpack.c.bf16 %v1371, %v1371
        %v1373 = vld [vmem:[%s9] sm:$0xf]
        %v1374 = vld [vmem:[%s9 + $0x4] sm:$0xf]
        %v1375 = vld [vmem:[%s9 + $0x8] sm:$0xf]
        %v1376 = vld [vmem:[%s9 + $0xc] sm:$0xf]
        %v1377 = vld [vmem:[%s10] sm:$0x1]
        %v1379 = vperm.slane %v1377, 0
        %v1385 = vunpack.c.l.b16 %v1373
        %v1386 = vunpack.c.l.b16 %v1374
        %v1387 = vunpack.c.l.b16 %v1375
        %v1388 = vunpack.c.l.b16 %v1376
        %v1389 = vpack.c.b16 %v1386, %v1385
        %v1390 = vpack.c.b16 %v1388, %v1387
        %v1394 = vsel %vm892, %v1372, 0
        %1396 = vmatpush.bf16.msra.mxu0 0
        %1397 = vmatpush.bf16.msra.mxu0 0
        %1398 = vmatpush.bf16.msra.mxu0 0
        %1399 = vmatpush.bf16.msra.mxu0 0
        %1400 = vmatpush.bf16.msra.mxu0 0
        %1401 = vmatpush.bf16.msra.mxu0 0
        %1402 = vmatpush.bf16.msra.mxu0 %v1390
        %1403 = vmatpush.bf16.msra.mxu0 %v1389
        %1404 = vmatmul.bf16.gmra.mxu0 %v1394
        %v1405 = vpop.f32.mrf.mxu0
        %v1406 = vadd.f32 %v1379, %v1405
        %v1407 = vpop.f32.mrf.mxu0
        %1408 = vdwg.mxu0
        %v1409 = vmul.f32 %v1406, 0.5
        %v1410 = vmul.f32 %v1406, 0.70710677
        %v1411 = vmul.f32 %v1410, %v1410
        %v1412 = vmin.f32 16.0, %v1411
        %v1413 = vmul.f32 %v1412, 2.1237322e-06
        %v1414 = vadd.f32 %v1413, 0.00028619796
        %v1415 = vmul.f32 %v1412, %v1414
        %v1416 = vadd.f32 %v1415, 0.0036580483
        %v1417 = vmul.f32 %v1412, %v1416
        %v1418 = vadd.f32 %v1417, 0.05243302
        %v1419 = vmul.f32 %v1412, %v1418
        %v1420 = vadd.f32 %v1419, 0.18741608
        %v1421 = vmul.f32 %v1412, %v1420
        %v1422 = vadd.f32 %v1421, 1.1283791
        %v1423 = vmul.f32 %v1410, %v1422
        %v1424 = vmul.f32 %v1412, 3.8918573e-05
        %v1425 = vadd.f32 %v1424, 0.001143296
        %v1426 = vmul.f32 %v1412, %v1425
        %v1427 = vadd.f32 %v1426, 0.014752088
        %v1428 = vmul.f32 %v1412, %v1427
        %v1429 = vadd.f32 %v1428, 0.112945676
        %v1430 = vmul.f32 %v1412, %v1429
        %v1431 = vadd.f32 %v1430, 0.4994258
        %v1432 = vmul.f32 %v1412, %v1431
        %v1433 = vadd.f32 %v1432, 1.0
        %v1434 = vrcp.pop %v1433
        %v1435 = vmul.f32 %v1433, %v1434
        %v1436 = vsub.f32 1.0, %v1435
        %v1437 = vmul.f32 %v1434, %v1436
        %v1438 = vadd.f32 %v1434, %v1437
        %vm1439 = vweird.f32 %v1433
        %vm1440 = vweird.f32 %v1434
        %vm1441 = vmor %vm1439, %vm1440
        %v1442 = vsel %vm1441, %v1434, %v1438
        %v1443 = vand.u32 2147483647, %v1433
        %vm1444 = vcmp.eq.f32.partialorder %v1443, 8.507059e+37
        %v1445 = vand.u32 %v1433, 2147483648
        %v1446 = vor.u32 1.1754944e-38, %v1445
        %v1447 = vsel %vm1444, %v1446, %v1442
        %v1448 = vmul.f32 %v1423, %v1447
        %v1449 = vmin.f32 %v1448, 1.0
        %v1450 = vmax.f32 %v1449, -1.0
        %v1451 = vadd.f32 %v1450, 1.0
        %v1452 = vmul.f32 %v1409, %v1451
        %v1453 = vpack.c.bf16 %v1452, %v1452
        %v1454 = vld [vmem:[%s11] sm:$0xf]
        %v1455 = vld [vmem:[%s11 + $0x4] sm:$0xf]
        %v1456 = vld [vmem:[%s11 + $0x8] sm:$0xf]
        %v1457 = vld [vmem:[%s11 + $0xc] sm:$0xf]
        %v1458 = vld [vmem:[%s12] sm:$0x1]
        %v1460 = vperm.slane %v1458, 0
        %v1466 = vunpack.c.l.b16 %v1454
        %v1467 = vunpack.c.l.b16 %v1455
        %v1468 = vunpack.c.l.b16 %v1456
        %v1469 = vunpack.c.l.b16 %v1457
        %v1470 = vpack.c.b16 %v1467, %v1466
        %v1471 = vpack.c.b16 %v1469, %v1468
        %v1475 = vsel %vm892, %v1453, 0
        %1477 = vmatpush.bf16.msra.mxu0 0
        %1478 = vmatpush.bf16.msra.mxu0 0
        %1479 = vmatpush.bf16.msra.mxu0 0
        %1480 = vmatpush.bf16.msra.mxu0 0
        %1481 = vmatpush.bf16.msra.mxu0 0
        %1482 = vmatpush.bf16.msra.mxu0 0
        %1483 = vmatpush.bf16.msra.mxu0 %v1471
        %1484 = vmatpush.bf16.msra.mxu0 %v1470
        %1485 = vmatmul.bf16.gmra.mxu0 %v1475
        %v1486 = vpop.f32.mrf.mxu0
        %v1487 = vadd.f32 %v1460, %v1486
        %v1488 = vpop.f32.mrf.mxu0
        %1489 = vdwg.mxu0
        %v1490 = vadd.f32 %v1487, %v1371
        %v1491 = vsel %vm892, %v1490, 0.0
        %1492 = vadd.xlane.f32.xlu0 %v1491
        %v1493 = vpop.xlane.xlu0 %1492
        %v1494 = vmul.f32 %v1493, %v1342
        %v1495 = vsub.f32 %v1490, %v1494
        %v1496 = vmul.f32 %v1495, %v1495
        %v1497 = vsel %vm892, %v1496, 0.0
        %1498 = vadd.xlane.f32.xlu0 %v1497
        %v1499 = vpop.xlane.xlu0 %1498
        %v1500 = vmul.f32 %v1499, %v1342
        %v1501 = vadd.f32 %v1500, 1e-05
        %v1502 = vrsqrt.pop %v1501
        %v1503 = vmul.f32 %v1502, %v1501
        %v1504 = vmul.f32 %v1503, %v1502
        %v1505 = vmul.f32 0.5, %v1504
        %v1506 = vsub.f32 1.5, %v1505
        %v1507 = vmul.f32 %v1502, %v1506
        %vm1508 = vweird.f32 %v1501
        %vm1509 = vweird.f32 %v1502
        %vm1510 = vmor %vm1508, %vm1509
        %v1511 = vsel %vm1510, %v1502, %v1507
        %v1512 = vmul.f32 %v1495, %v1511
        %v1513 = vld [vmem:[%s15] sm:$0x1]
        %v1515 = vperm.slane %v1513, 0
        %v1517 = vmul.f32 %v1512, %v1515
        %v1518 = vld [vmem:[%s16] sm:$0x1]
        %v1520 = vperm.slane %v1518, 0
        %v1522 = vadd.f32 %v1517, %v1520
        %1523 = vst.msk [vmem:[%s553] sm:$0xff] %vm892, %v1522
        %s1524 = sand.u32 %s415, 1
        %s1525 = scalar_lea.sflag [#allocation5], %s1524
        %s1526 = sand.u32 %s415, 1
        %s1527 = smul.addr %s1526, 8
        %s1528 = scalar_lea.vmem [#allocation4], %s1527
        // Predicated region
        $region93: #{transformer_encoder_pallas.3} parent=87 // pred_check
          %p1529 = pneg %p425
        $region94: #{transformer_encoder_pallas.3} parent=87 // pred_check_branch
          %1531 = sbr.rel (%p1529) target = $region96
        $region95: #{transformer_encoder_pallas.3} parent=87 // pred_region
          %1533 = vsyncadd %s1525, 0
          %s1534 = sadd.s32 %s36, %s35
          %s1535 = smul.addr %s1534, 8
          %s1536 = scalar_lea.hbm %s17, %s1535
          %s1538 = sshll.u32 %s1528, 4
          %s1539 = int_to_ptr.vmem [resolvable:$true] %s1538
          %s1540 = sshll.u32 %s1536, 4
          %s1541 = int_to_ptr.hbm [resolvable:$true] %s1540
          %1543 = dma.vmem_to_hbm [thread:$0]  %s1539, 128, %s1541, %s1525
        $region96: #{transformer_encoder_pallas.3} parent=87 // pred_fallthru
          _
      $region88: #{transformer_encoder_pallas.3} parent=5 // pred_fallthru
        _
      %p1544 = scmp.le.s32.totalorder 2, %s26
      // Predicated region
      $region97: #{transformer_encoder_pallas.3} parent=5 // pred_check
        %p1545 = pneg %p1544
      $region98: #{transformer_encoder_pallas.3} parent=5 // pred_check_branch
        %1547 = sbr.rel (%p1545) target = $region100
      $region99: #{transformer_encoder_pallas.3} parent=5 // pred_region
        %s1548 = ssub.s32 %s26, 2
        // Predicated region
        $region101: #{transformer_encoder_pallas.3} parent=99 // pred_check
          %p1549 = pneg %p431
        $region102: #{transformer_encoder_pallas.3} parent=99 // pred_check_branch
          %1551 = sbr.rel (%p1549) target = $region104
        $region103: #{transformer_encoder_pallas.3} parent=99 // pred_region
          %s1552 = sand.u32 %s416, 1
          %s1553 = scalar_lea.sflag [#allocation5], %s1552
          %s1554 = sand.u32 %s416, 1
          %s1555 = smul.addr %s1554, 8
          %s1556 = scalar_lea.vmem [#allocation4], %s1555
          %1558 = dma.done %s1553, 128
        $region104: #{transformer_encoder_pallas.3} parent=99 // pred_fallthru
          _
      $region100: #{transformer_encoder_pallas.3} parent=5 // pred_fallthru
        _
    $region6: #{transformer_encoder_pallas.3} parent=1 // loop_footer
      %s30 = sadd.s32 1, %s26
    $region7: #{transformer_encoder_pallas.3} parent=1 // loop_footer_branch
      %25 = sbr.rel target = $region3
    $region8: #{transformer_encoder_pallas.3} parent=1 // loop_exit
      _
    %1559 = vsyncpa [#allocation5], 1
    %s1560 = scalar_lea.sflag [#allocation5], 1
    %1561 = vsyncpa %s1560, 1

</llo_original>
